<compile_context>
chip_gen: v7x
topology: tpu7x:2x2x1
jax: 0.10.0
libtpu: 0.0.40
codegen_flags: <defaults>
</compile_context>

<pallas_src>
import math

import jax
import jax.numpy as jnp
from jax.experimental import pallas as pl
from jax.experimental.pallas import tpu as pltpu


PARAM_ORDER = (
    "tnorm_g", "tnorm_b",
    "t_wq", "t_wk", "t_wv", "t_projfc_w", "t_projfc_b",
    "norm1_g", "norm1_b",
    "s_wq", "s_wk", "s_wv", "s_proj_w", "s_proj_b",
    "norm2_g", "norm2_b",
    "fc1_w", "fc1_b", "fc2_w", "fc2_b",
)


# ----------------------------- math helpers ------------------------------- #

def _layernorm(x, g, b, eps=1e-5):
    # x: (N, C) f32; g/b: (1, C) f32.  nn.LayerNorm default eps=1e-5.
    mu = jnp.mean(x, axis=-1, keepdims=True)
    xc = x - mu                                   # reuse (x - mu) once
    var = jnp.mean(xc * xc, axis=-1, keepdims=True)
    return xc * jax.lax.rsqrt(var + eps) * g + b


def _gelu(x):
    # exact (erf-based) GELU, matching torch.nn.GELU default
    return 0.5 * x * (1.0 + jax.lax.erf(x * (1.0 / math.sqrt(2.0))))


def _mha(xn, wq, wk, wv, wproj, bproj, recip):
    """Head-batched multi-head self-attention.

    xn:        (N, C)      f32 pre-normed activations
    wq/wk/wv:  (H, C, dh)  bf16 per-head projection slabs (wq pre-scaled by dh^-0.5)
    wproj:     (H, dh, C)  bf16 per-head output-projection slabs
    bproj:     (1, C)      f32
    All matmuls use bf16 operands with f32 accumulation (MXU); softmax
    statistics are f32.
    """
    H, C, dh = wq.shape
    N = xn.shape[0]
    cdt = wq.dtype

    # One bf16 broadcast of the activations, reused by q/k/v projections.
    xh = jnp.broadcast_to(xn.astype(cdt), (H, N, C))

    # Batched per-head projections (batch dim = heads, contraction dim = C).
    # The softmax scale is already folded into wq on the host.
    q = jnp.einsum("hnc,hcd->hnd", xh, wq, preferred_element_type=jnp.float32)
    k = jnp.einsum("hnc,hcd->hnd", xh, wk, preferred_element_type=jnp.float32)
    v = jnp.einsum("hnc,hcd->hnd", xh, wv, preferred_element_type=jnp.float32)

    # Head-batched attention scores + softmax (f32 stats).
    s = jnp.einsum("hqd,hkd->hqk", q.astype(cdt), k.astype(cdt),
                   preferred_element_type=jnp.float32)
    s = s - jnp.max(s, axis=-1, keepdims=True)
    e = jnp.exp(s)
    denom = jnp.sum(e, axis=-1, keepdims=True)
    p = e * recip(denom)

    # (attn @ v) per head, then accumulate per-head (dh, C) projection slabs:
    #   out = sum_h (p_h @ v_h) @ Wproj_h   -- avoids any concatenate.
    o = jnp.einsum("hqk,hkd->hqd", p.astype(cdt), v.astype(cdt),
                   preferred_element_type=jnp.float32)
    po = jnp.einsum("hnd,hdc->hnc", o.astype(cdt), wproj,
                    preferred_element_type=jnp.float32)
    return jnp.sum(po, axis=0) + bproj


def _block_compute(x, p, recip):
    """Full Block forward for one (N, C) sequence. Shared by kernel & reference."""
    # TODO(synk): Dropout / DropPath are identity here (eval-mode semantics);
    # training-mode stochastic dropout is not implemented.
    cdt = p["fc1_w"].dtype

    # temporal branch: xt = x + temporal_fc(temporal_attn(temporal_norm1(x)))
    # (temporal_fc is pre-folded into the per-head output-projection slabs)
    xn_t = _layernorm(x, p["tnorm_g"], p["tnorm_b"])
    res_t = _mha(xn_t, p["t_wq"], p["t_wk"], p["t_wv"],
                 p["t_projfc_w"], p["t_projfc_b"], recip)
    xt = x + res_t

    # spatial branch: x2 = xt + attn(norm1(xt))
    xn_s = _layernorm(xt, p["norm1_g"], p["norm1_b"])
    res_s = _mha(xn_s, p["s_wq"], p["s_wk"], p["s_wv"],
                 p["s_proj_w"], p["s_proj_b"], recip)
    x2 = xt + res_s

    # MLP branch: out = x2 + fc2(gelu(fc1(norm2(x2))))
    xn_m = _layernorm(x2, p["norm2_g"], p["norm2_b"])
    h = jnp.dot(xn_m.astype(cdt), p["fc1_w"],
                preferred_element_type=jnp.float32) + p["fc1_b"]
    h = _gelu(h)
    y = jnp.dot(h.astype(cdt), p["fc2_w"],
                preferred_element_type=jnp.float32) + p["fc2_b"]
    return x2 + y


# ------------------------------- kernel ------------------------------------ #

def _fast_recip(d):
    # EUP approximate reciprocal + one Newton refinement -> ~f32 accuracy.
    r = pl.reciprocal(d, approx=True)
    return r * (2.0 - d * r)


def block_kernel(x_ref, *rest):
    param_refs, out_ref = rest[:-1], rest[-1]
    p = {name: ref[...] for name, ref in zip(PARAM_ORDER, param_refs)}
    x = x_ref[0].astype(jnp.float32)          # (N, C) residual stream in f32
    y = _block_compute(x, p, _fast_recip)
    out_ref[0] = y.astype(out_ref.dtype)


# ------------------------------ wrapper ------------------------------------ #

def block_forward(x, prep):
    B, N, C = x.shape
    ordered = [prep[name] for name in PARAM_ORDER]

    def full_spec(arr):
        nd = arr.ndim
        return pl.BlockSpec(arr.shape, lambda b, _nd=nd: (0,) * _nd)

    in_specs = [pl.BlockSpec((1, N, C), lambda b: (b, 0, 0))]
    in_specs += [full_spec(a) for a in ordered]

    # Explicit scoped-VMEM budget: resident weights (double-buffered) + x tile
    # + headroom; clamped to a range that is safe on v5e/v6e/v7x (64 MiB ceiling).
    param_bytes = sum(int(a.nbytes) for a in ordered)
    x_block_bytes = N * C * x.dtype.itemsize
    vmem_limit = int(min(64 * 2**20,
                         max(32 * 2**20,
                             2 * param_bytes + 8 * x_block_bytes + 8 * 2**20)))

    return pl.pallas_call(
        block_kernel,
        out_shape=jax.ShapeDtypeStruct((B, N, C), x.dtype),
        grid=(B,),
        in_specs=in_specs,
        out_specs=pl.BlockSpec((1, N, C), lambda b: (b, 0, 0)),
        compiler_params=pltpu.CompilerParams(
            dimension_semantics=("parallel",),
            vmem_limit_bytes=vmem_limit),
    )(x, *ordered)


# --------------------------- pure-JAX references ---------------------------- #

def block_reference_prep(x, prep):
    """Reference using the same prepared (bf16, folded) params as the kernel."""
    fn = lambda xb: _block_compute(xb.astype(jnp.float32), prep, lambda d: 1.0 / d)
    return jax.vmap(fn)(x).astype(x.dtype)


def block_reference_f32(x, p, num_heads):
    """Unfused f32 reference mirroring the original PyTorch module structure."""
    C = p["t_qkv_w"].shape[0]
    dh = C // num_heads
    scale = float(dh) ** -0.5

    def attn(xn, qkv_w, proj_w, proj_b):
        N = xn.shape[0]
        qkv = xn @ qkv_w                                        # (N, 3C)
        qkv = qkv.reshape(N, 3, num_heads, dh).transpose(1, 2, 0, 3)
        q, k, v = qkv[0], qkv[1], qkv[2]                        # (H, N, dh)
        s = jnp.einsum("hqd,hkd->hqk", q, k) * scale
        a = jax.nn.softmax(s, axis=-1)
        o = jnp.einsum("hqk,hkd->hqd", a, v)                    # (H, N, dh)
        o = o.transpose(1, 0, 2).reshape(N, C)
        return o @ proj_w + proj_b

    def one(xb):
        xn_t = _layernorm(xb, p["tnorm_g"], p["tnorm_b"])
        res_t = attn(xn_t, p["t_qkv_w"], p["t_proj_w"], p["t_proj_b"])
        res_t = res_t @ p["t_fc_w"] + p["t_fc_b"]
        xt = xb + res_t
        xn_s = _layernorm(xt, p["norm1_g"], p["norm1_b"])
        x2 = xt + attn(xn_s, p["s_qkv_w"], p["s_proj_w"], p["s_proj_b"])
        xn_m = _layernorm(x2, p["norm2_g"], p["norm2_b"])
        h = _gelu(xn_m @ p["fc1_w"] + p["fc1_b"])
        return x2 + h @ p["fc2_w"] + p["fc2_b"]

    return jax.vmap(one)(x).astype(x.dtype)


# --------------------------- parameter handling ----------------------------- #

def init_params(key, dim, mlp_hidden):
    """Logical (PyTorch-equivalent) parameter layout, f32: y = x @ W + b."""
    ks = jax.random.split(key, 12)
    s = 0.02
    return {
        # temporal branch
        "tnorm_g": jnp.ones((1, dim), jnp.float32),
        "tnorm_b": jnp.zeros((1, dim), jnp.float32),
        "t_qkv_w": s * jax.random.normal(ks[0], (dim, 3 * dim), jnp.float32),
        "t_proj_w": s * jax.random.normal(ks[1], (dim, dim), jnp.float32),
        "t_proj_b": s * jax.random.normal(ks[2], (1, dim), jnp.float32),
        "t_fc_w": s * jax.random.normal(ks[3], (dim, dim), jnp.float32),
        "t_fc_b": s * jax.random.normal(ks[4], (1, dim), jnp.float32),
        # spatial branch
        "norm1_g": jnp.ones((1, dim), jnp.float32),
        "norm1_b": jnp.zeros((1, dim), jnp.float32),
        "s_qkv_w": s * jax.random.normal(ks[5], (dim, 3 * dim), jnp.float32),
        "s_proj_w": s * jax.random.normal(ks[6], (dim, dim), jnp.float32),
        "s_proj_b": s * jax.random.normal(ks[7], (1, dim), jnp.float32),
        # MLP
        "norm2_g": jnp.ones((1, dim), jnp.float32),
        "norm2_b": jnp.zeros((1, dim), jnp.float32),
        "fc1_w": s * jax.random.normal(ks[8], (dim, mlp_hidden), jnp.float32),
        "fc1_b": s * jax.random.normal(ks[9], (1, mlp_hidden), jnp.float32),
        "fc2_w": s * jax.random.normal(ks[10], (mlp_hidden, dim), jnp.float32),
        "fc2_b": s * jax.random.normal(ks[11], (1, dim), jnp.float32),
    }


def prepare_params(p, num_heads, compute_dtype=jnp.bfloat16):
    """Host-side weight prep:
      * split fused qkv / proj weights into per-head slabs,
      * fold the softmax scale into the q weights,
      * fold temporal proj + temporal_fc into one per-head (dh, C) slab (in f32),
      * cast matmul weights to the bf16 compute dtype (LN params & biases stay f32).
    """
    C = p["t_qkv_w"].shape[0]
    dh = C // num_heads
    scale = float(dh) ** -0.5

    def split_qkv(w):  # (C, 3C) -> three (H, C, dh); feature order is (3, H, dh)
        w = w.reshape(C, 3, num_heads, dh)
        w = jnp.transpose(w, (1, 2, 0, 3))            # (3, H, C, dh)
        return ((w[0] * scale).astype(compute_dtype),   # scale folded into Wq
                w[1].astype(compute_dtype),
                w[2].astype(compute_dtype))

    def split_proj(w):  # (C, C), rows indexed by (h, dh) -> (H, dh, C) in f32
        return w.reshape(num_heads, dh, C)

    t_wq, t_wk, t_wv = split_qkv(p["t_qkv_w"])
    s_wq, s_wk, s_wv = split_qkv(p["s_qkv_w"])

    # Fold temporal output-projection and temporal_fc (both linear, eval mode):
    #   res_t = sum_h o_h @ (Wproj_h @ Wfc) + (bproj @ Wfc + bfc)
    t_projfc_w = jnp.einsum("hdc,ce->hde", split_proj(p["t_proj_w"]), p["t_fc_w"])
    t_projfc_b = p["t_proj_b"] @ p["t_fc_w"] + p["t_fc_b"]

    return {
        "tnorm_g": p["tnorm_g"], "tnorm_b": p["tnorm_b"],
        "t_wq": t_wq, "t_wk": t_wk, "t_wv": t_wv,
        "t_projfc_w": t_projfc_w.astype(compute_dtype), "t_projfc_b": t_projfc_b,
        "norm1_g": p["norm1_g"], "norm1_b": p["norm1_b"],
        "s_wq": s_wq, "s_wk": s_wk, "s_wv": s_wv,
        "s_proj_w": split_proj(p["s_proj_w"]).astype(compute_dtype),
        "s_proj_b": p["s_proj_b"],
        "norm2_g": p["norm2_g"], "norm2_b": p["norm2_b"],
        "fc1_w": p["fc1_w"].astype(compute_dtype), "fc1_b": p["fc1_b"],
        "fc2_w": p["fc2_w"].astype(compute_dtype), "fc2_b": p["fc2_b"],
    }


# ------------------------------- main --------------------------------------- #

if __name__ == "__main__":
    # Small but lane-dense demo shape (C multiple of 128, N multiple of 8).
    B, N, C = 2, 16, 128
    num_heads = 4
    mlp_hidden = int(C * 4.0)

    key = jax.random.PRNGKey(0)
    kx, kp = jax.random.split(key)
    x = jax.random.normal(kx, (B, N, C), jnp.float32)
    params = init_params(kp, C, mlp_hidden)
    prep = prepare_params(params, num_heads)

    out = block_forward(x, prep)
    out = jax.block_until_ready(out)
    assert out.shape == (B, N, C)

    # (a) tight check vs a JAX reference using the same prepared (bf16) params.
    ref_prep = block_reference_prep(x, prep)
    err_a = jnp.max(jnp.abs(out - ref_prep))
    if not jnp.allclose(out, ref_prep, atol=2e-3, rtol=2e-3):
        raise AssertionError(f"mismatch vs prepared-param reference, max abs err = {err_a}")

    # (b) looser check vs the unfused full-f32 reference mirroring the PyTorch
    #     module (validates the per-head split, scale fold and proj+fc fold).
    ref_f32 = block_reference_f32(x, params, num_heads)
    err_b = jnp.max(jnp.abs(out - ref_f32))
    if not jnp.allclose(out, ref_f32, atol=2e-2, rtol=2e-2):
        raise AssertionError(f"mismatch vs f32 PyTorch-structure reference, max abs err = {err_b}")

    print("KERNEL_OK")
</pallas_src>

<mosaic_0001>
module attributes {stable_mosaic.version = 11 : i64} {
  func.func @block_kernel(%arg0: i32, %arg1: memref<1x16x128xf32, #tpu.memory_space<vmem>>, %arg2: memref<1x128xf32, #tpu.memory_space<vmem>>, %arg3: memref<1x128xf32, #tpu.memory_space<vmem>>, %arg4: memref<4x128x32xbf16, #tpu.memory_space<vmem>>, %arg5: memref<4x128x32xbf16, #tpu.memory_space<vmem>>, %arg6: memref<4x128x32xbf16, #tpu.memory_space<vmem>>, %arg7: memref<4x32x128xbf16, #tpu.memory_space<vmem>>, %arg8: memref<1x128xf32, #tpu.memory_space<vmem>>, %arg9: memref<1x128xf32, #tpu.memory_space<vmem>>, %arg10: memref<1x128xf32, #tpu.memory_space<vmem>>, %arg11: memref<4x128x32xbf16, #tpu.memory_space<vmem>>, %arg12: memref<4x128x32xbf16, #tpu.memory_space<vmem>>, %arg13: memref<4x128x32xbf16, #tpu.memory_space<vmem>>, %arg14: memref<4x32x128xbf16, #tpu.memory_space<vmem>>, %arg15: memref<1x128xf32, #tpu.memory_space<vmem>>, %arg16: memref<1x128xf32, #tpu.memory_space<vmem>>, %arg17: memref<1x128xf32, #tpu.memory_space<vmem>>, %arg18: memref<128x512xbf16, #tpu.memory_space<vmem>>, %arg19: memref<1x512xf32, #tpu.memory_space<vmem>>, %arg20: memref<512x128xbf16, #tpu.memory_space<vmem>>, %arg21: memref<1x128xf32, #tpu.memory_space<vmem>>, %arg22: memref<1x16x128xf32, #tpu.memory_space<vmem>>) attributes {dimension_semantics = [#tpu.dimension_semantics<parallel>], iteration_bounds = array<i64: 2>, scalar_prefetch = 0 : i64, scratch_operands = 0 : i64, tpu.core_type = #tpu.core_type<tc>, window_params = [{transform_indices = @transform_0, window_bounds = array<i64: 1, 16, 128>}, {pipeline_mode = #tpu.pipeline_mode<synchronous>, transform_indices = @transform_1, window_bounds = array<i64: 1, 128>}, {pipeline_mode = #tpu.pipeline_mode<synchronous>, transform_indices = @transform_2, window_bounds = array<i64: 1, 128>}, {pipeline_mode = #tpu.pipeline_mode<synchronous>, transform_indices = @transform_3, window_bounds = array<i64: 4, 128, 32>}, {pipeline_mode = #tpu.pipeline_mode<synchronous>, transform_indices = @transform_4, window_bounds = array<i64: 4, 128, 32>}, {pipeline_mode = #tpu.pipeline_mode<synchronous>, transform_indices = @transform_5, window_bounds = array<i64: 4, 128, 32>}, {pipeline_mode = #tpu.pipeline_mode<synchronous>, transform_indices = @transform_6, window_bounds = array<i64: 4, 32, 128>}, {pipeline_mode = #tpu.pipeline_mode<synchronous>, transform_indices = @transform_7, window_bounds = array<i64: 1, 128>}, {pipeline_mode = #tpu.pipeline_mode<synchronous>, transform_indices = @transform_8, window_bounds = array<i64: 1, 128>}, {pipeline_mode = #tpu.pipeline_mode<synchronous>, transform_indices = @transform_9, window_bounds = array<i64: 1, 128>}, {pipeline_mode = #tpu.pipeline_mode<synchronous>, transform_indices = @transform_10, window_bounds = array<i64: 4, 128, 32>}, {pipeline_mode = #tpu.pipeline_mode<synchronous>, transform_indices = @transform_11, window_bounds = array<i64: 4, 128, 32>}, {pipeline_mode = #tpu.pipeline_mode<synchronous>, transform_indices = @transform_12, window_bounds = array<i64: 4, 128, 32>}, {pipeline_mode = #tpu.pipeline_mode<synchronous>, transform_indices = @transform_13, window_bounds = array<i64: 4, 32, 128>}, {pipeline_mode = #tpu.pipeline_mode<synchronous>, transform_indices = @transform_14, window_bounds = array<i64: 1, 128>}, {pipeline_mode = #tpu.pipeline_mode<synchronous>, transform_indices = @transform_15, window_bounds = array<i64: 1, 128>}, {pipeline_mode = #tpu.pipeline_mode<synchronous>, transform_indices = @transform_16, window_bounds = array<i64: 1, 128>}, {pipeline_mode = #tpu.pipeline_mode<synchronous>, transform_indices = @transform_17, window_bounds = array<i64: 128, 512>}, {pipeline_mode = #tpu.pipeline_mode<synchronous>, transform_indices = @transform_18, window_bounds = array<i64: 1, 512>}, {pipeline_mode = #tpu.pipeline_mode<synchronous>, transform_indices = @transform_19, window_bounds = array<i64: 512, 128>}, {pipeline_mode = #tpu.pipeline_mode<synchronous>, transform_indices = @transform_20, window_bounds = array<i64: 1, 128>}, {transform_indices = @transform_21, window_bounds = array<i64: 1, 16, 128>}]} {
    %c0 = arith.constant 0 : index
    %c0_0 = arith.constant 0 : index
    %0 = vector.load %arg2[%c0, %c0_0] : memref<1x128xf32, #tpu.memory_space<vmem>>, vector<1x128xf32>
    %c0_1 = arith.constant 0 : index
    %c0_2 = arith.constant 0 : index
    %1 = vector.load %arg3[%c0_1, %c0_2] : memref<1x128xf32, #tpu.memory_space<vmem>>, vector<1x128xf32>
    %c0_3 = arith.constant 0 : index
    %c0_4 = arith.constant 0 : index
    %c0_5 = arith.constant 0 : index
    %2 = vector.load %arg4[%c0_3, %c0_4, %c0_5] : memref<4x128x32xbf16, #tpu.memory_space<vmem>>, vector<4x128x32xbf16>
    %c0_6 = arith.constant 0 : index
    %c0_7 = arith.constant 0 : index
    %c0_8 = arith.constant 0 : index
    %3 = vector.load %arg5[%c0_6, %c0_7, %c0_8] : memref<4x128x32xbf16, #tpu.memory_space<vmem>>, vector<4x128x32xbf16>
    %c0_9 = arith.constant 0 : index
    %c0_10 = arith.constant 0 : index
    %c0_11 = arith.constant 0 : index
    %4 = vector.load %arg6[%c0_9, %c0_10, %c0_11] : memref<4x128x32xbf16, #tpu.memory_space<vmem>>, vector<4x128x32xbf16>
    %c0_12 = arith.constant 0 : index
    %c0_13 = arith.constant 0 : index
    %c0_14 = arith.constant 0 : index
    %5 = vector.load %arg7[%c0_12, %c0_13, %c0_14] : memref<4x32x128xbf16, #tpu.memory_space<vmem>>, vector<4x32x128xbf16>
    %c0_15 = arith.constant 0 : index
    %c0_16 = arith.constant 0 : index
    %6 = vector.load %arg8[%c0_15, %c0_16] : memref<1x128xf32, #tpu.memory_space<vmem>>, vector<1x128xf32>
    %c0_17 = arith.constant 0 : index
    %c0_18 = arith.constant 0 : index
    %7 = vector.load %arg9[%c0_17, %c0_18] : memref<1x128xf32, #tpu.memory_space<vmem>>, vector<1x128xf32>
    %c0_19 = arith.constant 0 : index
    %c0_20 = arith.constant 0 : index
    %8 = vector.load %arg10[%c0_19, %c0_20] : memref<1x128xf32, #tpu.memory_space<vmem>>, vector<1x128xf32>
    %c0_21 = arith.constant 0 : index
    %c0_22 = arith.constant 0 : index
    %c0_23 = arith.constant 0 : index
    %9 = vector.load %arg11[%c0_21, %c0_22, %c0_23] : memref<4x128x32xbf16, #tpu.memory_space<vmem>>, vector<4x128x32xbf16>
    %c0_24 = arith.constant 0 : index
    %c0_25 = arith.constant 0 : index
    %c0_26 = arith.constant 0 : index
    %10 = vector.load %arg12[%c0_24, %c0_25, %c0_26] : memref<4x128x32xbf16, #tpu.memory_space<vmem>>, vector<4x128x32xbf16>
    %c0_27 = arith.constant 0 : index
    %c0_28 = arith.constant 0 : index
    %c0_29 = arith.constant 0 : index
    %11 = vector.load %arg13[%c0_27, %c0_28, %c0_29] : memref<4x128x32xbf16, #tpu.memory_space<vmem>>, vector<4x128x32xbf16>
    %c0_30 = arith.constant 0 : index
    %c0_31 = arith.constant 0 : index
    %c0_32 = arith.constant 0 : index
    %12 = vector.load %arg14[%c0_30, %c0_31, %c0_32] : memref<4x32x128xbf16, #tpu.memory_space<vmem>>, vector<4x32x128xbf16>
    %c0_33 = arith.constant 0 : index
    %c0_34 = arith.constant 0 : index
    %13 = vector.load %arg15[%c0_33, %c0_34] : memref<1x128xf32, #tpu.memory_space<vmem>>, vector<1x128xf32>
    %c0_35 = arith.constant 0 : index
    %c0_36 = arith.constant 0 : index
    %14 = vector.load %arg16[%c0_35, %c0_36] : memref<1x128xf32, #tpu.memory_space<vmem>>, vector<1x128xf32>
    %c0_37 = arith.constant 0 : index
    %c0_38 = arith.constant 0 : index
    %15 = vector.load %arg17[%c0_37, %c0_38] : memref<1x128xf32, #tpu.memory_space<vmem>>, vector<1x128xf32>
    %c0_39 = arith.constant 0 : index
    %c0_40 = arith.constant 0 : index
    %16 = vector.load %arg18[%c0_39, %c0_40] : memref<128x512xbf16, #tpu.memory_space<vmem>>, vector<128x512xbf16>
    %c0_41 = arith.constant 0 : index
    %c0_42 = arith.constant 0 : index
    %17 = vector.load %arg19[%c0_41, %c0_42] : memref<1x512xf32, #tpu.memory_space<vmem>>, vector<1x512xf32>
    %c0_43 = arith.constant 0 : index
    %c0_44 = arith.constant 0 : index
    %18 = vector.load %arg20[%c0_43, %c0_44] : memref<512x128xbf16, #tpu.memory_space<vmem>>, vector<512x128xbf16>
    %c0_45 = arith.constant 0 : index
    %c0_46 = arith.constant 0 : index
    %19 = vector.load %arg21[%c0_45, %c0_46] : memref<1x128xf32, #tpu.memory_space<vmem>>, vector<1x128xf32>
    %c0_47 = arith.constant 0 : index
    %c0_48 = arith.constant 0 : index
    %c0_49 = arith.constant 0 : index
    %20 = vector.load %arg1[%c0_47, %c0_48, %c0_49] : memref<1x16x128xf32, #tpu.memory_space<vmem>>, vector<1x16x128xf32>
    %21 = vector.shape_cast %20 : vector<1x16x128xf32> to vector<16x128xf32>
    %cst = arith.constant dense<0.000000e+00> : vector<16xf32>
    %22 = vector.multi_reduction <add>, %21, %cst [1] : vector<16x128xf32> to vector<16xf32>
    %23 = vector.shape_cast %22 : vector<16xf32> to vector<16x1xf32>
    %cst_50 = arith.constant 1.280000e+02 : f32
    %24 = vector.broadcast %cst_50 : f32 to vector<16x1xf32>
    %25 = arith.divf %23, %24 : vector<16x1xf32>
    %26 = vector.broadcast %25 : vector<16x1xf32> to vector<16x128xf32>
    %27 = arith.subf %21, %26 : vector<16x128xf32>
    %28 = arith.mulf %27, %27 : vector<16x128xf32>
    %cst_51 = arith.constant dense<0.000000e+00> : vector<16xf32>
    %29 = vector.multi_reduction <add>, %28, %cst_51 [1] : vector<16x128xf32> to vector<16xf32>
    %30 = vector.shape_cast %29 : vector<16xf32> to vector<16x1xf32>
    %cst_52 = arith.constant 1.280000e+02 : f32
    %31 = vector.broadcast %cst_52 : f32 to vector<16x1xf32>
    %32 = arith.divf %30, %31 : vector<16x1xf32>
    %cst_53 = arith.constant 9.99999974E-6 : f32
    %33 = vector.broadcast %cst_53 : f32 to vector<16x1xf32>
    %34 = arith.addf %32, %33 : vector<16x1xf32>
    %35 = math.rsqrt %34 : vector<16x1xf32>
    %36 = vector.broadcast %35 : vector<16x1xf32> to vector<16x128xf32>
    %37 = arith.mulf %27, %36 : vector<16x128xf32>
    %38 = vector.broadcast %0 : vector<1x128xf32> to vector<16x128xf32>
    %39 = arith.mulf %37, %38 : vector<16x128xf32>
    %40 = vector.broadcast %1 : vector<1x128xf32> to vector<16x128xf32>
    %41 = arith.addf %39, %40 : vector<16x128xf32>
    %42 = arith.truncf %41 : vector<16x128xf32> to vector<16x128xbf16>
    %43 = vector.shape_cast %42 : vector<16x128xbf16> to vector<1x16x128xbf16>
    %44 = vector.broadcast %43 : vector<1x16x128xbf16> to vector<4x16x128xbf16>
    "tpu.trace_start"() <{level = 10 : i32, message = "hnc,hcd->hnd"}> : () -> ()
    %cst_54 = arith.constant dense<0.000000e+00> : vector<4x16x32xf32>
    %45 = tpu.matmul %44, %2, %cst_54 {dimension_numbers = #tpu.dot_dimension_numbers<[2], [1], [1], [2], [0, 0, 0, 1, 1, 2], [0], [0]>} : vector<4x16x128xbf16>, vector<4x128x32xbf16>, vector<4x16x32xf32> -> vector<4x16x32xf32>
    %cst_55 = arith.constant dense<0.000000e+00> : vector<4x16x32xf32>
    %46 = tpu.matmul %44, %3, %cst_55 {dimension_numbers = #tpu.dot_dimension_numbers<[2], [1], [1], [2], [0, 0, 0, 1, 1, 2], [0], [0]>} : vector<4x16x128xbf16>, vector<4x128x32xbf16>, vector<4x16x32xf32> -> vector<4x16x32xf32>
    %cst_56 = arith.constant dense<0.000000e+00> : vector<4x16x32xf32>
    %47 = tpu.matmul %44, %4, %cst_56 {dimension_numbers = #tpu.dot_dimension_numbers<[2], [1], [1], [2], [0, 0, 0, 1, 1, 2], [0], [0]>} : vector<4x16x128xbf16>, vector<4x128x32xbf16>, vector<4x16x32xf32> -> vector<4x16x32xf32>
    "tpu.trace_stop"() : () -> ()
    %48 = arith.truncf %45 : vector<4x16x32xf32> to vector<4x16x32xbf16>
    %49 = arith.truncf %46 : vector<4x16x32xf32> to vector<4x16x32xbf16>
    "tpu.trace_start"() <{level = 10 : i32, message = "hqd,hkd->hqk"}> : () -> ()
    %cst_57 = arith.constant dense<0.000000e+00> : vector<4x16x16xf32>
    %50 = tpu.matmul %48, %49, %cst_57 {dimension_numbers = #tpu.dot_dimension_numbers<[2], [2], [1], [1], [0, 0, 0, 1, 1, 1], [0], [0]>} : vector<4x16x32xbf16>, vector<4x16x32xbf16>, vector<4x16x16xf32> -> vector<4x16x16xf32>
    "tpu.trace_stop"() : () -> ()
    %cst_58 = arith.constant dense<0xFF800000> : vector<4x16xf32>
    %51 = vector.multi_reduction <maximumf>, %50, %cst_58 [2] : vector<4x16x16xf32> to vector<4x16xf32>
    %52 = vector.shape_cast %51 : vector<4x16xf32> to vector<4x16x1xf32>
    %53 = vector.broadcast %52 : vector<4x16x1xf32> to vector<4x16x16xf32>
    %54 = arith.subf %50, %53 : vector<4x16x16xf32>
    %55 = math.exp %54 : vector<4x16x16xf32>
    %cst_59 = arith.constant dense<0.000000e+00> : vector<4x16xf32>
    %56 = vector.multi_reduction <add>, %55, %cst_59 [2] : vector<4x16x16xf32> to vector<4x16xf32>
    %57 = vector.shape_cast %56 : vector<4x16xf32> to vector<4x16x1xf32>
    %58 = tpu.reciprocal %57 {approx = true} : vector<4x16x1xf32> -> vector<4x16x1xf32>
    %59 = arith.mulf %57, %58 : vector<4x16x1xf32>
    %cst_60 = arith.constant 2.000000e+00 : f32
    %60 = vector.broadcast %cst_60 : f32 to vector<4x16x1xf32>
    %61 = arith.subf %60, %59 : vector<4x16x1xf32>
    %62 = arith.mulf %58, %61 : vector<4x16x1xf32>
    %63 = vector.broadcast %62 : vector<4x16x1xf32> to vector<4x16x16xf32>
    %64 = arith.mulf %55, %63 : vector<4x16x16xf32>
    %65 = arith.truncf %64 : vector<4x16x16xf32> to vector<4x16x16xbf16>
    %66 = arith.truncf %47 : vector<4x16x32xf32> to vector<4x16x32xbf16>
    "tpu.trace_start"() <{level = 10 : i32, message = "hqk,hkd->hqd"}> : () -> ()
    %cst_61 = arith.constant dense<0.000000e+00> : vector<4x16x32xf32>
    %67 = tpu.matmul %65, %66, %cst_61 {dimension_numbers = #tpu.dot_dimension_numbers<[2], [1], [1], [2], [0, 0, 0, 1, 1, 2], [0], [0]>} : vector<4x16x16xbf16>, vector<4x16x32xbf16>, vector<4x16x32xf32> -> vector<4x16x32xf32>
    "tpu.trace_stop"() : () -> ()
    %68 = arith.truncf %67 : vector<4x16x32xf32> to vector<4x16x32xbf16>
    "tpu.trace_start"() <{level = 10 : i32, message = "hnd,hdc->hnc"}> : () -> ()
    %cst_62 = arith.constant dense<0.000000e+00> : vector<4x16x128xf32>
    %69 = tpu.matmul %68, %5, %cst_62 {dimension_numbers = #tpu.dot_dimension_numbers<[2], [1], [1], [2], [0, 0, 0, 1, 1, 2], [0], [0]>} : vector<4x16x32xbf16>, vector<4x32x128xbf16>, vector<4x16x128xf32> -> vector<4x16x128xf32>
    "tpu.trace_stop"() : () -> ()
    %cst_63 = arith.constant dense<0.000000e+00> : vector<16x128xf32>
    %70 = vector.multi_reduction <add>, %69, %cst_63 [0] : vector<4x16x128xf32> to vector<16x128xf32>
    %71 = vector.broadcast %6 : vector<1x128xf32> to vector<16x128xf32>
    %72 = arith.addf %70, %71 : vector<16x128xf32>
    %73 = arith.addf %21, %72 : vector<16x128xf32>
    %cst_64 = arith.constant dense<0.000000e+00> : vector<16xf32>
    %74 = vector.multi_reduction <add>, %73, %cst_64 [1] : vector<16x128xf32> to vector<16xf32>
    %75 = vector.shape_cast %74 : vector<16xf32> to vector<16x1xf32>
    %cst_65 = arith.constant 1.280000e+02 : f32
    %76 = vector.broadcast %cst_65 : f32 to vector<16x1xf32>
    %77 = arith.divf %75, %76 : vector<16x1xf32>
    %78 = vector.broadcast %77 : vector<16x1xf32> to vector<16x128xf32>
    %79 = arith.subf %73, %78 : vector<16x128xf32>
    %80 = arith.mulf %79, %79 : vector<16x128xf32>
    %cst_66 = arith.constant dense<0.000000e+00> : vector<16xf32>
    %81 = vector.multi_reduction <add>, %80, %cst_66 [1] : vector<16x128xf32> to vector<16xf32>
    %82 = vector.shape_cast %81 : vector<16xf32> to vector<16x1xf32>
    %cst_67 = arith.constant 1.280000e+02 : f32
    %83 = vector.broadcast %cst_67 : f32 to vector<16x1xf32>
    %84 = arith.divf %82, %83 : vector<16x1xf32>
    %cst_68 = arith.constant 9.99999974E-6 : f32
    %85 = vector.broadcast %cst_68 : f32 to vector<16x1xf32>
    %86 = arith.addf %84, %85 : vector<16x1xf32>
    %87 = math.rsqrt %86 : vector<16x1xf32>
    %88 = vector.broadcast %87 : vector<16x1xf32> to vector<16x128xf32>
    %89 = arith.mulf %79, %88 : vector<16x128xf32>
    %90 = vector.broadcast %7 : vector<1x128xf32> to vector<16x128xf32>
    %91 = arith.mulf %89, %90 : vector<16x128xf32>
    %92 = vector.broadcast %8 : vector<1x128xf32> to vector<16x128xf32>
    %93 = arith.addf %91, %92 : vector<16x128xf32>
    %94 = arith.truncf %93 : vector<16x128xf32> to vector<16x128xbf16>
    %95 = vector.shape_cast %94 : vector<16x128xbf16> to vector<1x16x128xbf16>
    %96 = vector.broadcast %95 : vector<1x16x128xbf16> to vector<4x16x128xbf16>
    "tpu.trace_start"() <{level = 10 : i32, message = "hnc,hcd->hnd"}> : () -> ()
    %cst_69 = arith.constant dense<0.000000e+00> : vector<4x16x32xf32>
    %97 = tpu.matmul %96, %9, %cst_69 {dimension_numbers = #tpu.dot_dimension_numbers<[2], [1], [1], [2], [0, 0, 0, 1, 1, 2], [0], [0]>} : vector<4x16x128xbf16>, vector<4x128x32xbf16>, vector<4x16x32xf32> -> vector<4x16x32xf32>
    %cst_70 = arith.constant dense<0.000000e+00> : vector<4x16x32xf32>
    %98 = tpu.matmul %96, %10, %cst_70 {dimension_numbers = #tpu.dot_dimension_numbers<[2], [1], [1], [2], [0, 0, 0, 1, 1, 2], [0], [0]>} : vector<4x16x128xbf16>, vector<4x128x32xbf16>, vector<4x16x32xf32> -> vector<4x16x32xf32>
    %cst_71 = arith.constant dense<0.000000e+00> : vector<4x16x32xf32>
    %99 = tpu.matmul %96, %11, %cst_71 {dimension_numbers = #tpu.dot_dimension_numbers<[2], [1], [1], [2], [0, 0, 0, 1, 1, 2], [0], [0]>} : vector<4x16x128xbf16>, vector<4x128x32xbf16>, vector<4x16x32xf32> -> vector<4x16x32xf32>
    "tpu.trace_stop"() : () -> ()
    %100 = arith.truncf %97 : vector<4x16x32xf32> to vector<4x16x32xbf16>
    %101 = arith.truncf %98 : vector<4x16x32xf32> to vector<4x16x32xbf16>
    "tpu.trace_start"() <{level = 10 : i32, message = "hqd,hkd->hqk"}> : () -> ()
    %cst_72 = arith.constant dense<0.000000e+00> : vector<4x16x16xf32>
    %102 = tpu.matmul %100, %101, %cst_72 {dimension_numbers = #tpu.dot_dimension_numbers<[2], [2], [1], [1], [0, 0, 0, 1, 1, 1], [0], [0]>} : vector<4x16x32xbf16>, vector<4x16x32xbf16>, vector<4x16x16xf32> -> vector<4x16x16xf32>
    "tpu.trace_stop"() : () -> ()
    %cst_73 = arith.constant dense<0xFF800000> : vector<4x16xf32>
    %103 = vector.multi_reduction <maximumf>, %102, %cst_73 [2] : vector<4x16x16xf32> to vector<4x16xf32>
    %104 = vector.shape_cast %103 : vector<4x16xf32> to vector<4x16x1xf32>
    %105 = vector.broadcast %104 : vector<4x16x1xf32> to vector<4x16x16xf32>
    %106 = arith.subf %102, %105 : vector<4x16x16xf32>
    %107 = math.exp %106 : vector<4x16x16xf32>
    %cst_74 = arith.constant dense<0.000000e+00> : vector<4x16xf32>
    %108 = vector.multi_reduction <add>, %107, %cst_74 [2] : vector<4x16x16xf32> to vector<4x16xf32>
    %109 = vector.shape_cast %108 : vector<4x16xf32> to vector<4x16x1xf32>
    %110 = tpu.reciprocal %109 {approx = true} : vector<4x16x1xf32> -> vector<4x16x1xf32>
    %111 = arith.mulf %109, %110 : vector<4x16x1xf32>
    %cst_75 = arith.constant 2.000000e+00 : f32
    %112 = vector.broadcast %cst_75 : f32 to vector<4x16x1xf32>
    %113 = arith.subf %112, %111 : vector<4x16x1xf32>
    %114 = arith.mulf %110, %113 : vector<4x16x1xf32>
    %115 = vector.broadcast %114 : vector<4x16x1xf32> to vector<4x16x16xf32>
    %116 = arith.mulf %107, %115 : vector<4x16x16xf32>
    %117 = arith.truncf %116 : vector<4x16x16xf32> to vector<4x16x16xbf16>
    %118 = arith.truncf %99 : vector<4x16x32xf32> to vector<4x16x32xbf16>
    "tpu.trace_start"() <{level = 10 : i32, message = "hqk,hkd->hqd"}> : () -> ()
    %cst_76 = arith.constant dense<0.000000e+00> : vector<4x16x32xf32>
    %119 = tpu.matmul %117, %118, %cst_76 {dimension_numbers = #tpu.dot_dimension_numbers<[2], [1], [1], [2], [0, 0, 0, 1, 1, 2], [0], [0]>} : vector<4x16x16xbf16>, vector<4x16x32xbf16>, vector<4x16x32xf32> -> vector<4x16x32xf32>
    "tpu.trace_stop"() : () -> ()
    %120 = arith.truncf %119 : vector<4x16x32xf32> to vector<4x16x32xbf16>
    "tpu.trace_start"() <{level = 10 : i32, message = "hnd,hdc->hnc"}> : () -> ()
    %cst_77 = arith.constant dense<0.000000e+00> : vector<4x16x128xf32>
    %121 = tpu.matmul %120, %12, %cst_77 {dimension_numbers = #tpu.dot_dimension_numbers<[2], [1], [1], [2], [0, 0, 0, 1, 1, 2], [0], [0]>} : vector<4x16x32xbf16>, vector<4x32x128xbf16>, vector<4x16x128xf32> -> vector<4x16x128xf32>
    "tpu.trace_stop"() : () -> ()
    %cst_78 = arith.constant dense<0.000000e+00> : vector<16x128xf32>
    %122 = vector.multi_reduction <add>, %121, %cst_78 [0] : vector<4x16x128xf32> to vector<16x128xf32>
    %123 = vector.broadcast %13 : vector<1x128xf32> to vector<16x128xf32>
    %124 = arith.addf %122, %123 : vector<16x128xf32>
    %125 = arith.addf %73, %124 : vector<16x128xf32>
    %cst_79 = arith.constant dense<0.000000e+00> : vector<16xf32>
    %126 = vector.multi_reduction <add>, %125, %cst_79 [1] : vector<16x128xf32> to vector<16xf32>
    %127 = vector.shape_cast %126 : vector<16xf32> to vector<16x1xf32>
    %cst_80 = arith.constant 1.280000e+02 : f32
    %128 = vector.broadcast %cst_80 : f32 to vector<16x1xf32>
    %129 = arith.divf %127, %128 : vector<16x1xf32>
    %130 = vector.broadcast %129 : vector<16x1xf32> to vector<16x128xf32>
    %131 = arith.subf %125, %130 : vector<16x128xf32>
    %132 = arith.mulf %131, %131 : vector<16x128xf32>
    %cst_81 = arith.constant dense<0.000000e+00> : vector<16xf32>
    %133 = vector.multi_reduction <add>, %132, %cst_81 [1] : vector<16x128xf32> to vector<16xf32>
    %134 = vector.shape_cast %133 : vector<16xf32> to vector<16x1xf32>
    %cst_82 = arith.constant 1.280000e+02 : f32
    %135 = vector.broadcast %cst_82 : f32 to vector<16x1xf32>
    %136 = arith.divf %134, %135 : vector<16x1xf32>
    %cst_83 = arith.constant 9.99999974E-6 : f32
    %137 = vector.broadcast %cst_83 : f32 to vector<16x1xf32>
    %138 = arith.addf %136, %137 : vector<16x1xf32>
    %139 = math.rsqrt %138 : vector<16x1xf32>
    %140 = vector.broadcast %139 : vector<16x1xf32> to vector<16x128xf32>
    %141 = arith.mulf %131, %140 : vector<16x128xf32>
    %142 = vector.broadcast %14 : vector<1x128xf32> to vector<16x128xf32>
    %143 = arith.mulf %141, %142 : vector<16x128xf32>
    %144 = vector.broadcast %15 : vector<1x128xf32> to vector<16x128xf32>
    %145 = arith.addf %143, %144 : vector<16x128xf32>
    %146 = arith.truncf %145 : vector<16x128xf32> to vector<16x128xbf16>
    %cst_84 = arith.constant dense<0.000000e+00> : vector<16x512xf32>
    %147 = tpu.matmul %146, %16, %cst_84 {dimension_numbers = #tpu.dot_dimension_numbers<[1], [0], [0], [1], [0, 0, 1, 1], [], []>} : vector<16x128xbf16>, vector<128x512xbf16>, vector<16x512xf32> -> vector<16x512xf32>
    %148 = vector.broadcast %17 : vector<1x512xf32> to vector<16x512xf32>
    %149 = arith.addf %147, %148 : vector<16x512xf32>
    %cst_85 = arith.constant 5.000000e-01 : f32
    %150 = vector.broadcast %cst_85 : f32 to vector<16x512xf32>
    %151 = arith.mulf %150, %149 : vector<16x512xf32>
    %cst_86 = arith.constant 0.707106769 : f32
    %152 = vector.broadcast %cst_86 : f32 to vector<16x512xf32>
    %153 = arith.mulf %149, %152 : vector<16x512xf32>
    %154 = math.erf %153 : vector<16x512xf32>
    %cst_87 = arith.constant 1.000000e+00 : f32
    %155 = vector.broadcast %cst_87 : f32 to vector<16x512xf32>
    %156 = arith.addf %155, %154 : vector<16x512xf32>
    %157 = arith.mulf %151, %156 : vector<16x512xf32>
    %158 = arith.truncf %157 : vector<16x512xf32> to vector<16x512xbf16>
    %cst_88 = arith.constant dense<0.000000e+00> : vector<16x128xf32>
    %159 = tpu.matmul %158, %18, %cst_88 {dimension_numbers = #tpu.dot_dimension_numbers<[1], [0], [0], [1], [0, 0, 1, 1], [], []>} : vector<16x512xbf16>, vector<512x128xbf16>, vector<16x128xf32> -> vector<16x128xf32>
    %160 = vector.broadcast %19 : vector<1x128xf32> to vector<16x128xf32>
    %161 = arith.addf %159, %160 : vector<16x128xf32>
    %162 = arith.addf %125, %161 : vector<16x128xf32>
    %c0_89 = arith.constant 0 : index
    %c0_90 = arith.constant 0 : index
    %c0_91 = arith.constant 0 : index
    %163 = vector.load %arg22[%c0_89, %c0_90, %c0_91] : memref<1x16x128xf32, #tpu.memory_space<vmem>>, vector<1x16x128xf32>
    %164 = vector.shape_cast %163 : vector<1x16x128xf32> to vector<16x128xf32>
    %165 = vector.shape_cast %162 : vector<16x128xf32> to vector<1x16x128xf32>
    tpu.vector_store %arg22[%c0_89, %c0_90, %c0_91], %165 {strides = array<i32>} : memref<1x16x128xf32, #tpu.memory_space<vmem>>, vector<1x16x128xf32>,
    return
  }
  func.func @transform_0(%arg0: i32) -> (i32, i32, i32) {
    %c0_i32 = arith.constant 0 : i32
    %c0_i32_0 = arith.constant 0 : i32
    %c0_i32_1 = arith.constant 0 : i32
    return %arg0, %c0_i32, %c0_i32_0 : i32, i32, i32
  }
  func.func @transform_1(%arg0: i32) -> (i32, i32) {
    %c0_i32 = arith.constant 0 : i32
    %c0_i32_0 = arith.constant 0 : i32
    %c0_i32_1 = arith.constant 0 : i32
    return %c0_i32, %c0_i32_0 : i32, i32
  }
  func.func @transform_2(%arg0: i32) -> (i32, i32) {
    %c0_i32 = arith.constant 0 : i32
    %c0_i32_0 = arith.constant 0 : i32
    %c0_i32_1 = arith.constant 0 : i32
    return %c0_i32, %c0_i32_0 : i32, i32
  }
  func.func @transform_3(%arg0: i32) -> (i32, i32, i32) {
    %c0_i32 = arith.constant 0 : i32
    %c0_i32_0 = arith.constant 0 : i32
    %c0_i32_1 = arith.constant 0 : i32
    %c0_i32_2 = arith.constant 0 : i32
    return %c0_i32, %c0_i32_0, %c0_i32_1 : i32, i32, i32
  }
  func.func @transform_4(%arg0: i32) -> (i32, i32, i32) {
    %c0_i32 = arith.constant 0 : i32
    %c0_i32_0 = arith.constant 0 : i32
    %c0_i32_1 = arith.constant 0 : i32
    %c0_i32_2 = arith.constant 0 : i32
    return %c0_i32, %c0_i32_0, %c0_i32_1 : i32, i32, i32
  }
  func.func @transform_5(%arg0: i32) -> (i32, i32, i32) {
    %c0_i32 = arith.constant 0 : i32
    %c0_i32_0 = arith.constant 0 : i32
    %c0_i32_1 = arith.constant 0 : i32
    %c0_i32_2 = arith.constant 0 : i32
    return %c0_i32, %c0_i32_0, %c0_i32_1 : i32, i32, i32
  }
  func.func @transform_6(%arg0: i32) -> (i32, i32, i32) {
    %c0_i32 = arith.constant 0 : i32
    %c0_i32_0 = arith.constant 0 : i32
    %c0_i32_1 = arith.constant 0 : i32
    %c0_i32_2 = arith.constant 0 : i32
    return %c0_i32, %c0_i32_0, %c0_i32_1 : i32, i32, i32
  }
  func.func @transform_7(%arg0: i32) -> (i32, i32) {
    %c0_i32 = arith.constant 0 : i32
    %c0_i32_0 = arith.constant 0 : i32
    %c0_i32_1 = arith.constant 0 : i32
    return %c0_i32, %c0_i32_0 : i32, i32
  }
  func.func @transform_8(%arg0: i32) -> (i32, i32) {
    %c0_i32 = arith.constant 0 : i32
    %c0_i32_0 = arith.constant 0 : i32
    %c0_i32_1 = arith.constant 0 : i32
    return %c0_i32, %c0_i32_0 : i32, i32
  }
  func.func @transform_9(%arg0: i32) -> (i32, i32) {
    %c0_i32 = arith.constant 0 : i32
    %c0_i32_0 = arith.constant 0 : i32
    %c0_i32_1 = arith.constant 0 : i32
    return %c0_i32, %c0_i32_0 : i32, i32
  }
  func.func @transform_10(%arg0: i32) -> (i32, i32, i32) {
    %c0_i32 = arith.constant 0 : i32
    %c0_i32_0 = arith.constant 0 : i32
    %c0_i32_1 = arith.constant 0 : i32
    %c0_i32_2 = arith.constant 0 : i32
    return %c0_i32, %c0_i32_0, %c0_i32_1 : i32, i32, i32
  }
  func.func @transform_11(%arg0: i32) -> (i32, i32, i32) {
    %c0_i32 = arith.constant 0 : i32
    %c0_i32_0 = arith.constant 0 : i32
    %c0_i32_1 = arith.constant 0 : i32
    %c0_i32_2 = arith.constant 0 : i32
    return %c0_i32, %c0_i32_0, %c0_i32_1 : i32, i32, i32
  }
  func.func @transform_12(%arg0: i32) -> (i32, i32, i32) {
    %c0_i32 = arith.constant 0 : i32
    %c0_i32_0 = arith.constant 0 : i32
    %c0_i32_1 = arith.constant 0 : i32
    %c0_i32_2 = arith.constant 0 : i32
    return %c0_i32, %c0_i32_0, %c0_i32_1 : i32, i32, i32
  }
  func.func @transform_13(%arg0: i32) -> (i32, i32, i32) {
    %c0_i32 = arith.constant 0 : i32
    %c0_i32_0 = arith.constant 0 : i32
    %c0_i32_1 = arith.constant 0 : i32
    %c0_i32_2 = arith.constant 0 : i32
    return %c0_i32, %c0_i32_0, %c0_i32_1 : i32, i32, i32
  }
  func.func @transform_14(%arg0: i32) -> (i32, i32) {
    %c0_i32 = arith.constant 0 : i32
    %c0_i32_0 = arith.constant 0 : i32
    %c0_i32_1 = arith.constant 0 : i32
    return %c0_i32, %c0_i32_0 : i32, i32
  }
  func.func @transform_15(%arg0: i32) -> (i32, i32) {
    %c0_i32 = arith.constant 0 : i32
    %c0_i32_0 = arith.constant 0 : i32
    %c0_i32_1 = arith.constant 0 : i32
    return %c0_i32, %c0_i32_0 : i32, i32
  }
  func.func @transform_16(%arg0: i32) -> (i32, i32) {
    %c0_i32 = arith.constant 0 : i32
    %c0_i32_0 = arith.constant 0 : i32
    %c0_i32_1 = arith.constant 0 : i32
    return %c0_i32, %c0_i32_0 : i32, i32
  }
  func.func @transform_17(%arg0: i32) -> (i32, i32) {
    %c0_i32 = arith.constant 0 : i32
    %c0_i32_0 = arith.constant 0 : i32
    %c0_i32_1 = arith.constant 0 : i32
    return %c0_i32, %c0_i32_0 : i32, i32
  }
  func.func @transform_18(%arg0: i32) -> (i32, i32) {
    %c0_i32 = arith.constant 0 : i32
    %c0_i32_0 = arith.constant 0 : i32
    %c0_i32_1 = arith.constant 0 : i32
    return %c0_i32, %c0_i32_0 : i32, i32
  }
  func.func @transform_19(%arg0: i32) -> (i32, i32) {
    %c0_i32 = arith.constant 0 : i32
    %c0_i32_0 = arith.constant 0 : i32
    %c0_i32_1 = arith.constant 0 : i32
    return %c0_i32, %c0_i32_0 : i32, i32
  }
  func.func @transform_20(%arg0: i32) -> (i32, i32) {
    %c0_i32 = arith.constant 0 : i32
    %c0_i32_0 = arith.constant 0 : i32
    %c0_i32_1 = arith.constant 0 : i32
    return %c0_i32, %c0_i32_0 : i32, i32
  }
  func.func @transform_21(%arg0: i32) -> (i32, i32, i32) {
    %c0_i32 = arith.constant 0 : i32
    %c0_i32_0 = arith.constant 0 : i32
    %c0_i32_1 = arith.constant 0 : i32
    return %arg0, %c0_i32, %c0_i32_0 : i32, i32, i32
  }
}

</mosaic_0001>

<llo_original>
// kernel: tpu_custom_call.1
$region0: #{tpu_custom_call.1}
  #allocation0 [shape = 'u32[]', space=smem, size = 0x4, offset = 0x4, fixed_abs, tag = 'smem constant byte address 0x4 - core index']
  #allocation1 [shape = 'u32[144,128]{1,0:T(1,128)}', space=vmem, size = 0x12000, scoped, tag = 'internal scratch']
  %s0 = inlined_call_operand.vmem [shape: f32[2,16,128], index: 0, kind: input, shape index: {}]
  %s1 = inlined_call_operand.vmem [shape: f32[1,128], index: 1, kind: input, shape index: {}]
  %s2 = inlined_call_operand.vmem [shape: f32[1,128], index: 2, kind: input, shape index: {}]
  %s3 = inlined_call_operand.vmem [shape: bf16[4,128,32], index: 3, kind: input, shape index: {}]
  %s4 = inlined_call_operand.vmem [shape: bf16[4,128,32], index: 4, kind: input, shape index: {}]
  %s5 = inlined_call_operand.vmem [shape: bf16[4,128,32], index: 5, kind: input, shape index: {}]
  %s6 = inlined_call_operand.vmem [shape: bf16[4,32,128], index: 6, kind: input, shape index: {}]
  %s7 = inlined_call_operand.vmem [shape: f32[1,128], index: 7, kind: input, shape index: {}]
  %s8 = inlined_call_operand.vmem [shape: f32[1,128], index: 8, kind: input, shape index: {}]
  %s9 = inlined_call_operand.vmem [shape: f32[1,128], index: 9, kind: input, shape index: {}]
  %s10 = inlined_call_operand.vmem [shape: bf16[4,128,32], index: 10, kind: input, shape index: {}]
  %s11 = inlined_call_operand.vmem [shape: bf16[4,128,32], index: 11, kind: input, shape index: {}]
  %s12 = inlined_call_operand.vmem [shape: bf16[4,128,32], index: 12, kind: input, shape index: {}]
  %s13 = inlined_call_operand.vmem [shape: bf16[4,32,128], index: 13, kind: input, shape index: {}]
  %s14 = inlined_call_operand.vmem [shape: f32[1,128], index: 14, kind: input, shape index: {}]
  %s15 = inlined_call_operand.vmem [shape: f32[1,128], index: 15, kind: input, shape index: {}]
  %s16 = inlined_call_operand.vmem [shape: f32[1,128], index: 16, kind: input, shape index: {}]
  %s17 = inlined_call_operand.vmem [shape: bf16[128,512], index: 17, kind: input, shape index: {}]
  %s18 = inlined_call_operand.vmem [shape: f32[1,512], index: 18, kind: input, shape index: {}]
  %s19 = inlined_call_operand.vmem [shape: bf16[512,128], index: 19, kind: input, shape index: {}]
  %s20 = inlined_call_operand.vmem [shape: f32[1,128], index: 20, kind: input, shape index: {}]
  %s21 = inlined_call_operand.hbm [shape: f32[2,16,128], index: 21, kind: output, shape index: {}]
  %s22 = sld [smem:[#allocation0]]
  $region117: #{tpu_custom_call.1} parent=0
    _
  %s24 = ssub.s32 1, %s22
  %s25 = scalar_select 0, %s24, %s22
  $region1: #{tpu_custom_call.1} parent=0
    #allocation2 [shape = 'u8[16384]{0}', space=vmem, size = 0x4000, scoped, tag = 'output window, operand 0']
    #allocation3 [shape = 's32[2]{0}', space=sflag, size = 0x8, scoped, tag = 'scoped memory for tpu_custom_call.1']
    %26 = vsyncpa [#allocation3], 0
    %s27 = scalar_lea.sflag [#allocation3], 1
    %28 = vsyncpa %s27, 0
    loop: start=0, step=1, limit=4
    $region2: #{tpu_custom_call.1} parent=1 // loop_pre_header
      _
    $region3: #{tpu_custom_call.1} parent=1 // loop_header
      %s30 = sphi 0, %s34
      %p31 = scmp.ge.s32.totalorder %s30, 4
      %s40 = sphi 0, %s42
      %s43 = sphi 0, %s40
      %s44 = sphi 0, %s43
      %s60 = sphi 0, %s44
      %s64 = sphi 0, %s64
      %s66 = sphi 0, %s64
      %s67 = sphi 0, %s66
      %s81 = sphi 0, %s67
      %s85 = sphi 0, %s85
      %s87 = sphi 0, %s85
      %s88 = sphi 0, %s87
      %s102 = sphi 0, %s88
      %s106 = sphi 0, %s106
      %s108 = sphi 0, %s106
      %s109 = sphi 0, %s108
      %s123 = sphi 0, %s109
      %s127 = sphi 0, %s127
      %s129 = sphi 0, %s127
      %s130 = sphi 0, %s129
      %s144 = sphi 0, %s130
      %s148 = sphi 0, %s148
      %s150 = sphi 0, %s148
      %s151 = sphi 0, %s150
      %s165 = sphi 0, %s151
      %s169 = sphi 0, %s169
      %s171 = sphi 0, %s169
      %s172 = sphi 0, %s171
      %s186 = sphi 0, %s172
      %s190 = sphi 0, %s190
      %s192 = sphi 0, %s190
      %s193 = sphi 0, %s192
      %s207 = sphi 0, %s193
      %s211 = sphi 0, %s211
      %s213 = sphi 0, %s211
      %s214 = sphi 0, %s213
      %s228 = sphi 0, %s214
      %s232 = sphi 0, %s232
      %s234 = sphi 0, %s232
      %s235 = sphi 0, %s234
      %s249 = sphi 0, %s235
      %s253 = sphi 0, %s253
      %s255 = sphi 0, %s253
      %s256 = sphi 0, %s255
      %s270 = sphi 0, %s256
      %s274 = sphi 0, %s274
      %s276 = sphi 0, %s274
      %s277 = sphi 0, %s276
      %s291 = sphi 0, %s277
      %s295 = sphi 0, %s295
      %s297 = sphi 0, %s295
      %s298 = sphi 0, %s297
      %s312 = sphi 0, %s298
      %s316 = sphi 0, %s316
      %s318 = sphi 0, %s316
      %s319 = sphi 0, %s318
      %s333 = sphi 0, %s319
      %s337 = sphi 0, %s337
      %s339 = sphi 0, %s337
      %s340 = sphi 0, %s339
      %s354 = sphi 0, %s340
      %s358 = sphi 0, %s358
      %s360 = sphi 0, %s358
      %s361 = sphi 0, %s360
      %s375 = sphi 0, %s361
      %s379 = sphi 0, %s379
      %s381 = sphi 0, %s379
      %s382 = sphi 0, %s381
      %s396 = sphi 0, %s382
      %s400 = sphi 0, %s400
      %s402 = sphi 0, %s400
      %s403 = sphi 0, %s402
      %s417 = sphi 0, %s403
      %s421 = sphi 0, %s421
      %s423 = sphi 0, %s421
      %s424 = sphi 0, %s423
      %s438 = sphi 0, %s424
      %s442 = sphi 0, %s442
      %s444 = sphi 0, %s442
      %s445 = sphi 0, %s444
      %s459 = sphi 0, %s445
      %s463 = sphi 0, %s463
      %s465 = sphi 0, %s463
      %s466 = sphi 0, %s465
      %s480 = sphi 0, %s466
      %s486 = sphi 0, %s488
      %s489 = sphi 0, %s486
      %s490 = sphi 0, %s489
      %s506 = sphi 0, %s490
    $region4: #{tpu_custom_call.1} parent=1 // loop_header_branch
      %33 = sbr.rel (%p31) target = $region8
    $region5: #{tpu_custom_call.1} parent=1 // loop_body
      %s35 = ssub.s32 %s30, 1
      %s36 = ssub.s32 %s30, 2
      %s37 = sadd.s32 %s30, 1
      %s38 = ssub.s32 %s30, %s37
      %p39 = scmp.eq.s32.totalorder %s38, 0
      %s41 = sadd.s32 %s40, 1
      %s42 = scalar_select %p39, %s40, %s41
      %p45 = pneg %p39
      %p46 = scmp.eq.s32.totalorder %s30, 1
      %p47 = por %p45, %p46
      %p48 = scmp.ne.s32.totalorder %s40, %s43
      %p49 = scmp.eq.s32.totalorder %s30, 0
      %p50 = por %p48, %p49
      %p51 = scmp.ne.s32.totalorder %s40, %s43
      %p52 = scmp.eq.s32.totalorder %s35, 1
      %p53 = por %p51, %p52
      %p54 = scmp.ne.s32.totalorder %s43, %s44
      %p55 = scmp.eq.s32.totalorder %s35, 0
      %p56 = por %p54, %p55
      %p57 = scmp.ne.s32.totalorder %s43, %s44
      %p58 = scmp.eq.s32.totalorder %s36, 1
      %p59 = por %p57, %p58
      %p61 = scmp.ne.s32.totalorder %s44, %s60
      %p62 = scmp.eq.s32.totalorder %s36, 0
      %p63 = por %p61, %p62
      %s65 = sadd.s32 %s64, 1
      %p68 = scmp.eq.s32.totalorder %s30, 1
      %p69 = scmp.ne.s32.totalorder %s64, %s66
      %p70 = scmp.eq.s32.totalorder %s30, 0
      %p71 = por %p69, %p70
      %p72 = scmp.ne.s32.totalorder %s64, %s66
      %p73 = scmp.eq.s32.totalorder %s35, 1
      %p74 = por %p72, %p73
      %p75 = scmp.ne.s32.totalorder %s66, %s67
      %p76 = scmp.eq.s32.totalorder %s35, 0
      %p77 = por %p75, %p76
      %p78 = scmp.ne.s32.totalorder %s66, %s67
      %p79 = scmp.eq.s32.totalorder %s36, 1
      %p80 = por %p78, %p79
      %p82 = scmp.ne.s32.totalorder %s67, %s81
      %p83 = scmp.eq.s32.totalorder %s36, 0
      %p84 = por %p82, %p83
      %s86 = sadd.s32 %s85, 1
      %p89 = scmp.eq.s32.totalorder %s30, 1
      %p90 = scmp.ne.s32.totalorder %s85, %s87
      %p91 = scmp.eq.s32.totalorder %s30, 0
      %p92 = por %p90, %p91
      %p93 = scmp.ne.s32.totalorder %s85, %s87
      %p94 = scmp.eq.s32.totalorder %s35, 1
      %p95 = por %p93, %p94
      %p96 = scmp.ne.s32.totalorder %s87, %s88
      %p97 = scmp.eq.s32.totalorder %s35, 0
      %p98 = por %p96, %p97
      %p99 = scmp.ne.s32.totalorder %s87, %s88
      %p100 = scmp.eq.s32.totalorder %s36, 1
      %p101 = por %p99, %p100
      %p103 = scmp.ne.s32.totalorder %s88, %s102
      %p104 = scmp.eq.s32.totalorder %s36, 0
      %p105 = por %p103, %p104
      %s107 = sadd.s32 %s106, 1
      %p110 = scmp.eq.s32.totalorder %s30, 1
      %p111 = scmp.ne.s32.totalorder %s106, %s108
      %p112 = scmp.eq.s32.totalorder %s30, 0
      %p113 = por %p111, %p112
      %p114 = scmp.ne.s32.totalorder %s106, %s108
      %p115 = scmp.eq.s32.totalorder %s35, 1
      %p116 = por %p114, %p115
      %p117 = scmp.ne.s32.totalorder %s108, %s109
      %p118 = scmp.eq.s32.totalorder %s35, 0
      %p119 = por %p117, %p118
      %p120 = scmp.ne.s32.totalorder %s108, %s109
      %p121 = scmp.eq.s32.totalorder %s36, 1
      %p122 = por %p120, %p121
      %p124 = scmp.ne.s32.totalorder %s109, %s123
      %p125 = scmp.eq.s32.totalorder %s36, 0
      %p126 = por %p124, %p125
      %s128 = sadd.s32 %s127, 1
      %p131 = scmp.eq.s32.totalorder %s30, 1
      %p132 = scmp.ne.s32.totalorder %s127, %s129
      %p133 = scmp.eq.s32.totalorder %s30, 0
      %p134 = por %p132, %p133
      %p135 = scmp.ne.s32.totalorder %s127, %s129
      %p136 = scmp.eq.s32.totalorder %s35, 1
      %p137 = por %p135, %p136
      %p138 = scmp.ne.s32.totalorder %s129, %s130
      %p139 = scmp.eq.s32.totalorder %s35, 0
      %p140 = por %p138, %p139
      %p141 = scmp.ne.s32.totalorder %s129, %s130
      %p142 = scmp.eq.s32.totalorder %s36, 1
      %p143 = por %p141, %p142
      %p145 = scmp.ne.s32.totalorder %s130, %s144
      %p146 = scmp.eq.s32.totalorder %s36, 0
      %p147 = por %p145, %p146
      %s149 = sadd.s32 %s148, 1
      %p152 = scmp.eq.s32.totalorder %s30, 1
      %p153 = scmp.ne.s32.totalorder %s148, %s150
      %p154 = scmp.eq.s32.totalorder %s30, 0
      %p155 = por %p153, %p154
      %p156 = scmp.ne.s32.totalorder %s148, %s150
      %p157 = scmp.eq.s32.totalorder %s35, 1
      %p158 = por %p156, %p157
      %p159 = scmp.ne.s32.totalorder %s150, %s151
      %p160 = scmp.eq.s32.totalorder %s35, 0
      %p161 = por %p159, %p160
      %p162 = scmp.ne.s32.totalorder %s150, %s151
      %p163 = scmp.eq.s32.totalorder %s36, 1
      %p164 = por %p162, %p163
      %p166 = scmp.ne.s32.totalorder %s151, %s165
      %p167 = scmp.eq.s32.totalorder %s36, 0
      %p168 = por %p166, %p167
      %s170 = sadd.s32 %s169, 1
      %p173 = scmp.eq.s32.totalorder %s30, 1
      %p174 = scmp.ne.s32.totalorder %s169, %s171
      %p175 = scmp.eq.s32.totalorder %s30, 0
      %p176 = por %p174, %p175
      %p177 = scmp.ne.s32.totalorder %s169, %s171
      %p178 = scmp.eq.s32.totalorder %s35, 1
      %p179 = por %p177, %p178
      %p180 = scmp.ne.s32.totalorder %s171, %s172
      %p181 = scmp.eq.s32.totalorder %s35, 0
      %p182 = por %p180, %p181
      %p183 = scmp.ne.s32.totalorder %s171, %s172
      %p184 = scmp.eq.s32.totalorder %s36, 1
      %p185 = por %p183, %p184
      %p187 = scmp.ne.s32.totalorder %s172, %s186
      %p188 = scmp.eq.s32.totalorder %s36, 0
      %p189 = por %p187, %p188
      %s191 = sadd.s32 %s190, 1
      %p194 = scmp.eq.s32.totalorder %s30, 1
      %p195 = scmp.ne.s32.totalorder %s190, %s192
      %p196 = scmp.eq.s32.totalorder %s30, 0
      %p197 = por %p195, %p196
      %p198 = scmp.ne.s32.totalorder %s190, %s192
      %p199 = scmp.eq.s32.totalorder %s35, 1
      %p200 = por %p198, %p199
      %p201 = scmp.ne.s32.totalorder %s192, %s193
      %p202 = scmp.eq.s32.totalorder %s35, 0
      %p203 = por %p201, %p202
      %p204 = scmp.ne.s32.totalorder %s192, %s193
      %p205 = scmp.eq.s32.totalorder %s36, 1
      %p206 = por %p204, %p205
      %p208 = scmp.ne.s32.totalorder %s193, %s207
      %p209 = scmp.eq.s32.totalorder %s36, 0
      %p210 = por %p208, %p209
      %s212 = sadd.s32 %s211, 1
      %p215 = scmp.eq.s32.totalorder %s30, 1
      %p216 = scmp.ne.s32.totalorder %s211, %s213
      %p217 = scmp.eq.s32.totalorder %s30, 0
      %p218 = por %p216, %p217
      %p219 = scmp.ne.s32.totalorder %s211, %s213
      %p220 = scmp.eq.s32.totalorder %s35, 1
      %p221 = por %p219, %p220
      %p222 = scmp.ne.s32.totalorder %s213, %s214
      %p223 = scmp.eq.s32.totalorder %s35, 0
      %p224 = por %p222, %p223
      %p225 = scmp.ne.s32.totalorder %s213, %s214
      %p226 = scmp.eq.s32.totalorder %s36, 1
      %p227 = por %p225, %p226
      %p229 = scmp.ne.s32.totalorder %s214, %s228
      %p230 = scmp.eq.s32.totalorder %s36, 0
      %p231 = por %p229, %p230
      %s233 = sadd.s32 %s232, 1
      %p236 = scmp.eq.s32.totalorder %s30, 1
      %p237 = scmp.ne.s32.totalorder %s232, %s234
      %p238 = scmp.eq.s32.totalorder %s30, 0
      %p239 = por %p237, %p238
      %p240 = scmp.ne.s32.totalorder %s232, %s234
      %p241 = scmp.eq.s32.totalorder %s35, 1
      %p242 = por %p240, %p241
      %p243 = scmp.ne.s32.totalorder %s234, %s235
      %p244 = scmp.eq.s32.totalorder %s35, 0
      %p245 = por %p243, %p244
      %p246 = scmp.ne.s32.totalorder %s234, %s235
      %p247 = scmp.eq.s32.totalorder %s36, 1
      %p248 = por %p246, %p247
      %p250 = scmp.ne.s32.totalorder %s235, %s249
      %p251 = scmp.eq.s32.totalorder %s36, 0
      %p252 = por %p250, %p251
      %s254 = sadd.s32 %s253, 1
      %p257 = scmp.eq.s32.totalorder %s30, 1
      %p258 = scmp.ne.s32.totalorder %s253, %s255
      %p259 = scmp.eq.s32.totalorder %s30, 0
      %p260 = por %p258, %p259
      %p261 = scmp.ne.s32.totalorder %s253, %s255
      %p262 = scmp.eq.s32.totalorder %s35, 1
      %p263 = por %p261, %p262
      %p264 = scmp.ne.s32.totalorder %s255, %s256
      %p265 = scmp.eq.s32.totalorder %s35, 0
      %p266 = por %p264, %p265
      %p267 = scmp.ne.s32.totalorder %s255, %s256
      %p268 = scmp.eq.s32.totalorder %s36, 1
      %p269 = por %p267, %p268
      %p271 = scmp.ne.s32.totalorder %s256, %s270
      %p272 = scmp.eq.s32.totalorder %s36, 0
      %p273 = por %p271, %p272
      %s275 = sadd.s32 %s274, 1
      %p278 = scmp.eq.s32.totalorder %s30, 1
      %p279 = scmp.ne.s32.totalorder %s274, %s276
      %p280 = scmp.eq.s32.totalorder %s30, 0
      %p281 = por %p279, %p280
      %p282 = scmp.ne.s32.totalorder %s274, %s276
      %p283 = scmp.eq.s32.totalorder %s35, 1
      %p284 = por %p282, %p283
      %p285 = scmp.ne.s32.totalorder %s276, %s277
      %p286 = scmp.eq.s32.totalorder %s35, 0
      %p287 = por %p285, %p286
      %p288 = scmp.ne.s32.totalorder %s276, %s277
      %p289 = scmp.eq.s32.totalorder %s36, 1
      %p290 = por %p288, %p289
      %p292 = scmp.ne.s32.totalorder %s277, %s291
      %p293 = scmp.eq.s32.totalorder %s36, 0
      %p294 = por %p292, %p293
      %s296 = sadd.s32 %s295, 1
      %p299 = scmp.eq.s32.totalorder %s30, 1
      %p300 = scmp.ne.s32.totalorder %s295, %s297
      %p301 = scmp.eq.s32.totalorder %s30, 0
      %p302 = por %p300, %p301
      %p303 = scmp.ne.s32.totalorder %s295, %s297
      %p304 = scmp.eq.s32.totalorder %s35, 1
      %p305 = por %p303, %p304
      %p306 = scmp.ne.s32.totalorder %s297, %s298
      %p307 = scmp.eq.s32.totalorder %s35, 0
      %p308 = por %p306, %p307
      %p309 = scmp.ne.s32.totalorder %s297, %s298
      %p310 = scmp.eq.s32.totalorder %s36, 1
      %p311 = por %p309, %p310
      %p313 = scmp.ne.s32.totalorder %s298, %s312
      %p314 = scmp.eq.s32.totalorder %s36, 0
      %p315 = por %p313, %p314
      %s317 = sadd.s32 %s316, 1
      %p320 = scmp.eq.s32.totalorder %s30, 1
      %p321 = scmp.ne.s32.totalorder %s316, %s318
      %p322 = scmp.eq.s32.totalorder %s30, 0
      %p323 = por %p321, %p322
      %p324 = scmp.ne.s32.totalorder %s316, %s318
      %p325 = scmp.eq.s32.totalorder %s35, 1
      %p326 = por %p324, %p325
      %p327 = scmp.ne.s32.totalorder %s318, %s319
      %p328 = scmp.eq.s32.totalorder %s35, 0
      %p329 = por %p327, %p328
      %p330 = scmp.ne.s32.totalorder %s318, %s319
      %p331 = scmp.eq.s32.totalorder %s36, 1
      %p332 = por %p330, %p331
      %p334 = scmp.ne.s32.totalorder %s319, %s333
      %p335 = scmp.eq.s32.totalorder %s36, 0
      %p336 = por %p334, %p335
      %s338 = sadd.s32 %s337, 1
      %p341 = scmp.eq.s32.totalorder %s30, 1
      %p342 = scmp.ne.s32.totalorder %s337, %s339
      %p343 = scmp.eq.s32.totalorder %s30, 0
      %p344 = por %p342, %p343
      %p345 = scmp.ne.s32.totalorder %s337, %s339
      %p346 = scmp.eq.s32.totalorder %s35, 1
      %p347 = por %p345, %p346
      %p348 = scmp.ne.s32.totalorder %s339, %s340
      %p349 = scmp.eq.s32.totalorder %s35, 0
      %p350 = por %p348, %p349
      %p351 = scmp.ne.s32.totalorder %s339, %s340
      %p352 = scmp.eq.s32.totalorder %s36, 1
      %p353 = por %p351, %p352
      %p355 = scmp.ne.s32.totalorder %s340, %s354
      %p356 = scmp.eq.s32.totalorder %s36, 0
      %p357 = por %p355, %p356
      %s359 = sadd.s32 %s358, 1
      %p362 = scmp.eq.s32.totalorder %s30, 1
      %p363 = scmp.ne.s32.totalorder %s358, %s360
      %p364 = scmp.eq.s32.totalorder %s30, 0
      %p365 = por %p363, %p364
      %p366 = scmp.ne.s32.totalorder %s358, %s360
      %p367 = scmp.eq.s32.totalorder %s35, 1
      %p368 = por %p366, %p367
      %p369 = scmp.ne.s32.totalorder %s360, %s361
      %p370 = scmp.eq.s32.totalorder %s35, 0
      %p371 = por %p369, %p370
      %p372 = scmp.ne.s32.totalorder %s360, %s361
      %p373 = scmp.eq.s32.totalorder %s36, 1
      %p374 = por %p372, %p373
      %p376 = scmp.ne.s32.totalorder %s361, %s375
      %p377 = scmp.eq.s32.totalorder %s36, 0
      %p378 = por %p376, %p377
      %s380 = sadd.s32 %s379, 1
      %p383 = scmp.eq.s32.totalorder %s30, 1
      %p384 = scmp.ne.s32.totalorder %s379, %s381
      %p385 = scmp.eq.s32.totalorder %s30, 0
      %p386 = por %p384, %p385
      %p387 = scmp.ne.s32.totalorder %s379, %s381
      %p388 = scmp.eq.s32.totalorder %s35, 1
      %p389 = por %p387, %p388
      %p390 = scmp.ne.s32.totalorder %s381, %s382
      %p391 = scmp.eq.s32.totalorder %s35, 0
      %p392 = por %p390, %p391
      %p393 = scmp.ne.s32.totalorder %s381, %s382
      %p394 = scmp.eq.s32.totalorder %s36, 1
      %p395 = por %p393, %p394
      %p397 = scmp.ne.s32.totalorder %s382, %s396
      %p398 = scmp.eq.s32.totalorder %s36, 0
      %p399 = por %p397, %p398
      %s401 = sadd.s32 %s400, 1
      %p404 = scmp.eq.s32.totalorder %s30, 1
      %p405 = scmp.ne.s32.totalorder %s400, %s402
      %p406 = scmp.eq.s32.totalorder %s30, 0
      %p407 = por %p405, %p406
      %p408 = scmp.ne.s32.totalorder %s400, %s402
      %p409 = scmp.eq.s32.totalorder %s35, 1
      %p410 = por %p408, %p409
      %p411 = scmp.ne.s32.totalorder %s402, %s403
      %p412 = scmp.eq.s32.totalorder %s35, 0
      %p413 = por %p411, %p412
      %p414 = scmp.ne.s32.totalorder %s402, %s403
      %p415 = scmp.eq.s32.totalorder %s36, 1
      %p416 = por %p414, %p415
      %p418 = scmp.ne.s32.totalorder %s403, %s417
      %p419 = scmp.eq.s32.totalorder %s36, 0
      %p420 = por %p418, %p419
      %s422 = sadd.s32 %s421, 1
      %p425 = scmp.eq.s32.totalorder %s30, 1
      %p426 = scmp.ne.s32.totalorder %s421, %s423
      %p427 = scmp.eq.s32.totalorder %s30, 0
      %p428 = por %p426, %p427
      %p429 = scmp.ne.s32.totalorder %s421, %s423
      %p430 = scmp.eq.s32.totalorder %s35, 1
      %p431 = por %p429, %p430
      %p432 = scmp.ne.s32.totalorder %s423, %s424
      %p433 = scmp.eq.s32.totalorder %s35, 0
      %p434 = por %p432, %p433
      %p435 = scmp.ne.s32.totalorder %s423, %s424
      %p436 = scmp.eq.s32.totalorder %s36, 1
      %p437 = por %p435, %p436
      %p439 = scmp.ne.s32.totalorder %s424, %s438
      %p440 = scmp.eq.s32.totalorder %s36, 0
      %p441 = por %p439, %p440
      %s443 = sadd.s32 %s442, 1
      %p446 = scmp.eq.s32.totalorder %s30, 1
      %p447 = scmp.ne.s32.totalorder %s442, %s444
      %p448 = scmp.eq.s32.totalorder %s30, 0
      %p449 = por %p447, %p448
      %p450 = scmp.ne.s32.totalorder %s442, %s444
      %p451 = scmp.eq.s32.totalorder %s35, 1
      %p452 = por %p450, %p451
      %p453 = scmp.ne.s32.totalorder %s444, %s445
      %p454 = scmp.eq.s32.totalorder %s35, 0
      %p455 = por %p453, %p454
      %p456 = scmp.ne.s32.totalorder %s444, %s445
      %p457 = scmp.eq.s32.totalorder %s36, 1
      %p458 = por %p456, %p457
      %p460 = scmp.ne.s32.totalorder %s445, %s459
      %p461 = scmp.eq.s32.totalorder %s36, 0
      %p462 = por %p460, %p461
      %s464 = sadd.s32 %s463, 1
      %p467 = scmp.eq.s32.totalorder %s30, 1
      %p468 = scmp.ne.s32.totalorder %s463, %s465
      %p469 = scmp.eq.s32.totalorder %s30, 0
      %p470 = por %p468, %p469
      %p471 = scmp.ne.s32.totalorder %s463, %s465
      %p472 = scmp.eq.s32.totalorder %s35, 1
      %p473 = por %p471, %p472
      %p474 = scmp.ne.s32.totalorder %s465, %s466
      %p475 = scmp.eq.s32.totalorder %s35, 0
      %p476 = por %p474, %p475
      %p477 = scmp.ne.s32.totalorder %s465, %s466
      %p478 = scmp.eq.s32.totalorder %s36, 1
      %p479 = por %p477, %p478
      %p481 = scmp.ne.s32.totalorder %s466, %s480
      %p482 = scmp.eq.s32.totalorder %s36, 0
      %p483 = por %p481, %p482
      %s484 = ssub.s32 %s30, %s37
      %p485 = scmp.eq.s32.totalorder %s484, 0
      %s487 = sadd.s32 %s486, 1
      %s488 = scalar_select %p485, %s486, %s487
      %p491 = pneg %p485
      %p492 = scmp.eq.s32.totalorder %s30, 1
      %p493 = por %p491, %p492
      %p494 = scmp.ne.s32.totalorder %s486, %s489
      %p495 = scmp.eq.s32.totalorder %s30, 0
      %p496 = por %p494, %p495
      %p497 = scmp.ne.s32.totalorder %s486, %s489
      %p498 = scmp.eq.s32.totalorder %s35, 1
      %p499 = por %p497, %p498
      %p500 = scmp.ne.s32.totalorder %s489, %s490
      %p501 = scmp.eq.s32.totalorder %s35, 0
      %p502 = por %p500, %p501
      %p503 = scmp.ne.s32.totalorder %s489, %s490
      %p504 = scmp.eq.s32.totalorder %s36, 1
      %p505 = por %p503, %p504
      %p507 = scmp.ne.s32.totalorder %s490, %s506
      %p508 = scmp.eq.s32.totalorder %s36, 0
      %p509 = por %p507, %p508
      %p510 = scmp.le.s32.totalorder 1, %s30
      %p511 = scmp.lt.s32.totalorder %s30, 3
      %p512 = pnand %p510, %p511
      %p513 = pneg %p512
      // Predicated region
      $region9: #{tpu_custom_call.1} parent=5 // pred_check
        _
      $region10: #{tpu_custom_call.1} parent=5 // pred_check_branch
        %515 = sbr.rel (%p512) target = $region12
      $region11: #{tpu_custom_call.1} parent=5 // pred_region
        %s516 = ssub.s32 %s30, 1
        // Predicated region
        $region13: #{tpu_custom_call.1} parent=11 // pred_check
          %p517 = pneg %p77
        $region14: #{tpu_custom_call.1} parent=11 // pred_check_branch
          %519 = sbr.rel (%p517) target = $region16
        $region15: #{tpu_custom_call.1} parent=11 // pred_region
          _
        $region16: #{tpu_custom_call.1} parent=11 // pred_fallthru
          _
        // Predicated region
        $region17: #{tpu_custom_call.1} parent=11 // pred_check
          %p520 = pneg %p98
        $region18: #{tpu_custom_call.1} parent=11 // pred_check_branch
          %522 = sbr.rel (%p520) target = $region20
        $region19: #{tpu_custom_call.1} parent=11 // pred_region
          _
        $region20: #{tpu_custom_call.1} parent=11 // pred_fallthru
          _
        // Predicated region
        $region21: #{tpu_custom_call.1} parent=11 // pred_check
          %p523 = pneg %p119
        $region22: #{tpu_custom_call.1} parent=11 // pred_check_branch
          %525 = sbr.rel (%p523) target = $region24
        $region23: #{tpu_custom_call.1} parent=11 // pred_region
          _
        $region24: #{tpu_custom_call.1} parent=11 // pred_fallthru
          _
        // Predicated region
        $region25: #{tpu_custom_call.1} parent=11 // pred_check
          %p526 = pneg %p140
        $region26: #{tpu_custom_call.1} parent=11 // pred_check_branch
          %528 = sbr.rel (%p526) target = $region28
        $region27: #{tpu_custom_call.1} parent=11 // pred_region
          _
        $region28: #{tpu_custom_call.1} parent=11 // pred_fallthru
          _
        // Predicated region
        $region29: #{tpu_custom_call.1} parent=11 // pred_check
          %p529 = pneg %p161
        $region30: #{tpu_custom_call.1} parent=11 // pred_check_branch
          %531 = sbr.rel (%p529) target = $region32
        $region31: #{tpu_custom_call.1} parent=11 // pred_region
          _
        $region32: #{tpu_custom_call.1} parent=11 // pred_fallthru
          _
        // Predicated region
        $region33: #{tpu_custom_call.1} parent=11 // pred_check
          %p532 = pneg %p182
        $region34: #{tpu_custom_call.1} parent=11 // pred_check_branch
          %534 = sbr.rel (%p532) target = $region36
        $region35: #{tpu_custom_call.1} parent=11 // pred_region
          _
        $region36: #{tpu_custom_call.1} parent=11 // pred_fallthru
          _
        // Predicated region
        $region37: #{tpu_custom_call.1} parent=11 // pred_check
          %p535 = pneg %p203
        $region38: #{tpu_custom_call.1} parent=11 // pred_check_branch
          %537 = sbr.rel (%p535) target = $region40
        $region39: #{tpu_custom_call.1} parent=11 // pred_region
          _
        $region40: #{tpu_custom_call.1} parent=11 // pred_fallthru
          _
        // Predicated region
        $region41: #{tpu_custom_call.1} parent=11 // pred_check
          %p538 = pneg %p224
        $region42: #{tpu_custom_call.1} parent=11 // pred_check_branch
          %540 = sbr.rel (%p538) target = $region44
        $region43: #{tpu_custom_call.1} parent=11 // pred_region
          _
        $region44: #{tpu_custom_call.1} parent=11 // pred_fallthru
          _
        // Predicated region
        $region45: #{tpu_custom_call.1} parent=11 // pred_check
          %p541 = pneg %p245
        $region46: #{tpu_custom_call.1} parent=11 // pred_check_branch
          %543 = sbr.rel (%p541) target = $region48
        $region47: #{tpu_custom_call.1} parent=11 // pred_region
          _
        $region48: #{tpu_custom_call.1} parent=11 // pred_fallthru
          _
        // Predicated region
        $region49: #{tpu_custom_call.1} parent=11 // pred_check
          %p544 = pneg %p266
        $region50: #{tpu_custom_call.1} parent=11 // pred_check_branch
          %546 = sbr.rel (%p544) target = $region52
        $region51: #{tpu_custom_call.1} parent=11 // pred_region
          _
        $region52: #{tpu_custom_call.1} parent=11 // pred_fallthru
          _
        // Predicated region
        $region53: #{tpu_custom_call.1} parent=11 // pred_check
          %p547 = pneg %p287
        $region54: #{tpu_custom_call.1} parent=11 // pred_check_branch
          %549 = sbr.rel (%p547) target = $region56
        $region55: #{tpu_custom_call.1} parent=11 // pred_region
          _
        $region56: #{tpu_custom_call.1} parent=11 // pred_fallthru
          _
        // Predicated region
        $region57: #{tpu_custom_call.1} parent=11 // pred_check
          %p550 = pneg %p308
        $region58: #{tpu_custom_call.1} parent=11 // pred_check_branch
          %552 = sbr.rel (%p550) target = $region60
        $region59: #{tpu_custom_call.1} parent=11 // pred_region
          _
        $region60: #{tpu_custom_call.1} parent=11 // pred_fallthru
          _
        // Predicated region
        $region61: #{tpu_custom_call.1} parent=11 // pred_check
          %p553 = pneg %p329
        $region62: #{tpu_custom_call.1} parent=11 // pred_check_branch
          %555 = sbr.rel (%p553) target = $region64
        $region63: #{tpu_custom_call.1} parent=11 // pred_region
          _
        $region64: #{tpu_custom_call.1} parent=11 // pred_fallthru
          _
        // Predicated region
        $region65: #{tpu_custom_call.1} parent=11 // pred_check
          %p556 = pneg %p350
        $region66: #{tpu_custom_call.1} parent=11 // pred_check_branch
          %558 = sbr.rel (%p556) target = $region68
        $region67: #{tpu_custom_call.1} parent=11 // pred_region
          _
        $region68: #{tpu_custom_call.1} parent=11 // pred_fallthru
          _
        // Predicated region
        $region69: #{tpu_custom_call.1} parent=11 // pred_check
          %p559 = pneg %p371
        $region70: #{tpu_custom_call.1} parent=11 // pred_check_branch
          %561 = sbr.rel (%p559) target = $region72
        $region71: #{tpu_custom_call.1} parent=11 // pred_region
          _
        $region72: #{tpu_custom_call.1} parent=11 // pred_fallthru
          _
        // Predicated region
        $region73: #{tpu_custom_call.1} parent=11 // pred_check
          %p562 = pneg %p392
        $region74: #{tpu_custom_call.1} parent=11 // pred_check_branch
          %564 = sbr.rel (%p562) target = $region76
        $region75: #{tpu_custom_call.1} parent=11 // pred_region
          _
        $region76: #{tpu_custom_call.1} parent=11 // pred_fallthru
          _
        // Predicated region
        $region77: #{tpu_custom_call.1} parent=11 // pred_check
          %p565 = pneg %p413
        $region78: #{tpu_custom_call.1} parent=11 // pred_check_branch
          %567 = sbr.rel (%p565) target = $region80
        $region79: #{tpu_custom_call.1} parent=11 // pred_region
          _
        $region80: #{tpu_custom_call.1} parent=11 // pred_fallthru
          _
        // Predicated region
        $region81: #{tpu_custom_call.1} parent=11 // pred_check
          %p568 = pneg %p434
        $region82: #{tpu_custom_call.1} parent=11 // pred_check_branch
          %570 = sbr.rel (%p568) target = $region84
        $region83: #{tpu_custom_call.1} parent=11 // pred_region
          _
        $region84: #{tpu_custom_call.1} parent=11 // pred_fallthru
          _
        // Predicated region
        $region85: #{tpu_custom_call.1} parent=11 // pred_check
          %p571 = pneg %p455
        $region86: #{tpu_custom_call.1} parent=11 // pred_check_branch
          %573 = sbr.rel (%p571) target = $region88
        $region87: #{tpu_custom_call.1} parent=11 // pred_region
          _
        $region88: #{tpu_custom_call.1} parent=11 // pred_fallthru
          _
        // Predicated region
        $region89: #{tpu_custom_call.1} parent=11 // pred_check
          %p574 = pneg %p476
        $region90: #{tpu_custom_call.1} parent=11 // pred_check_branch
          %576 = sbr.rel (%p574) target = $region92
        $region91: #{tpu_custom_call.1} parent=11 // pred_region
          _
        $region92: #{tpu_custom_call.1} parent=11 // pred_fallthru
          _
      $region12: #{tpu_custom_call.1} parent=5 // pred_fallthru
        _
      %p577 = scmp.lt.s32.totalorder %s30, 2
      // Predicated region
      $region93: #{tpu_custom_call.1} parent=5 // pred_check
        %p578 = pneg %p577
      $region94: #{tpu_custom_call.1} parent=5 // pred_check_branch
        %580 = sbr.rel (%p578) target = $region96
      $region95: #{tpu_custom_call.1} parent=5 // pred_region
        // Predicated region
        $region97: #{tpu_custom_call.1} parent=95 // pred_check
          %p581 = pneg %p50
        $region98: #{tpu_custom_call.1} parent=95 // pred_check_branch
          %583 = sbr.rel (%p581) target = $region100
        $region99: #{tpu_custom_call.1} parent=95 // pred_region
          %p584 = scmp.lt.s32.totalorder %s30, 1
          %s585 = scalar_select %p584, %s30, 1
          %s586 = smul.addr %s585, 2
          %s587 = smul.addr %s586, 8
          %s588 = scalar_lea.vmem %s0, %s587
        $region100: #{tpu_custom_call.1} parent=95 // pred_fallthru
          _
      $region96: #{tpu_custom_call.1} parent=5 // pred_fallthru
        _
      %p589 = scmp.le.s32.totalorder 1, %s30
      %p590 = scmp.lt.s32.totalorder %s30, 3
      %p591 = pnand %p589, %p590
      %p592 = pneg %p591
      // Predicated region
      $region101: #{tpu_custom_call.1} parent=5 // pred_check
        _
      $region102: #{tpu_custom_call.1} parent=5 // pred_check_branch
        %594 = sbr.rel (%p591) target = $region104
      $region103: #{tpu_custom_call.1} parent=5 // pred_region
        %s595 = ssub.s32 %s30, 1
        %p596 = scmp.lt.s32.totalorder %s35, 1
        %s597 = scalar_select %p596, %s35, 1
        %s598 = smul.addr %s597, 2
        %s599 = smul.addr %s598, 8
        %s600 = scalar_lea.vmem %s0, %s599
        %p601 = pneg %p56
        %p602 = pneg %p53
        %p603 = pneg %p77
        %p604 = pneg %p74
        %p605 = pneg %p98
        %p606 = pneg %p95
        %p607 = pneg %p119
        %p608 = pneg %p116
        %p609 = pneg %p140
        %p610 = pneg %p137
        %p611 = pneg %p161
        %p612 = pneg %p158
        %p613 = pneg %p182
        %p614 = pneg %p179
        %p615 = pneg %p203
        %p616 = pneg %p200
        %p617 = pneg %p224
        %p618 = pneg %p221
        %p619 = pneg %p245
        %p620 = pneg %p242
        %p621 = pneg %p266
        %p622 = pneg %p263
        %p623 = pneg %p287
        %p624 = pneg %p284
        %p625 = pneg %p308
        %p626 = pneg %p305
        %p627 = pneg %p329
        %p628 = pneg %p326
        %p629 = pneg %p350
        %p630 = pneg %p347
        %p631 = pneg %p371
        %p632 = pneg %p368
        %p633 = pneg %p392
        %p634 = pneg %p389
        %p635 = pneg %p413
        %p636 = pneg %p410
        %p637 = pneg %p434
        %p638 = pneg %p431
        %p639 = pneg %p455
        %p640 = pneg %p452
        %p641 = pneg %p476
        %p642 = pneg %p473
        %p643 = pneg %p502
        %p644 = pneg %p499
        %s645 = sand.u32 %s489, 1
        %s646 = scalar_lea.sflag [#allocation3], %s645
        %s647 = sand.u32 %s489, 1
        %s648 = smul.addr %s647, 16
        %s649 = scalar_lea.vmem [#allocation2], %s648
        %p650 = scmp.lt.s32.totalorder %s35, 1
        %s651 = scalar_select %p650, %s35, 1
        %s652 = smul.addr %s651, 2
        %s653 = smul.addr %s652, 8
        %s654 = scalar_lea.vmem %s0, %s653
        %v656 = vld [vmem:[%s1] sm:$0x1]
        %v657 = vld [vmem:[%s2] sm:$0x1]
        %v658 = vld [vmem:[%s3] sm:$0xf]
        %v659 = vld [vmem:[%s3 + $0x4] sm:$0xf]
        %v660 = vld [vmem:[%s3 + $0x8] sm:$0xf]
        %v661 = vld [vmem:[%s3 + $0xc] sm:$0xf]
        %v662 = vld [vmem:[%s3 + $0x10] sm:$0xf]
        %v663 = vld [vmem:[%s3 + $0x14] sm:$0xf]
        %v664 = vld [vmem:[%s3 + $0x18] sm:$0xf]
        %v665 = vld [vmem:[%s3 + $0x1c] sm:$0xf]
        %v666 = vld [vmem:[%s3 + $0x20] sm:$0xf]
        %v667 = vld [vmem:[%s3 + $0x24] sm:$0xf]
        %v668 = vld [vmem:[%s3 + $0x28] sm:$0xf]
        %v669 = vld [vmem:[%s3 + $0x2c] sm:$0xf]
        %v670 = vld [vmem:[%s3 + $0x30] sm:$0xf]
        %v671 = vld [vmem:[%s3 + $0x34] sm:$0xf]
        %v672 = vld [vmem:[%s3 + $0x38] sm:$0xf]
        %v673 = vld [vmem:[%s3 + $0x3c] sm:$0xf]
        %v674 = vld [vmem:[%s3 + $0x40] sm:$0xf]
        %v675 = vld [vmem:[%s3 + $0x44] sm:$0xf]
        %v676 = vld [vmem:[%s3 + $0x48] sm:$0xf]
        %v677 = vld [vmem:[%s3 + $0x4c] sm:$0xf]
        %v678 = vld [vmem:[%s3 + $0x50] sm:$0xf]
        %v679 = vld [vmem:[%s3 + $0x54] sm:$0xf]
        %v680 = vld [vmem:[%s3 + $0x58] sm:$0xf]
        %v681 = vld [vmem:[%s3 + $0x5c] sm:$0xf]
        %v682 = vld [vmem:[%s3 + $0x60] sm:$0xf]
        %v683 = vld [vmem:[%s3 + $0x64] sm:$0xf]
        %v684 = vld [vmem:[%s3 + $0x68] sm:$0xf]
        %v685 = vld [vmem:[%s3 + $0x6c] sm:$0xf]
        %v686 = vld [vmem:[%s3 + $0x70] sm:$0xf]
        %v687 = vld [vmem:[%s3 + $0x74] sm:$0xf]
        %v688 = vld [vmem:[%s3 + $0x78] sm:$0xf]
        %v689 = vld [vmem:[%s3 + $0x7c] sm:$0xf]
        %v690 = vld [vmem:[%s3 + $0x80] sm:$0xf]
        %v691 = vld [vmem:[%s3 + $0x84] sm:$0xf]
        %v692 = vld [vmem:[%s3 + $0x88] sm:$0xf]
        %v693 = vld [vmem:[%s3 + $0x8c] sm:$0xf]
        %v694 = vld [vmem:[%s3 + $0x90] sm:$0xf]
        %v695 = vld [vmem:[%s3 + $0x94] sm:$0xf]
        %v696 = vld [vmem:[%s3 + $0x98] sm:$0xf]
        %v697 = vld [vmem:[%s3 + $0x9c] sm:$0xf]
        %v698 = vld [vmem:[%s3 + $0xa0] sm:$0xf]
        %v699 = vld [vmem:[%s3 + $0xa4] sm:$0xf]
        %v700 = vld [vmem:[%s3 + $0xa8] sm:$0xf]
        %v701 = vld [vmem:[%s3 + $0xac] sm:$0xf]
        %v702 = vld [vmem:[%s3 + $0xb0] sm:$0xf]
        %v703 = vld [vmem:[%s3 + $0xb4] sm:$0xf]
        %v704 = vld [vmem:[%s3 + $0xb8] sm:$0xf]
        %v705 = vld [vmem:[%s3 + $0xbc] sm:$0xf]
        %v706 = vld [vmem:[%s3 + $0xc0] sm:$0xf]
        %v707 = vld [vmem:[%s3 + $0xc4] sm:$0xf]
        %v708 = vld [vmem:[%s3 + $0xc8] sm:$0xf]
        %v709 = vld [vmem:[%s3 + $0xcc] sm:$0xf]
        %v710 = vld [vmem:[%s3 + $0xd0] sm:$0xf]
        %v711 = vld [vmem:[%s3 + $0xd4] sm:$0xf]
        %v712 = vld [vmem:[%s3 + $0xd8] sm:$0xf]
        %v713 = vld [vmem:[%s3 + $0xdc] sm:$0xf]
        %v714 = vld [vmem:[%s3 + $0xe0] sm:$0xf]
        %v715 = vld [vmem:[%s3 + $0xe4] sm:$0xf]
        %v716 = vld [vmem:[%s3 + $0xe8] sm:$0xf]
        %v717 = vld [vmem:[%s3 + $0xec] sm:$0xf]
        %v718 = vld [vmem:[%s3 + $0xf0] sm:$0xf]
        %v719 = vld [vmem:[%s3 + $0xf4] sm:$0xf]
        %v720 = vld [vmem:[%s3 + $0xf8] sm:$0xf]
        %v721 = vld [vmem:[%s3 + $0xfc] sm:$0xf]
        %v722 = vld [vmem:[%s4] sm:$0xf]
        %v723 = vld [vmem:[%s4 + $0x4] sm:$0xf]
        %v724 = vld [vmem:[%s4 + $0x8] sm:$0xf]
        %v725 = vld [vmem:[%s4 + $0xc] sm:$0xf]
        %v726 = vld [vmem:[%s4 + $0x10] sm:$0xf]
        %v727 = vld [vmem:[%s4 + $0x14] sm:$0xf]
        %v728 = vld [vmem:[%s4 + $0x18] sm:$0xf]
        %v729 = vld [vmem:[%s4 + $0x1c] sm:$0xf]
        %v730 = vld [vmem:[%s4 + $0x20] sm:$0xf]
        %v731 = vld [vmem:[%s4 + $0x24] sm:$0xf]
        %v732 = vld [vmem:[%s4 + $0x28] sm:$0xf]
        %v733 = vld [vmem:[%s4 + $0x2c] sm:$0xf]
        %v734 = vld [vmem:[%s4 + $0x30] sm:$0xf]
        %v735 = vld [vmem:[%s4 + $0x34] sm:$0xf]
        %v736 = vld [vmem:[%s4 + $0x38] sm:$0xf]
        %v737 = vld [vmem:[%s4 + $0x3c] sm:$0xf]
        %v738 = vld [vmem:[%s4 + $0x40] sm:$0xf]
        %v739 = vld [vmem:[%s4 + $0x44] sm:$0xf]
        %v740 = vld [vmem:[%s4 + $0x48] sm:$0xf]
        %v741 = vld [vmem:[%s4 + $0x4c] sm:$0xf]
        %v742 = vld [vmem:[%s4 + $0x50] sm:$0xf]
        %v743 = vld [vmem:[%s4 + $0x54] sm:$0xf]
        %v744 = vld [vmem:[%s4 + $0x58] sm:$0xf]
        %v745 = vld [vmem:[%s4 + $0x5c] sm:$0xf]
        %v746 = vld [vmem:[%s4 + $0x60] sm:$0xf]
        %v747 = vld [vmem:[%s4 + $0x64] sm:$0xf]
        %v748 = vld [vmem:[%s4 + $0x68] sm:$0xf]
        %v749 = vld [vmem:[%s4 + $0x6c] sm:$0xf]
        %v750 = vld [vmem:[%s4 + $0x70] sm:$0xf]
        %v751 = vld [vmem:[%s4 + $0x74] sm:$0xf]
        %v752 = vld [vmem:[%s4 + $0x78] sm:$0xf]
        %v753 = vld [vmem:[%s4 + $0x7c] sm:$0xf]
        %v754 = vld [vmem:[%s4 + $0x80] sm:$0xf]
        %v755 = vld [vmem:[%s4 + $0x84] sm:$0xf]
        %v756 = vld [vmem:[%s4 + $0x88] sm:$0xf]
        %v757 = vld [vmem:[%s4 + $0x8c] sm:$0xf]
        %v758 = vld [vmem:[%s4 + $0x90] sm:$0xf]
        %v759 = vld [vmem:[%s4 + $0x94] sm:$0xf]
        %v760 = vld [vmem:[%s4 + $0x98] sm:$0xf]
        %v761 = vld [vmem:[%s4 + $0x9c] sm:$0xf]
        %v762 = vld [vmem:[%s4 + $0xa0] sm:$0xf]
        %v763 = vld [vmem:[%s4 + $0xa4] sm:$0xf]
        %v764 = vld [vmem:[%s4 + $0xa8] sm:$0xf]
        %v765 = vld [vmem:[%s4 + $0xac] sm:$0xf]
        %v766 = vld [vmem:[%s4 + $0xb0] sm:$0xf]
        %v767 = vld [vmem:[%s4 + $0xb4] sm:$0xf]
        %v768 = vld [vmem:[%s4 + $0xb8] sm:$0xf]
        %v769 = vld [vmem:[%s4 + $0xbc] sm:$0xf]
        %v770 = vld [vmem:[%s4 + $0xc0] sm:$0xf]
        %v771 = vld [vmem:[%s4 + $0xc4] sm:$0xf]
        %v772 = vld [vmem:[%s4 + $0xc8] sm:$0xf]
        %v773 = vld [vmem:[%s4 + $0xcc] sm:$0xf]
        %v774 = vld [vmem:[%s4 + $0xd0] sm:$0xf]
        %v775 = vld [vmem:[%s4 + $0xd4] sm:$0xf]
        %v776 = vld [vmem:[%s4 + $0xd8] sm:$0xf]
        %v777 = vld [vmem:[%s4 + $0xdc] sm:$0xf]
        %v778 = vld [vmem:[%s4 + $0xe0] sm:$0xf]
        %v779 = vld [vmem:[%s4 + $0xe4] sm:$0xf]
        %v780 = vld [vmem:[%s4 + $0xe8] sm:$0xf]
        %v781 = vld [vmem:[%s4 + $0xec] sm:$0xf]
        %v782 = vld [vmem:[%s4 + $0xf0] sm:$0xf]
        %v783 = vld [vmem:[%s4 + $0xf4] sm:$0xf]
        %v784 = vld [vmem:[%s4 + $0xf8] sm:$0xf]
        %v785 = vld [vmem:[%s4 + $0xfc] sm:$0xf]
        %v786 = vld [vmem:[%s5] sm:$0xf]
        %v787 = vld [vmem:[%s5 + $0x4] sm:$0xf]
        %v788 = vld [vmem:[%s5 + $0x8] sm:$0xf]
        %v789 = vld [vmem:[%s5 + $0xc] sm:$0xf]
        %v790 = vld [vmem:[%s5 + $0x10] sm:$0xf]
        %v791 = vld [vmem:[%s5 + $0x14] sm:$0xf]
        %v792 = vld [vmem:[%s5 + $0x18] sm:$0xf]
        %v793 = vld [vmem:[%s5 + $0x1c] sm:$0xf]
        %v794 = vld [vmem:[%s5 + $0x20] sm:$0xf]
        %v795 = vld [vmem:[%s5 + $0x24] sm:$0xf]
        %v796 = vld [vmem:[%s5 + $0x28] sm:$0xf]
        %v797 = vld [vmem:[%s5 + $0x2c] sm:$0xf]
        %v798 = vld [vmem:[%s5 + $0x30] sm:$0xf]
        %v799 = vld [vmem:[%s5 + $0x34] sm:$0xf]
        %v800 = vld [vmem:[%s5 + $0x38] sm:$0xf]
        %v801 = vld [vmem:[%s5 + $0x3c] sm:$0xf]
        %v802 = vld [vmem:[%s5 + $0x40] sm:$0xf]
        %v803 = vld [vmem:[%s5 + $0x44] sm:$0xf]
        %v804 = vld [vmem:[%s5 + $0x48] sm:$0xf]
        %v805 = vld [vmem:[%s5 + $0x4c] sm:$0xf]
        %v806 = vld [vmem:[%s5 + $0x50] sm:$0xf]
        %v807 = vld [vmem:[%s5 + $0x54] sm:$0xf]
        %v808 = vld [vmem:[%s5 + $0x58] sm:$0xf]
        %v809 = vld [vmem:[%s5 + $0x5c] sm:$0xf]
        %v810 = vld [vmem:[%s5 + $0x60] sm:$0xf]
        %v811 = vld [vmem:[%s5 + $0x64] sm:$0xf]
        %v812 = vld [vmem:[%s5 + $0x68] sm:$0xf]
        %v813 = vld [vmem:[%s5 + $0x6c] sm:$0xf]
        %v814 = vld [vmem:[%s5 + $0x70] sm:$0xf]
        %v815 = vld [vmem:[%s5 + $0x74] sm:$0xf]
        %v816 = vld [vmem:[%s5 + $0x78] sm:$0xf]
        %v817 = vld [vmem:[%s5 + $0x7c] sm:$0xf]
        %v818 = vld [vmem:[%s5 + $0x80] sm:$0xf]
        %v819 = vld [vmem:[%s5 + $0x84] sm:$0xf]
        %v820 = vld [vmem:[%s5 + $0x88] sm:$0xf]
        %v821 = vld [vmem:[%s5 + $0x8c] sm:$0xf]
        %v822 = vld [vmem:[%s5 + $0x90] sm:$0xf]
        %v823 = vld [vmem:[%s5 + $0x94] sm:$0xf]
        %v824 = vld [vmem:[%s5 + $0x98] sm:$0xf]
        %v825 = vld [vmem:[%s5 + $0x9c] sm:$0xf]
        %v826 = vld [vmem:[%s5 + $0xa0] sm:$0xf]
        %v827 = vld [vmem:[%s5 + $0xa4] sm:$0xf]
        %v828 = vld [vmem:[%s5 + $0xa8] sm:$0xf]
        %v829 = vld [vmem:[%s5 + $0xac] sm:$0xf]
        %v830 = vld [vmem:[%s5 + $0xb0] sm:$0xf]
        %v831 = vld [vmem:[%s5 + $0xb4] sm:$0xf]
        %v832 = vld [vmem:[%s5 + $0xb8] sm:$0xf]
        %v833 = vld [vmem:[%s5 + $0xbc] sm:$0xf]
        %v834 = vld [vmem:[%s5 + $0xc0] sm:$0xf]
        %v835 = vld [vmem:[%s5 + $0xc4] sm:$0xf]
        %v836 = vld [vmem:[%s5 + $0xc8] sm:$0xf]
        %v837 = vld [vmem:[%s5 + $0xcc] sm:$0xf]
        %v838 = vld [vmem:[%s5 + $0xd0] sm:$0xf]
        %v839 = vld [vmem:[%s5 + $0xd4] sm:$0xf]
        %v840 = vld [vmem:[%s5 + $0xd8] sm:$0xf]
        %v841 = vld [vmem:[%s5 + $0xdc] sm:$0xf]
        %v842 = vld [vmem:[%s5 + $0xe0] sm:$0xf]
        %v843 = vld [vmem:[%s5 + $0xe4] sm:$0xf]
        %v844 = vld [vmem:[%s5 + $0xe8] sm:$0xf]
        %v845 = vld [vmem:[%s5 + $0xec] sm:$0xf]
        %v846 = vld [vmem:[%s5 + $0xf0] sm:$0xf]
        %v847 = vld [vmem:[%s5 + $0xf4] sm:$0xf]
        %v848 = vld [vmem:[%s5 + $0xf8] sm:$0xf]
        %v849 = vld [vmem:[%s5 + $0xfc] sm:$0xf]
        %v850 = vld [vmem:[%s6] sm:$0xf]
        %v851 = vld [vmem:[%s6 + $0x4] sm:$0xf]
        %v852 = vld [vmem:[%s6 + $0x8] sm:$0xf]
        %v853 = vld [vmem:[%s6 + $0xc] sm:$0xf]
        %v854 = vld [vmem:[%s6 + $0x10] sm:$0xf]
        %v855 = vld [vmem:[%s6 + $0x14] sm:$0xf]
        %v856 = vld [vmem:[%s6 + $0x18] sm:$0xf]
        %v857 = vld [vmem:[%s6 + $0x1c] sm:$0xf]
        %v858 = vld [vmem:[%s6 + $0x20] sm:$0xf]
        %v859 = vld [vmem:[%s6 + $0x24] sm:$0xf]
        %v860 = vld [vmem:[%s6 + $0x28] sm:$0xf]
        %v861 = vld [vmem:[%s6 + $0x2c] sm:$0xf]
        %v862 = vld [vmem:[%s6 + $0x30] sm:$0xf]
        %v863 = vld [vmem:[%s6 + $0x34] sm:$0xf]
        %v864 = vld [vmem:[%s6 + $0x38] sm:$0xf]
        %v865 = vld [vmem:[%s6 + $0x3c] sm:$0xf]
        %v866 = vld [vmem:[%s7] sm:$0x1]
        %v867 = vld [vmem:[%s8] sm:$0x1]
        %v868 = vld [vmem:[%s9] sm:$0x1]
        %v869 = vld [vmem:[%s10] sm:$0xf]
        %v870 = vld [vmem:[%s10 + $0x4] sm:$0xf]
        %v871 = vld [vmem:[%s10 + $0x8] sm:$0xf]
        %v872 = vld [vmem:[%s10 + $0xc] sm:$0xf]
        %v873 = vld [vmem:[%s10 + $0x10] sm:$0xf]
        %v874 = vld [vmem:[%s10 + $0x14] sm:$0xf]
        %v875 = vld [vmem:[%s10 + $0x18] sm:$0xf]
        %v876 = vld [vmem:[%s10 + $0x1c] sm:$0xf]
        %v877 = vld [vmem:[%s10 + $0x20] sm:$0xf]
        %v878 = vld [vmem:[%s10 + $0x24] sm:$0xf]
        %v879 = vld [vmem:[%s10 + $0x28] sm:$0xf]
        %v880 = vld [vmem:[%s10 + $0x2c] sm:$0xf]
        %v881 = vld [vmem:[%s10 + $0x30] sm:$0xf]
        %v882 = vld [vmem:[%s10 + $0x34] sm:$0xf]
        %v883 = vld [vmem:[%s10 + $0x38] sm:$0xf]
        %v884 = vld [vmem:[%s10 + $0x3c] sm:$0xf]
        %v885 = vld [vmem:[%s10 + $0x40] sm:$0xf]
        %v886 = vld [vmem:[%s10 + $0x44] sm:$0xf]
        %v887 = vld [vmem:[%s10 + $0x48] sm:$0xf]
        %v888 = vld [vmem:[%s10 + $0x4c] sm:$0xf]
        %v889 = vld [vmem:[%s10 + $0x50] sm:$0xf]
        %v890 = vld [vmem:[%s10 + $0x54] sm:$0xf]
        %v891 = vld [vmem:[%s10 + $0x58] sm:$0xf]
        %v892 = vld [vmem:[%s10 + $0x5c] sm:$0xf]
        %v893 = vld [vmem:[%s10 + $0x60] sm:$0xf]
        %v894 = vld [vmem:[%s10 + $0x64] sm:$0xf]
        %v895 = vld [vmem:[%s10 + $0x68] sm:$0xf]
        %v896 = vld [vmem:[%s10 + $0x6c] sm:$0xf]
        %v897 = vld [vmem:[%s10 + $0x70] sm:$0xf]
        %v898 = vld [vmem:[%s10 + $0x74] sm:$0xf]
        %v899 = vld [vmem:[%s10 + $0x78] sm:$0xf]
        %v900 = vld [vmem:[%s10 + $0x7c] sm:$0xf]
        %v901 = vld [vmem:[%s10 + $0x80] sm:$0xf]
        %v902 = vld [vmem:[%s10 + $0x84] sm:$0xf]
        %v903 = vld [vmem:[%s10 + $0x88] sm:$0xf]
        %v904 = vld [vmem:[%s10 + $0x8c] sm:$0xf]
        %v905 = vld [vmem:[%s10 + $0x90] sm:$0xf]
        %v906 = vld [vmem:[%s10 + $0x94] sm:$0xf]
        %v907 = vld [vmem:[%s10 + $0x98] sm:$0xf]
        %v908 = vld [vmem:[%s10 + $0x9c] sm:$0xf]
        %v909 = vld [vmem:[%s10 + $0xa0] sm:$0xf]
        %v910 = vld [vmem:[%s10 + $0xa4] sm:$0xf]
        %v911 = vld [vmem:[%s10 + $0xa8] sm:$0xf]
        %v912 = vld [vmem:[%s10 + $0xac] sm:$0xf]
        %v913 = vld [vmem:[%s10 + $0xb0] sm:$0xf]
        %v914 = vld [vmem:[%s10 + $0xb4] sm:$0xf]
        %v915 = vld [vmem:[%s10 + $0xb8] sm:$0xf]
        %v916 = vld [vmem:[%s10 + $0xbc] sm:$0xf]
        %v917 = vld [vmem:[%s10 + $0xc0] sm:$0xf]
        %v918 = vld [vmem:[%s10 + $0xc4] sm:$0xf]
        %v919 = vld [vmem:[%s10 + $0xc8] sm:$0xf]
        %v920 = vld [vmem:[%s10 + $0xcc] sm:$0xf]
        %v921 = vld [vmem:[%s10 + $0xd0] sm:$0xf]
        %v922 = vld [vmem:[%s10 + $0xd4] sm:$0xf]
        %v923 = vld [vmem:[%s10 + $0xd8] sm:$0xf]
        %v924 = vld [vmem:[%s10 + $0xdc] sm:$0xf]
        %v925 = vld [vmem:[%s10 + $0xe0] sm:$0xf]
        %v926 = vld [vmem:[%s10 + $0xe4] sm:$0xf]
        %v927 = vld [vmem:[%s10 + $0xe8] sm:$0xf]
        %v928 = vld [vmem:[%s10 + $0xec] sm:$0xf]
        %v929 = vld [vmem:[%s10 + $0xf0] sm:$0xf]
        %v930 = vld [vmem:[%s10 + $0xf4] sm:$0xf]
        %v931 = vld [vmem:[%s10 + $0xf8] sm:$0xf]
        %v932 = vld [vmem:[%s10 + $0xfc] sm:$0xf]
        %v933 = vld [vmem:[%s11] sm:$0xf]
        %v934 = vld [vmem:[%s11 + $0x4] sm:$0xf]
        %v935 = vld [vmem:[%s11 + $0x8] sm:$0xf]
        %v936 = vld [vmem:[%s11 + $0xc] sm:$0xf]
        %v937 = vld [vmem:[%s11 + $0x10] sm:$0xf]
        %v938 = vld [vmem:[%s11 + $0x14] sm:$0xf]
        %v939 = vld [vmem:[%s11 + $0x18] sm:$0xf]
        %v940 = vld [vmem:[%s11 + $0x1c] sm:$0xf]
        %v941 = vld [vmem:[%s11 + $0x20] sm:$0xf]
        %v942 = vld [vmem:[%s11 + $0x24] sm:$0xf]
        %v943 = vld [vmem:[%s11 + $0x28] sm:$0xf]
        %v944 = vld [vmem:[%s11 + $0x2c] sm:$0xf]
        %v945 = vld [vmem:[%s11 + $0x30] sm:$0xf]
        %v946 = vld [vmem:[%s11 + $0x34] sm:$0xf]
        %v947 = vld [vmem:[%s11 + $0x38] sm:$0xf]
        %v948 = vld [vmem:[%s11 + $0x3c] sm:$0xf]
        %v949 = vld [vmem:[%s11 + $0x40] sm:$0xf]
        %v950 = vld [vmem:[%s11 + $0x44] sm:$0xf]
        %v951 = vld [vmem:[%s11 + $0x48] sm:$0xf]
        %v952 = vld [vmem:[%s11 + $0x4c] sm:$0xf]
        %v953 = vld [vmem:[%s11 + $0x50] sm:$0xf]
        %v954 = vld [vmem:[%s11 + $0x54] sm:$0xf]
        %v955 = vld [vmem:[%s11 + $0x58] sm:$0xf]
        %v956 = vld [vmem:[%s11 + $0x5c] sm:$0xf]
        %v957 = vld [vmem:[%s11 + $0x60] sm:$0xf]
        %v958 = vld [vmem:[%s11 + $0x64] sm:$0xf]
        %v959 = vld [vmem:[%s11 + $0x68] sm:$0xf]
        %v960 = vld [vmem:[%s11 + $0x6c] sm:$0xf]
        %v961 = vld [vmem:[%s11 + $0x70] sm:$0xf]
        %v962 = vld [vmem:[%s11 + $0x74] sm:$0xf]
        %v963 = vld [vmem:[%s11 + $0x78] sm:$0xf]
        %v964 = vld [vmem:[%s11 + $0x7c] sm:$0xf]
        %v965 = vld [vmem:[%s11 + $0x80] sm:$0xf]
        %v966 = vld [vmem:[%s11 + $0x84] sm:$0xf]
        %v967 = vld [vmem:[%s11 + $0x88] sm:$0xf]
        %v968 = vld [vmem:[%s11 + $0x8c] sm:$0xf]
        %v969 = vld [vmem:[%s11 + $0x90] sm:$0xf]
        %v970 = vld [vmem:[%s11 + $0x94] sm:$0xf]
        %v971 = vld [vmem:[%s11 + $0x98] sm:$0xf]
        %v972 = vld [vmem:[%s11 + $0x9c] sm:$0xf]
        %v973 = vld [vmem:[%s11 + $0xa0] sm:$0xf]
        %v974 = vld [vmem:[%s11 + $0xa4] sm:$0xf]
        %v975 = vld [vmem:[%s11 + $0xa8] sm:$0xf]
        %v976 = vld [vmem:[%s11 + $0xac] sm:$0xf]
        %v977 = vld [vmem:[%s11 + $0xb0] sm:$0xf]
        %v978 = vld [vmem:[%s11 + $0xb4] sm:$0xf]
        %v979 = vld [vmem:[%s11 + $0xb8] sm:$0xf]
        %v980 = vld [vmem:[%s11 + $0xbc] sm:$0xf]
        %v981 = vld [vmem:[%s11 + $0xc0] sm:$0xf]
        %v982 = vld [vmem:[%s11 + $0xc4] sm:$0xf]
        %v983 = vld [vmem:[%s11 + $0xc8] sm:$0xf]
        %v984 = vld [vmem:[%s11 + $0xcc] sm:$0xf]
        %v985 = vld [vmem:[%s11 + $0xd0] sm:$0xf]
        %v986 = vld [vmem:[%s11 + $0xd4] sm:$0xf]
        %v987 = vld [vmem:[%s11 + $0xd8] sm:$0xf]
        %v988 = vld [vmem:[%s11 + $0xdc] sm:$0xf]
        %v989 = vld [vmem:[%s11 + $0xe0] sm:$0xf]
        %v990 = vld [vmem:[%s11 + $0xe4] sm:$0xf]
        %v991 = vld [vmem:[%s11 + $0xe8] sm:$0xf]
        %v992 = vld [vmem:[%s11 + $0xec] sm:$0xf]
        %v993 = vld [vmem:[%s11 + $0xf0] sm:$0xf]
        %v994 = vld [vmem:[%s11 + $0xf4] sm:$0xf]
        %v995 = vld [vmem:[%s11 + $0xf8] sm:$0xf]
        %v996 = vld [vmem:[%s11 + $0xfc] sm:$0xf]
        %v997 = vld [vmem:[%s12] sm:$0xf]
        %v998 = vld [vmem:[%s12 + $0x4] sm:$0xf]
        %v999 = vld [vmem:[%s12 + $0x8] sm:$0xf]
        %v1000 = vld [vmem:[%s12 + $0xc] sm:$0xf]
        %v1001 = vld [vmem:[%s12 + $0x10] sm:$0xf]
        %v1002 = vld [vmem:[%s12 + $0x14] sm:$0xf]
        %v1003 = vld [vmem:[%s12 + $0x18] sm:$0xf]
        %v1004 = vld [vmem:[%s12 + $0x1c] sm:$0xf]
        %v1005 = vld [vmem:[%s12 + $0x20] sm:$0xf]
        %v1006 = vld [vmem:[%s12 + $0x24] sm:$0xf]
        %v1007 = vld [vmem:[%s12 + $0x28] sm:$0xf]
        %v1008 = vld [vmem:[%s12 + $0x2c] sm:$0xf]
        %v1009 = vld [vmem:[%s12 + $0x30] sm:$0xf]
        %v1010 = vld [vmem:[%s12 + $0x34] sm:$0xf]
        %v1011 = vld [vmem:[%s12 + $0x38] sm:$0xf]
        %v1012 = vld [vmem:[%s12 + $0x3c] sm:$0xf]
        %v1013 = vld [vmem:[%s12 + $0x40] sm:$0xf]
        %v1014 = vld [vmem:[%s12 + $0x44] sm:$0xf]
        %v1015 = vld [vmem:[%s12 + $0x48] sm:$0xf]
        %v1016 = vld [vmem:[%s12 + $0x4c] sm:$0xf]
        %v1017 = vld [vmem:[%s12 + $0x50] sm:$0xf]
        %v1018 = vld [vmem:[%s12 + $0x54] sm:$0xf]
        %v1019 = vld [vmem:[%s12 + $0x58] sm:$0xf]
        %v1020 = vld [vmem:[%s12 + $0x5c] sm:$0xf]
        %v1021 = vld [vmem:[%s12 + $0x60] sm:$0xf]
        %v1022 = vld [vmem:[%s12 + $0x64] sm:$0xf]
        %v1023 = vld [vmem:[%s12 + $0x68] sm:$0xf]
        %v1024 = vld [vmem:[%s12 + $0x6c] sm:$0xf]
        %v1025 = vld [vmem:[%s12 + $0x70] sm:$0xf]
        %v1026 = vld [vmem:[%s12 + $0x74] sm:$0xf]
        %v1027 = vld [vmem:[%s12 + $0x78] sm:$0xf]
        %v1028 = vld [vmem:[%s12 + $0x7c] sm:$0xf]
        %v1029 = vld [vmem:[%s12 + $0x80] sm:$0xf]
        %v1030 = vld [vmem:[%s12 + $0x84] sm:$0xf]
        %v1031 = vld [vmem:[%s12 + $0x88] sm:$0xf]
        %v1032 = vld [vmem:[%s12 + $0x8c] sm:$0xf]
        %v1033 = vld [vmem:[%s12 + $0x90] sm:$0xf]
        %v1034 = vld [vmem:[%s12 + $0x94] sm:$0xf]
        %v1035 = vld [vmem:[%s12 + $0x98] sm:$0xf]
        %v1036 = vld [vmem:[%s12 + $0x9c] sm:$0xf]
        %v1037 = vld [vmem:[%s12 + $0xa0] sm:$0xf]
        %v1038 = vld [vmem:[%s12 + $0xa4] sm:$0xf]
        %v1039 = vld [vmem:[%s12 + $0xa8] sm:$0xf]
        %v1040 = vld [vmem:[%s12 + $0xac] sm:$0xf]
        %v1041 = vld [vmem:[%s12 + $0xb0] sm:$0xf]
        %v1042 = vld [vmem:[%s12 + $0xb4] sm:$0xf]
        %v1043 = vld [vmem:[%s12 + $0xb8] sm:$0xf]
        %v1044 = vld [vmem:[%s12 + $0xbc] sm:$0xf]
        %v1045 = vld [vmem:[%s12 + $0xc0] sm:$0xf]
        %v1046 = vld [vmem:[%s12 + $0xc4] sm:$0xf]
        %v1047 = vld [vmem:[%s12 + $0xc8] sm:$0xf]
        %v1048 = vld [vmem:[%s12 + $0xcc] sm:$0xf]
        %v1049 = vld [vmem:[%s12 + $0xd0] sm:$0xf]
        %v1050 = vld [vmem:[%s12 + $0xd4] sm:$0xf]
        %v1051 = vld [vmem:[%s12 + $0xd8] sm:$0xf]
        %v1052 = vld [vmem:[%s12 + $0xdc] sm:$0xf]
        %v1053 = vld [vmem:[%s12 + $0xe0] sm:$0xf]
        %v1054 = vld [vmem:[%s12 + $0xe4] sm:$0xf]
        %v1055 = vld [vmem:[%s12 + $0xe8] sm:$0xf]
        %v1056 = vld [vmem:[%s12 + $0xec] sm:$0xf]
        %v1057 = vld [vmem:[%s12 + $0xf0] sm:$0xf]
        %v1058 = vld [vmem:[%s12 + $0xf4] sm:$0xf]
        %v1059 = vld [vmem:[%s12 + $0xf8] sm:$0xf]
        %v1060 = vld [vmem:[%s12 + $0xfc] sm:$0xf]
        %v1061 = vld [vmem:[%s13] sm:$0xf]
        %v1062 = vld [vmem:[%s13 + $0x4] sm:$0xf]
        %v1063 = vld [vmem:[%s13 + $0x8] sm:$0xf]
        %v1064 = vld [vmem:[%s13 + $0xc] sm:$0xf]
        %v1065 = vld [vmem:[%s13 + $0x10] sm:$0xf]
        %v1066 = vld [vmem:[%s13 + $0x14] sm:$0xf]
        %v1067 = vld [vmem:[%s13 + $0x18] sm:$0xf]
        %v1068 = vld [vmem:[%s13 + $0x1c] sm:$0xf]
        %v1069 = vld [vmem:[%s13 + $0x20] sm:$0xf]
        %v1070 = vld [vmem:[%s13 + $0x24] sm:$0xf]
        %v1071 = vld [vmem:[%s13 + $0x28] sm:$0xf]
        %v1072 = vld [vmem:[%s13 + $0x2c] sm:$0xf]
        %v1073 = vld [vmem:[%s13 + $0x30] sm:$0xf]
        %v1074 = vld [vmem:[%s13 + $0x34] sm:$0xf]
        %v1075 = vld [vmem:[%s13 + $0x38] sm:$0xf]
        %v1076 = vld [vmem:[%s13 + $0x3c] sm:$0xf]
        %v1077 = vld [vmem:[%s14] sm:$0x1]
        %v1078 = vld [vmem:[%s15] sm:$0x1]
        %v1079 = vld [vmem:[%s16] sm:$0x1]
        %v1080 = vld [vmem:[%s17] sm:$0xff]
        %v1081 = vld [vmem:[%s17 + $0x8] sm:$0xff]
        %v1082 = vld [vmem:[%s17 + $0x10] sm:$0xff]
        %v1083 = vld [vmem:[%s17 + $0x18] sm:$0xff]
        %v1084 = vld [vmem:[%s17 + $0x20] sm:$0xff]
        %v1085 = vld [vmem:[%s17 + $0x28] sm:$0xff]
        %v1086 = vld [vmem:[%s17 + $0x30] sm:$0xff]
        %v1087 = vld [vmem:[%s17 + $0x38] sm:$0xff]
        %v1088 = vld [vmem:[%s17 + $0x40] sm:$0xff]
        %v1089 = vld [vmem:[%s17 + $0x48] sm:$0xff]
        %v1090 = vld [vmem:[%s17 + $0x50] sm:$0xff]
        %v1091 = vld [vmem:[%s17 + $0x58] sm:$0xff]
        %v1092 = vld [vmem:[%s17 + $0x60] sm:$0xff]
        %v1093 = vld [vmem:[%s17 + $0x68] sm:$0xff]
        %v1094 = vld [vmem:[%s17 + $0x70] sm:$0xff]
        %v1095 = vld [vmem:[%s17 + $0x78] sm:$0xff]
        %v1096 = vld [vmem:[%s17 + $0x80] sm:$0xff]
        %v1097 = vld [vmem:[%s17 + $0x88] sm:$0xff]
        %v1098 = vld [vmem:[%s17 + $0x90] sm:$0xff]
        %v1099 = vld [vmem:[%s17 + $0x98] sm:$0xff]
        %v1100 = vld [vmem:[%s17 + $0xa0] sm:$0xff]
        %v1101 = vld [vmem:[%s17 + $0xa8] sm:$0xff]
        %v1102 = vld [vmem:[%s17 + $0xb0] sm:$0xff]
        %v1103 = vld [vmem:[%s17 + $0xb8] sm:$0xff]
        %v1104 = vld [vmem:[%s17 + $0xc0] sm:$0xff]
        %v1105 = vld [vmem:[%s17 + $0xc8] sm:$0xff]
        %v1106 = vld [vmem:[%s17 + $0xd0] sm:$0xff]
        %v1107 = vld [vmem:[%s17 + $0xd8] sm:$0xff]
        %v1108 = vld [vmem:[%s17 + $0xe0] sm:$0xff]
        %v1109 = vld [vmem:[%s17 + $0xe8] sm:$0xff]
        %v1110 = vld [vmem:[%s17 + $0xf0] sm:$0xff]
        %v1111 = vld [vmem:[%s17 + $0xf8] sm:$0xff]
        %v1112 = vld [vmem:[%s18] sm:$0xf]
        %v1113 = vld [vmem:[%s19] sm:$0xf]
        %v1114 = vld [vmem:[%s19 + $0x4] sm:$0xf]
        %v1115 = vld [vmem:[%s19 + $0x8] sm:$0xf]
        %v1116 = vld [vmem:[%s19 + $0xc] sm:$0xf]
        %v1117 = vld [vmem:[%s19 + $0x10] sm:$0xf]
        %v1118 = vld [vmem:[%s19 + $0x14] sm:$0xf]
        %v1119 = vld [vmem:[%s19 + $0x18] sm:$0xf]
        %v1120 = vld [vmem:[%s19 + $0x1c] sm:$0xf]
        %v1121 = vld [vmem:[%s19 + $0x20] sm:$0xf]
        %v1122 = vld [vmem:[%s19 + $0x24] sm:$0xf]
        %v1123 = vld [vmem:[%s19 + $0x28] sm:$0xf]
        %v1124 = vld [vmem:[%s19 + $0x2c] sm:$0xf]
        %v1125 = vld [vmem:[%s19 + $0x30] sm:$0xf]
        %v1126 = vld [vmem:[%s19 + $0x34] sm:$0xf]
        %v1127 = vld [vmem:[%s19 + $0x38] sm:$0xf]
        %v1128 = vld [vmem:[%s19 + $0x3c] sm:$0xf]
        %v1129 = vld [vmem:[%s19 + $0x40] sm:$0xf]
        %v1130 = vld [vmem:[%s19 + $0x44] sm:$0xf]
        %v1131 = vld [vmem:[%s19 + $0x48] sm:$0xf]
        %v1132 = vld [vmem:[%s19 + $0x4c] sm:$0xf]
        %v1133 = vld [vmem:[%s19 + $0x50] sm:$0xf]
        %v1134 = vld [vmem:[%s19 + $0x54] sm:$0xf]
        %v1135 = vld [vmem:[%s19 + $0x58] sm:$0xf]
        %v1136 = vld [vmem:[%s19 + $0x5c] sm:$0xf]
        %v1137 = vld [vmem:[%s19 + $0x60] sm:$0xf]
        %v1138 = vld [vmem:[%s19 + $0x64] sm:$0xf]
        %v1139 = vld [vmem:[%s19 + $0x68] sm:$0xf]
        %v1140 = vld [vmem:[%s19 + $0x6c] sm:$0xf]
        %v1141 = vld [vmem:[%s19 + $0x70] sm:$0xf]
        %v1142 = vld [vmem:[%s19 + $0x74] sm:$0xf]
        %v1143 = vld [vmem:[%s19 + $0x78] sm:$0xf]
        %v1144 = vld [vmem:[%s19 + $0x7c] sm:$0xf]
        %v1145 = vld [vmem:[%s19 + $0x80] sm:$0xf]
        %v1146 = vld [vmem:[%s19 + $0x84] sm:$0xf]
        %v1147 = vld [vmem:[%s19 + $0x88] sm:$0xf]
        %v1148 = vld [vmem:[%s19 + $0x8c] sm:$0xf]
        %v1149 = vld [vmem:[%s19 + $0x90] sm:$0xf]
        %v1150 = vld [vmem:[%s19 + $0x94] sm:$0xf]
        %v1151 = vld [vmem:[%s19 + $0x98] sm:$0xf]
        %v1152 = vld [vmem:[%s19 + $0x9c] sm:$0xf]
        %v1153 = vld [vmem:[%s19 + $0xa0] sm:$0xf]
        %v1154 = vld [vmem:[%s19 + $0xa4] sm:$0xf]
        %v1155 = vld [vmem:[%s19 + $0xa8] sm:$0xf]
        %v1156 = vld [vmem:[%s19 + $0xac] sm:$0xf]
        %v1157 = vld [vmem:[%s19 + $0xb0] sm:$0xf]
        %v1158 = vld [vmem:[%s19 + $0xb4] sm:$0xf]
        %v1159 = vld [vmem:[%s19 + $0xb8] sm:$0xf]
        %v1160 = vld [vmem:[%s19 + $0xbc] sm:$0xf]
        %v1161 = vld [vmem:[%s19 + $0xc0] sm:$0xf]
        %v1162 = vld [vmem:[%s19 + $0xc4] sm:$0xf]
        %v1163 = vld [vmem:[%s19 + $0xc8] sm:$0xf]
        %v1164 = vld [vmem:[%s19 + $0xcc] sm:$0xf]
        %v1165 = vld [vmem:[%s19 + $0xd0] sm:$0xf]
        %v1166 = vld [vmem:[%s19 + $0xd4] sm:$0xf]
        %v1167 = vld [vmem:[%s19 + $0xd8] sm:$0xf]
        %v1168 = vld [vmem:[%s19 + $0xdc] sm:$0xf]
        %v1169 = vld [vmem:[%s19 + $0xe0] sm:$0xf]
        %v1170 = vld [vmem:[%s19 + $0xe4] sm:$0xf]
        %v1171 = vld [vmem:[%s19 + $0xe8] sm:$0xf]
        %v1172 = vld [vmem:[%s19 + $0xec] sm:$0xf]
        %v1173 = vld [vmem:[%s19 + $0xf0] sm:$0xf]
        %v1174 = vld [vmem:[%s19 + $0xf4] sm:$0xf]
        %v1175 = vld [vmem:[%s19 + $0xf8] sm:$0xf]
        %v1176 = vld [vmem:[%s19 + $0xfc] sm:$0xf]
        %v1177 = vld [vmem:[%s20] sm:$0x1]
        %v1178 = vld [vmem:[%s654] sm:$0xff]
        %v1179 = vld [vmem:[%s654 + $0x8] sm:$0xff]
        %1180 = vadd.xlane.f32.xlu0 %v1178
        %v1181 = vpop.xlane.xlu0 %1180
        %1182 = vadd.xlane.f32.xlu0 %v1179
        %v1183 = vpop.xlane.xlu0 %1182
        %v1184 = vrcp.pop 128.0
        %v1185 = vmul.f32 %v1181, %v1184
        %v1186 = vmul.f32 %v1183, %v1184
        %v1187 = vsub.f32 %v1178, %v1185
        %v1188 = vsub.f32 %v1179, %v1186
        %v1189 = vmul.f32 %v1187, %v1187
        %v1190 = vmul.f32 %v1188, %v1188
        %1191 = vadd.xlane.f32.xlu0 %v1189
        %v1192 = vpop.xlane.xlu0 %1191
        %1193 = vadd.xlane.f32.xlu0 %v1190
        %v1194 = vpop.xlane.xlu0 %1193
        %v1195 = vmul.f32 %v1192, %v1184
        %v1196 = vmul.f32 %v1194, %v1184
        %v1197 = vadd.f32 %v1195, 1e-05
        %v1198 = vadd.f32 %v1196, 1e-05
        %v1199 = vrsqrt.pop %v1197
        %v1200 = vrsqrt.pop %v1198
        %v1201 = vmul.f32 %v1187, %v1199
        %v1202 = vmul.f32 %v1188, %v1200
        %v1204 = vlaneseq
        %v1205 = vshrl.u32 %v1204, 7
        %v1206 = vsub.s32 0, %v1205
        %v1207 = vrot.slane %v656, %v1206
        %v1209 = vmul.f32 %v1201, %v1207
        %v1210 = vmul.f32 %v1202, %v1207
        %v1212 = vlaneseq
        %v1213 = vshrl.u32 %v1212, 7
        %v1214 = vsub.s32 0, %v1213
        %v1215 = vrot.slane %v657, %v1214
        %v1217 = vadd.f32 %v1209, %v1215
        %v1218 = vadd.f32 %v1210, %v1215
        %v1219 = vpack.c.bf16 %v1218, %v1217
        %v1236 = vunpack.c.l.b16 %v658
        %v1237 = vunpack.c.l.b16 %v659
        %v1238 = vunpack.c.l.b16 %v660
        %v1239 = vunpack.c.l.b16 %v661
        %v1240 = vunpack.c.l.b16 %v662
        %v1241 = vunpack.c.l.b16 %v663
        %v1242 = vunpack.c.l.b16 %v664
        %v1243 = vunpack.c.l.b16 %v665
        %v1244 = vunpack.c.l.b16 %v666
        %v1245 = vunpack.c.l.b16 %v667
        %v1246 = vunpack.c.l.b16 %v668
        %v1247 = vunpack.c.l.b16 %v669
        %v1248 = vunpack.c.l.b16 %v670
        %v1249 = vunpack.c.l.b16 %v671
        %v1250 = vunpack.c.l.b16 %v672
        %v1251 = vunpack.c.l.b16 %v673
        %v1252 = vpack.c.b16 %v1237, %v1236
        %v1253 = vpack.c.b16 %v1239, %v1238
        %v1254 = vpack.c.b16 %v1241, %v1240
        %v1255 = vpack.c.b16 %v1243, %v1242
        %v1256 = vpack.c.b16 %v1245, %v1244
        %v1257 = vpack.c.b16 %v1247, %v1246
        %v1258 = vpack.c.b16 %v1249, %v1248
        %v1259 = vpack.c.b16 %v1251, %v1250
        %1268 = vmatprep.subr.bf16.mxu0 0
        %1269 = vmatpush1.bf16.msra.mxu0 %v1252
        %1270 = vmatprep.subr.bf16.mxu0 0
        %1271 = vmatpush1.bf16.msra.mxu0 %v1253
        %1272 = vmatprep.subr.bf16.mxu0 0
        %1273 = vmatpush1.bf16.msra.mxu0 %v1254
        %1274 = vmatprep.subr.bf16.mxu0 0
        %1275 = vmatpush1.bf16.msra.mxu0 %v1255
        %1276 = vmatprep.subr.bf16.mxu0 0
        %1277 = vmatpush1.bf16.msra.mxu0 %v1256
        %1278 = vmatprep.subr.bf16.mxu0 0
        %1279 = vmatpush1.bf16.msra.mxu0 %v1257
        %1280 = vmatprep.subr.bf16.mxu0 0
        %1281 = vmatpush1.bf16.msra.mxu0 %v1258
        %1282 = vmatprep.subr.bf16.mxu0 0
        %1283 = vmatpush1.bf16.msra.mxu0 %v1259
        %1284 = vmatprep.subr.bf16.mxu0 0
        %1285 = vmatpush1.bf16.msra.mxu0 0
        %1286 = vmatprep.subr.bf16.mxu0 0
        %1287 = vmatpush1.bf16.msra.mxu0 0
        %1288 = vmatprep.subr.bf16.mxu0 0
        %1289 = vmatpush1.bf16.msra.mxu0 0
        %1290 = vmatprep.subr.bf16.mxu0 0
        %1291 = vmatpush1.bf16.msra.mxu0 0
        %1292 = vmatprep.subr.bf16.mxu0 0
        %1293 = vmatpush1.bf16.msra.mxu0 0
        %1294 = vmatprep.subr.bf16.mxu0 0
        %1295 = vmatpush1.bf16.msra.mxu0 0
        %1296 = vmatprep.subr.bf16.mxu0 0
        %1297 = vmatpush1.bf16.msra.mxu0 0
        %1298 = vmatprep.subr.bf16.mxu0 0
        %1299 = vmatpush1.bf16.msra.mxu0 0
        %1300 = vmatprep.mubr.bf16.mxu0 0
        %1301 = vmatmul.mubr.bf16.gmra.mrb[0].mxu0 %v1219
        %v1302 = vpop.f32.mrb[0].mxu0
        %v1303 = vadd.f32 0.0, %v1302
        %v1304 = vpop.f32.mrb[0].mxu0
        %v1305 = vpop.f32.mrb[0].mxu0
        %v1306 = vadd.f32 0.0, %v1305
        %v1307 = vpop.f32.mrb[0].mxu0
        %1308 = vdwg.mxu0
        %v1325 = vunpack.c.l.b16 %v674
        %v1326 = vunpack.c.l.b16 %v675
        %v1327 = vunpack.c.l.b16 %v676
        %v1328 = vunpack.c.l.b16 %v677
        %v1329 = vunpack.c.l.b16 %v678
        %v1330 = vunpack.c.l.b16 %v679
        %v1331 = vunpack.c.l.b16 %v680
        %v1332 = vunpack.c.l.b16 %v681
        %v1333 = vunpack.c.l.b16 %v682
        %v1334 = vunpack.c.l.b16 %v683
        %v1335 = vunpack.c.l.b16 %v684
        %v1336 = vunpack.c.l.b16 %v685
        %v1337 = vunpack.c.l.b16 %v686
        %v1338 = vunpack.c.l.b16 %v687
        %v1339 = vunpack.c.l.b16 %v688
        %v1340 = vunpack.c.l.b16 %v689
        %v1341 = vpack.c.b16 %v1326, %v1325
        %v1342 = vpack.c.b16 %v1328, %v1327
        %v1343 = vpack.c.b16 %v1330, %v1329
        %v1344 = vpack.c.b16 %v1332, %v1331
        %v1345 = vpack.c.b16 %v1334, %v1333
        %v1346 = vpack.c.b16 %v1336, %v1335
        %v1347 = vpack.c.b16 %v1338, %v1337
        %v1348 = vpack.c.b16 %v1340, %v1339
        %1357 = vmatprep.subr.bf16.mxu0 0
        %1358 = vmatpush1.bf16.msra.mxu0 %v1341
        %1359 = vmatprep.subr.bf16.mxu0 0
        %1360 = vmatpush1.bf16.msra.mxu0 %v1342
        %1361 = vmatprep.subr.bf16.mxu0 0
        %1362 = vmatpush1.bf16.msra.mxu0 %v1343
        %1363 = vmatprep.subr.bf16.mxu0 0
        %1364 = vmatpush1.bf16.msra.mxu0 %v1344
        %1365 = vmatprep.subr.bf16.mxu0 0
        %1366 = vmatpush1.bf16.msra.mxu0 %v1345
        %1367 = vmatprep.subr.bf16.mxu0 0
        %1368 = vmatpush1.bf16.msra.mxu0 %v1346
        %1369 = vmatprep.subr.bf16.mxu0 0
        %1370 = vmatpush1.bf16.msra.mxu0 %v1347
        %1371 = vmatprep.subr.bf16.mxu0 0
        %1372 = vmatpush1.bf16.msra.mxu0 %v1348
        %1373 = vmatprep.subr.bf16.mxu0 0
        %1374 = vmatpush1.bf16.msra.mxu0 0
        %1375 = vmatprep.subr.bf16.mxu0 0
        %1376 = vmatpush1.bf16.msra.mxu0 0
        %1377 = vmatprep.subr.bf16.mxu0 0
        %1378 = vmatpush1.bf16.msra.mxu0 0
        %1379 = vmatprep.subr.bf16.mxu0 0
        %1380 = vmatpush1.bf16.msra.mxu0 0
        %1381 = vmatprep.subr.bf16.mxu0 0
        %1382 = vmatpush1.bf16.msra.mxu0 0
        %1383 = vmatprep.subr.bf16.mxu0 0
        %1384 = vmatpush1.bf16.msra.mxu0 0
        %1385 = vmatprep.subr.bf16.mxu0 0
        %1386 = vmatpush1.bf16.msra.mxu0 0
        %1387 = vmatprep.subr.bf16.mxu0 0
        %1388 = vmatpush1.bf16.msra.mxu0 0
        %1389 = vmatprep.mubr.bf16.mxu0 0
        %1390 = vmatmul.mubr.bf16.gmra.mrb[0].mxu0 %v1219
        %v1391 = vpop.f32.mrb[0].mxu0
        %v1392 = vadd.f32 0.0, %v1391
        %v1393 = vpop.f32.mrb[0].mxu0
        %v1394 = vpop.f32.mrb[0].mxu0
        %v1395 = vadd.f32 0.0, %v1394
        %v1396 = vpop.f32.mrb[0].mxu0
        %1397 = vdwg.mxu0
        %v1414 = vunpack.c.l.b16 %v690
        %v1415 = vunpack.c.l.b16 %v691
        %v1416 = vunpack.c.l.b16 %v692
        %v1417 = vunpack.c.l.b16 %v693
        %v1418 = vunpack.c.l.b16 %v694
        %v1419 = vunpack.c.l.b16 %v695
        %v1420 = vunpack.c.l.b16 %v696
        %v1421 = vunpack.c.l.b16 %v697
        %v1422 = vunpack.c.l.b16 %v698
        %v1423 = vunpack.c.l.b16 %v699
        %v1424 = vunpack.c.l.b16 %v700
        %v1425 = vunpack.c.l.b16 %v701
        %v1426 = vunpack.c.l.b16 %v702
        %v1427 = vunpack.c.l.b16 %v703
        %v1428 = vunpack.c.l.b16 %v704
        %v1429 = vunpack.c.l.b16 %v705
        %v1430 = vpack.c.b16 %v1415, %v1414
        %v1431 = vpack.c.b16 %v1417, %v1416
        %v1432 = vpack.c.b16 %v1419, %v1418
        %v1433 = vpack.c.b16 %v1421, %v1420
        %v1434 = vpack.c.b16 %v1423, %v1422
        %v1435 = vpack.c.b16 %v1425, %v1424
        %v1436 = vpack.c.b16 %v1427, %v1426
        %v1437 = vpack.c.b16 %v1429, %v1428
        %1446 = vmatprep.subr.bf16.mxu0 0
        %1447 = vmatpush1.bf16.msra.mxu0 %v1430
        %1448 = vmatprep.subr.bf16.mxu0 0
        %1449 = vmatpush1.bf16.msra.mxu0 %v1431
        %1450 = vmatprep.subr.bf16.mxu0 0
        %1451 = vmatpush1.bf16.msra.mxu0 %v1432
        %1452 = vmatprep.subr.bf16.mxu0 0
        %1453 = vmatpush1.bf16.msra.mxu0 %v1433
        %1454 = vmatprep.subr.bf16.mxu0 0
        %1455 = vmatpush1.bf16.msra.mxu0 %v1434
        %1456 = vmatprep.subr.bf16.mxu0 0
        %1457 = vmatpush1.bf16.msra.mxu0 %v1435
        %1458 = vmatprep.subr.bf16.mxu0 0
        %1459 = vmatpush1.bf16.msra.mxu0 %v1436
        %1460 = vmatprep.subr.bf16.mxu0 0
        %1461 = vmatpush1.bf16.msra.mxu0 %v1437
        %1462 = vmatprep.subr.bf16.mxu0 0
        %1463 = vmatpush1.bf16.msra.mxu0 0
        %1464 = vmatprep.subr.bf16.mxu0 0
        %1465 = vmatpush1.bf16.msra.mxu0 0
        %1466 = vmatprep.subr.bf16.mxu0 0
        %1467 = vmatpush1.bf16.msra.mxu0 0
        %1468 = vmatprep.subr.bf16.mxu0 0
        %1469 = vmatpush1.bf16.msra.mxu0 0
        %1470 = vmatprep.subr.bf16.mxu0 0
        %1471 = vmatpush1.bf16.msra.mxu0 0
        %1472 = vmatprep.subr.bf16.mxu0 0
        %1473 = vmatpush1.bf16.msra.mxu0 0
        %1474 = vmatprep.subr.bf16.mxu0 0
        %1475 = vmatpush1.bf16.msra.mxu0 0
        %1476 = vmatprep.subr.bf16.mxu0 0
        %1477 = vmatpush1.bf16.msra.mxu0 0
        %1478 = vmatprep.mubr.bf16.mxu0 0
        %1479 = vmatmul.mubr.bf16.gmra.mrb[0].mxu0 %v1219
        %v1480 = vpop.f32.mrb[0].mxu0
        %v1481 = vadd.f32 0.0, %v1480
        %v1482 = vpop.f32.mrb[0].mxu0
        %v1483 = vpop.f32.mrb[0].mxu0
        %v1484 = vadd.f32 0.0, %v1483
        %v1485 = vpop.f32.mrb[0].mxu0
        %1486 = vdwg.mxu0
        %v1503 = vunpack.c.l.b16 %v706
        %v1504 = vunpack.c.l.b16 %v707
        %v1505 = vunpack.c.l.b16 %v708
        %v1506 = vunpack.c.l.b16 %v709
        %v1507 = vunpack.c.l.b16 %v710
        %v1508 = vunpack.c.l.b16 %v711
        %v1509 = vunpack.c.l.b16 %v712
        %v1510 = vunpack.c.l.b16 %v713
        %v1511 = vunpack.c.l.b16 %v714
        %v1512 = vunpack.c.l.b16 %v715
        %v1513 = vunpack.c.l.b16 %v716
        %v1514 = vunpack.c.l.b16 %v717
        %v1515 = vunpack.c.l.b16 %v718
        %v1516 = vunpack.c.l.b16 %v719
        %v1517 = vunpack.c.l.b16 %v720
        %v1518 = vunpack.c.l.b16 %v721
        %v1519 = vpack.c.b16 %v1504, %v1503
        %v1520 = vpack.c.b16 %v1506, %v1505
        %v1521 = vpack.c.b16 %v1508, %v1507
        %v1522 = vpack.c.b16 %v1510, %v1509
        %v1523 = vpack.c.b16 %v1512, %v1511
        %v1524 = vpack.c.b16 %v1514, %v1513
        %v1525 = vpack.c.b16 %v1516, %v1515
        %v1526 = vpack.c.b16 %v1518, %v1517
        %1535 = vmatprep.subr.bf16.mxu0 0
        %1536 = vmatpush1.bf16.msra.mxu0 %v1519
        %1537 = vmatprep.subr.bf16.mxu0 0
        %1538 = vmatpush1.bf16.msra.mxu0 %v1520
        %1539 = vmatprep.subr.bf16.mxu0 0
        %1540 = vmatpush1.bf16.msra.mxu0 %v1521
        %1541 = vmatprep.subr.bf16.mxu0 0
        %1542 = vmatpush1.bf16.msra.mxu0 %v1522
        %1543 = vmatprep.subr.bf16.mxu0 0
        %1544 = vmatpush1.bf16.msra.mxu0 %v1523
        %1545 = vmatprep.subr.bf16.mxu0 0
        %1546 = vmatpush1.bf16.msra.mxu0 %v1524
        %1547 = vmatprep.subr.bf16.mxu0 0
        %1548 = vmatpush1.bf16.msra.mxu0 %v1525
        %1549 = vmatprep.subr.bf16.mxu0 0
        %1550 = vmatpush1.bf16.msra.mxu0 %v1526
        %1551 = vmatprep.subr.bf16.mxu0 0
        %1552 = vmatpush1.bf16.msra.mxu0 0
        %1553 = vmatprep.subr.bf16.mxu0 0
        %1554 = vmatpush1.bf16.msra.mxu0 0
        %1555 = vmatprep.subr.bf16.mxu0 0
        %1556 = vmatpush1.bf16.msra.mxu0 0
        %1557 = vmatprep.subr.bf16.mxu0 0
        %1558 = vmatpush1.bf16.msra.mxu0 0
        %1559 = vmatprep.subr.bf16.mxu0 0
        %1560 = vmatpush1.bf16.msra.mxu0 0
        %1561 = vmatprep.subr.bf16.mxu0 0
        %1562 = vmatpush1.bf16.msra.mxu0 0
        %1563 = vmatprep.subr.bf16.mxu0 0
        %1564 = vmatpush1.bf16.msra.mxu0 0
        %1565 = vmatprep.subr.bf16.mxu0 0
        %1566 = vmatpush1.bf16.msra.mxu0 0
        %1567 = vmatprep.mubr.bf16.mxu0 0
        %1568 = vmatmul.mubr.bf16.gmra.mrb[0].mxu0 %v1219
        %v1569 = vpop.f32.mrb[0].mxu0
        %v1570 = vadd.f32 0.0, %v1569
        %v1571 = vpop.f32.mrb[0].mxu0
        %v1572 = vpop.f32.mrb[0].mxu0
        %v1573 = vadd.f32 0.0, %v1572
        %v1574 = vpop.f32.mrb[0].mxu0
        %1575 = vdwg.mxu0
        %v1592 = vunpack.c.l.b16 %v722
        %v1593 = vunpack.c.l.b16 %v723
        %v1594 = vunpack.c.l.b16 %v724
        %v1595 = vunpack.c.l.b16 %v725
        %v1596 = vunpack.c.l.b16 %v726
        %v1597 = vunpack.c.l.b16 %v727
        %v1598 = vunpack.c.l.b16 %v728
        %v1599 = vunpack.c.l.b16 %v729
        %v1600 = vunpack.c.l.b16 %v730
        %v1601 = vunpack.c.l.b16 %v731
        %v1602 = vunpack.c.l.b16 %v732
        %v1603 = vunpack.c.l.b16 %v733
        %v1604 = vunpack.c.l.b16 %v734
        %v1605 = vunpack.c.l.b16 %v735
        %v1606 = vunpack.c.l.b16 %v736
        %v1607 = vunpack.c.l.b16 %v737
        %v1608 = vpack.c.b16 %v1593, %v1592
        %v1609 = vpack.c.b16 %v1595, %v1594
        %v1610 = vpack.c.b16 %v1597, %v1596
        %v1611 = vpack.c.b16 %v1599, %v1598
        %v1612 = vpack.c.b16 %v1601, %v1600
        %v1613 = vpack.c.b16 %v1603, %v1602
        %v1614 = vpack.c.b16 %v1605, %v1604
        %v1615 = vpack.c.b16 %v1607, %v1606
        %1624 = vmatprep.subr.bf16.mxu0 0
        %1625 = vmatpush1.bf16.msra.mxu0 %v1608
        %1626 = vmatprep.subr.bf16.mxu0 0
        %1627 = vmatpush1.bf16.msra.mxu0 %v1609
        %1628 = vmatprep.subr.bf16.mxu0 0
        %1629 = vmatpush1.bf16.msra.mxu0 %v1610
        %1630 = vmatprep.subr.bf16.mxu0 0
        %1631 = vmatpush1.bf16.msra.mxu0 %v1611
        %1632 = vmatprep.subr.bf16.mxu0 0
        %1633 = vmatpush1.bf16.msra.mxu0 %v1612
        %1634 = vmatprep.subr.bf16.mxu0 0
        %1635 = vmatpush1.bf16.msra.mxu0 %v1613
        %1636 = vmatprep.subr.bf16.mxu0 0
        %1637 = vmatpush1.bf16.msra.mxu0 %v1614
        %1638 = vmatprep.subr.bf16.mxu0 0
        %1639 = vmatpush1.bf16.msra.mxu0 %v1615
        %1640 = vmatprep.subr.bf16.mxu0 0
        %1641 = vmatpush1.bf16.msra.mxu0 0
        %1642 = vmatprep.subr.bf16.mxu0 0
        %1643 = vmatpush1.bf16.msra.mxu0 0
        %1644 = vmatprep.subr.bf16.mxu0 0
        %1645 = vmatpush1.bf16.msra.mxu0 0
        %1646 = vmatprep.subr.bf16.mxu0 0
        %1647 = vmatpush1.bf16.msra.mxu0 0
        %1648 = vmatprep.subr.bf16.mxu0 0
        %1649 = vmatpush1.bf16.msra.mxu0 0
        %1650 = vmatprep.subr.bf16.mxu0 0
        %1651 = vmatpush1.bf16.msra.mxu0 0
        %1652 = vmatprep.subr.bf16.mxu0 0
        %1653 = vmatpush1.bf16.msra.mxu0 0
        %1654 = vmatprep.subr.bf16.mxu0 0
        %1655 = vmatpush1.bf16.msra.mxu0 0
        %1656 = vmatprep.mubr.bf16.mxu0 0
        %1657 = vmatmul.mubr.bf16.gmra.mrb[0].mxu0 %v1219
        %v1658 = vpop.f32.mrb[0].mxu0
        %v1659 = vadd.f32 0.0, %v1658
        %v1660 = vpop.f32.mrb[0].mxu0
        %v1661 = vpop.f32.mrb[0].mxu0
        %v1662 = vadd.f32 0.0, %v1661
        %v1663 = vpop.f32.mrb[0].mxu0
        %1664 = vdwg.mxu0
        %v1681 = vunpack.c.l.b16 %v738
        %v1682 = vunpack.c.l.b16 %v739
        %v1683 = vunpack.c.l.b16 %v740
        %v1684 = vunpack.c.l.b16 %v741
        %v1685 = vunpack.c.l.b16 %v742
        %v1686 = vunpack.c.l.b16 %v743
        %v1687 = vunpack.c.l.b16 %v744
        %v1688 = vunpack.c.l.b16 %v745
        %v1689 = vunpack.c.l.b16 %v746
        %v1690 = vunpack.c.l.b16 %v747
        %v1691 = vunpack.c.l.b16 %v748
        %v1692 = vunpack.c.l.b16 %v749
        %v1693 = vunpack.c.l.b16 %v750
        %v1694 = vunpack.c.l.b16 %v751
        %v1695 = vunpack.c.l.b16 %v752
        %v1696 = vunpack.c.l.b16 %v753
        %v1697 = vpack.c.b16 %v1682, %v1681
        %v1698 = vpack.c.b16 %v1684, %v1683
        %v1699 = vpack.c.b16 %v1686, %v1685
        %v1700 = vpack.c.b16 %v1688, %v1687
        %v1701 = vpack.c.b16 %v1690, %v1689
        %v1702 = vpack.c.b16 %v1692, %v1691
        %v1703 = vpack.c.b16 %v1694, %v1693
        %v1704 = vpack.c.b16 %v1696, %v1695
        %1713 = vmatprep.subr.bf16.mxu0 0
        %1714 = vmatpush1.bf16.msra.mxu0 %v1697
        %1715 = vmatprep.subr.bf16.mxu0 0
        %1716 = vmatpush1.bf16.msra.mxu0 %v1698
        %1717 = vmatprep.subr.bf16.mxu0 0
        %1718 = vmatpush1.bf16.msra.mxu0 %v1699
        %1719 = vmatprep.subr.bf16.mxu0 0
        %1720 = vmatpush1.bf16.msra.mxu0 %v1700
        %1721 = vmatprep.subr.bf16.mxu0 0
        %1722 = vmatpush1.bf16.msra.mxu0 %v1701
        %1723 = vmatprep.subr.bf16.mxu0 0
        %1724 = vmatpush1.bf16.msra.mxu0 %v1702
        %1725 = vmatprep.subr.bf16.mxu0 0
        %1726 = vmatpush1.bf16.msra.mxu0 %v1703
        %1727 = vmatprep.subr.bf16.mxu0 0
        %1728 = vmatpush1.bf16.msra.mxu0 %v1704
        %1729 = vmatprep.subr.bf16.mxu0 0
        %1730 = vmatpush1.bf16.msra.mxu0 0
        %1731 = vmatprep.subr.bf16.mxu0 0
        %1732 = vmatpush1.bf16.msra.mxu0 0
        %1733 = vmatprep.subr.bf16.mxu0 0
        %1734 = vmatpush1.bf16.msra.mxu0 0
        %1735 = vmatprep.subr.bf16.mxu0 0
        %1736 = vmatpush1.bf16.msra.mxu0 0
        %1737 = vmatprep.subr.bf16.mxu0 0
        %1738 = vmatpush1.bf16.msra.mxu0 0
        %1739 = vmatprep.subr.bf16.mxu0 0
        %1740 = vmatpush1.bf16.msra.mxu0 0
        %1741 = vmatprep.subr.bf16.mxu0 0
        %1742 = vmatpush1.bf16.msra.mxu0 0
        %1743 = vmatprep.subr.bf16.mxu0 0
        %1744 = vmatpush1.bf16.msra.mxu0 0
        %1745 = vmatprep.mubr.bf16.mxu0 0
        %1746 = vmatmul.mubr.bf16.gmra.mrb[0].mxu0 %v1219
        %v1747 = vpop.f32.mrb[0].mxu0
        %v1748 = vadd.f32 0.0, %v1747
        %v1749 = vpop.f32.mrb[0].mxu0
        %v1750 = vpop.f32.mrb[0].mxu0
        %v1751 = vadd.f32 0.0, %v1750
        %v1752 = vpop.f32.mrb[0].mxu0
        %1753 = vdwg.mxu0
        %v1770 = vunpack.c.l.b16 %v754
        %v1771 = vunpack.c.l.b16 %v755
        %v1772 = vunpack.c.l.b16 %v756
        %v1773 = vunpack.c.l.b16 %v757
        %v1774 = vunpack.c.l.b16 %v758
        %v1775 = vunpack.c.l.b16 %v759
        %v1776 = vunpack.c.l.b16 %v760
        %v1777 = vunpack.c.l.b16 %v761
        %v1778 = vunpack.c.l.b16 %v762
        %v1779 = vunpack.c.l.b16 %v763
        %v1780 = vunpack.c.l.b16 %v764
        %v1781 = vunpack.c.l.b16 %v765
        %v1782 = vunpack.c.l.b16 %v766
        %v1783 = vunpack.c.l.b16 %v767
        %v1784 = vunpack.c.l.b16 %v768
        %v1785 = vunpack.c.l.b16 %v769
        %v1786 = vpack.c.b16 %v1771, %v1770
        %v1787 = vpack.c.b16 %v1773, %v1772
        %v1788 = vpack.c.b16 %v1775, %v1774
        %v1789 = vpack.c.b16 %v1777, %v1776
        %v1790 = vpack.c.b16 %v1779, %v1778
        %v1791 = vpack.c.b16 %v1781, %v1780
        %v1792 = vpack.c.b16 %v1783, %v1782
        %v1793 = vpack.c.b16 %v1785, %v1784
        %1802 = vmatprep.subr.bf16.mxu0 0
        %1803 = vmatpush1.bf16.msra.mxu0 %v1786
        %1804 = vmatprep.subr.bf16.mxu0 0
        %1805 = vmatpush1.bf16.msra.mxu0 %v1787
        %1806 = vmatprep.subr.bf16.mxu0 0
        %1807 = vmatpush1.bf16.msra.mxu0 %v1788
        %1808 = vmatprep.subr.bf16.mxu0 0
        %1809 = vmatpush1.bf16.msra.mxu0 %v1789
        %1810 = vmatprep.subr.bf16.mxu0 0
        %1811 = vmatpush1.bf16.msra.mxu0 %v1790
        %1812 = vmatprep.subr.bf16.mxu0 0
        %1813 = vmatpush1.bf16.msra.mxu0 %v1791
        %1814 = vmatprep.subr.bf16.mxu0 0
        %1815 = vmatpush1.bf16.msra.mxu0 %v1792
        %1816 = vmatprep.subr.bf16.mxu0 0
        %1817 = vmatpush1.bf16.msra.mxu0 %v1793
        %1818 = vmatprep.subr.bf16.mxu0 0
        %1819 = vmatpush1.bf16.msra.mxu0 0
        %1820 = vmatprep.subr.bf16.mxu0 0
        %1821 = vmatpush1.bf16.msra.mxu0 0
        %1822 = vmatprep.subr.bf16.mxu0 0
        %1823 = vmatpush1.bf16.msra.mxu0 0
        %1824 = vmatprep.subr.bf16.mxu0 0
        %1825 = vmatpush1.bf16.msra.mxu0 0
        %1826 = vmatprep.subr.bf16.mxu0 0
        %1827 = vmatpush1.bf16.msra.mxu0 0
        %1828 = vmatprep.subr.bf16.mxu0 0
        %1829 = vmatpush1.bf16.msra.mxu0 0
        %1830 = vmatprep.subr.bf16.mxu0 0
        %1831 = vmatpush1.bf16.msra.mxu0 0
        %1832 = vmatprep.subr.bf16.mxu0 0
        %1833 = vmatpush1.bf16.msra.mxu0 0
        %1834 = vmatprep.mubr.bf16.mxu0 0
        %1835 = vmatmul.mubr.bf16.gmra.mrb[0].mxu0 %v1219
        %v1836 = vpop.f32.mrb[0].mxu0
        %v1837 = vadd.f32 0.0, %v1836
        %v1838 = vpop.f32.mrb[0].mxu0
        %v1839 = vpop.f32.mrb[0].mxu0
        %v1840 = vadd.f32 0.0, %v1839
        %v1841 = vpop.f32.mrb[0].mxu0
        %1842 = vdwg.mxu0
        %v1859 = vunpack.c.l.b16 %v770
        %v1860 = vunpack.c.l.b16 %v771
        %v1861 = vunpack.c.l.b16 %v772
        %v1862 = vunpack.c.l.b16 %v773
        %v1863 = vunpack.c.l.b16 %v774
        %v1864 = vunpack.c.l.b16 %v775
        %v1865 = vunpack.c.l.b16 %v776
        %v1866 = vunpack.c.l.b16 %v777
        %v1867 = vunpack.c.l.b16 %v778
        %v1868 = vunpack.c.l.b16 %v779
        %v1869 = vunpack.c.l.b16 %v780
        %v1870 = vunpack.c.l.b16 %v781
        %v1871 = vunpack.c.l.b16 %v782
        %v1872 = vunpack.c.l.b16 %v783
        %v1873 = vunpack.c.l.b16 %v784
        %v1874 = vunpack.c.l.b16 %v785
        %v1875 = vpack.c.b16 %v1860, %v1859
        %v1876 = vpack.c.b16 %v1862, %v1861
        %v1877 = vpack.c.b16 %v1864, %v1863
        %v1878 = vpack.c.b16 %v1866, %v1865
        %v1879 = vpack.c.b16 %v1868, %v1867
        %v1880 = vpack.c.b16 %v1870, %v1869
        %v1881 = vpack.c.b16 %v1872, %v1871
        %v1882 = vpack.c.b16 %v1874, %v1873
        %1891 = vmatprep.subr.bf16.mxu0 0
        %1892 = vmatpush1.bf16.msra.mxu0 %v1875
        %1893 = vmatprep.subr.bf16.mxu0 0
        %1894 = vmatpush1.bf16.msra.mxu0 %v1876
        %1895 = vmatprep.subr.bf16.mxu0 0
        %1896 = vmatpush1.bf16.msra.mxu0 %v1877
        %1897 = vmatprep.subr.bf16.mxu0 0
        %1898 = vmatpush1.bf16.msra.mxu0 %v1878
        %1899 = vmatprep.subr.bf16.mxu0 0
        %1900 = vmatpush1.bf16.msra.mxu0 %v1879
        %1901 = vmatprep.subr.bf16.mxu0 0
        %1902 = vmatpush1.bf16.msra.mxu0 %v1880
        %1903 = vmatprep.subr.bf16.mxu0 0
        %1904 = vmatpush1.bf16.msra.mxu0 %v1881
        %1905 = vmatprep.subr.bf16.mxu0 0
        %1906 = vmatpush1.bf16.msra.mxu0 %v1882
        %1907 = vmatprep.subr.bf16.mxu0 0
        %1908 = vmatpush1.bf16.msra.mxu0 0
        %1909 = vmatprep.subr.bf16.mxu0 0
        %1910 = vmatpush1.bf16.msra.mxu0 0
        %1911 = vmatprep.subr.bf16.mxu0 0
        %1912 = vmatpush1.bf16.msra.mxu0 0
        %1913 = vmatprep.subr.bf16.mxu0 0
        %1914 = vmatpush1.bf16.msra.mxu0 0
        %1915 = vmatprep.subr.bf16.mxu0 0
        %1916 = vmatpush1.bf16.msra.mxu0 0
        %1917 = vmatprep.subr.bf16.mxu0 0
        %1918 = vmatpush1.bf16.msra.mxu0 0
        %1919 = vmatprep.subr.bf16.mxu0 0
        %1920 = vmatpush1.bf16.msra.mxu0 0
        %1921 = vmatprep.subr.bf16.mxu0 0
        %1922 = vmatpush1.bf16.msra.mxu0 0
        %1923 = vmatprep.mubr.bf16.mxu0 0
        %1924 = vmatmul.mubr.bf16.gmra.mrb[0].mxu0 %v1219
        %v1925 = vpop.f32.mrb[0].mxu0
        %v1926 = vadd.f32 0.0, %v1925
        %v1927 = vpop.f32.mrb[0].mxu0
        %v1928 = vpop.f32.mrb[0].mxu0
        %v1929 = vadd.f32 0.0, %v1928
        %v1930 = vpop.f32.mrb[0].mxu0
        %1931 = vdwg.mxu0
        %v1948 = vunpack.c.l.b16 %v786
        %v1949 = vunpack.c.l.b16 %v787
        %v1950 = vunpack.c.l.b16 %v788
        %v1951 = vunpack.c.l.b16 %v789
        %v1952 = vunpack.c.l.b16 %v790
        %v1953 = vunpack.c.l.b16 %v791
        %v1954 = vunpack.c.l.b16 %v792
        %v1955 = vunpack.c.l.b16 %v793
        %v1956 = vunpack.c.l.b16 %v794
        %v1957 = vunpack.c.l.b16 %v795
        %v1958 = vunpack.c.l.b16 %v796
        %v1959 = vunpack.c.l.b16 %v797
        %v1960 = vunpack.c.l.b16 %v798
        %v1961 = vunpack.c.l.b16 %v799
        %v1962 = vunpack.c.l.b16 %v800
        %v1963 = vunpack.c.l.b16 %v801
        %v1964 = vpack.c.b16 %v1949, %v1948
        %v1965 = vpack.c.b16 %v1951, %v1950
        %v1966 = vpack.c.b16 %v1953, %v1952
        %v1967 = vpack.c.b16 %v1955, %v1954
        %v1968 = vpack.c.b16 %v1957, %v1956
        %v1969 = vpack.c.b16 %v1959, %v1958
        %v1970 = vpack.c.b16 %v1961, %v1960
        %v1971 = vpack.c.b16 %v1963, %v1962
        %1980 = vmatprep.subr.bf16.mxu0 0
        %1981 = vmatpush1.bf16.msra.mxu0 %v1964
        %1982 = vmatprep.subr.bf16.mxu0 0
        %1983 = vmatpush1.bf16.msra.mxu0 %v1965
        %1984 = vmatprep.subr.bf16.mxu0 0
        %1985 = vmatpush1.bf16.msra.mxu0 %v1966
        %1986 = vmatprep.subr.bf16.mxu0 0
        %1987 = vmatpush1.bf16.msra.mxu0 %v1967
        %1988 = vmatprep.subr.bf16.mxu0 0
        %1989 = vmatpush1.bf16.msra.mxu0 %v1968
        %1990 = vmatprep.subr.bf16.mxu0 0
        %1991 = vmatpush1.bf16.msra.mxu0 %v1969
        %1992 = vmatprep.subr.bf16.mxu0 0
        %1993 = vmatpush1.bf16.msra.mxu0 %v1970
        %1994 = vmatprep.subr.bf16.mxu0 0
        %1995 = vmatpush1.bf16.msra.mxu0 %v1971
        %1996 = vmatprep.subr.bf16.mxu0 0
        %1997 = vmatpush1.bf16.msra.mxu0 0
        %1998 = vmatprep.subr.bf16.mxu0 0
        %1999 = vmatpush1.bf16.msra.mxu0 0
        %2000 = vmatprep.subr.bf16.mxu0 0
        %2001 = vmatpush1.bf16.msra.mxu0 0
        %2002 = vmatprep.subr.bf16.mxu0 0
        %2003 = vmatpush1.bf16.msra.mxu0 0
        %2004 = vmatprep.subr.bf16.mxu0 0
        %2005 = vmatpush1.bf16.msra.mxu0 0
        %2006 = vmatprep.subr.bf16.mxu0 0
        %2007 = vmatpush1.bf16.msra.mxu0 0
        %2008 = vmatprep.subr.bf16.mxu0 0
        %2009 = vmatpush1.bf16.msra.mxu0 0
        %2010 = vmatprep.subr.bf16.mxu0 0
        %2011 = vmatpush1.bf16.msra.mxu0 0
        %2012 = vmatprep.mubr.bf16.mxu0 0
        %2013 = vmatmul.mubr.bf16.gmra.mrb[0].mxu0 %v1219
        %v2014 = vpop.f32.mrb[0].mxu0
        %v2015 = vadd.f32 0.0, %v2014
        %v2016 = vpop.f32.mrb[0].mxu0
        %v2017 = vpop.f32.mrb[0].mxu0
        %v2018 = vadd.f32 0.0, %v2017
        %v2019 = vpop.f32.mrb[0].mxu0
        %2020 = vdwg.mxu0
        %v2037 = vunpack.c.l.b16 %v802
        %v2038 = vunpack.c.l.b16 %v803
        %v2039 = vunpack.c.l.b16 %v804
        %v2040 = vunpack.c.l.b16 %v805
        %v2041 = vunpack.c.l.b16 %v806
        %v2042 = vunpack.c.l.b16 %v807
        %v2043 = vunpack.c.l.b16 %v808
        %v2044 = vunpack.c.l.b16 %v809
        %v2045 = vunpack.c.l.b16 %v810
        %v2046 = vunpack.c.l.b16 %v811
        %v2047 = vunpack.c.l.b16 %v812
        %v2048 = vunpack.c.l.b16 %v813
        %v2049 = vunpack.c.l.b16 %v814
        %v2050 = vunpack.c.l.b16 %v815
        %v2051 = vunpack.c.l.b16 %v816
        %v2052 = vunpack.c.l.b16 %v817
        %v2053 = vpack.c.b16 %v2038, %v2037
        %v2054 = vpack.c.b16 %v2040, %v2039
        %v2055 = vpack.c.b16 %v2042, %v2041
        %v2056 = vpack.c.b16 %v2044, %v2043
        %v2057 = vpack.c.b16 %v2046, %v2045
        %v2058 = vpack.c.b16 %v2048, %v2047
        %v2059 = vpack.c.b16 %v2050, %v2049
        %v2060 = vpack.c.b16 %v2052, %v2051
        %2069 = vmatprep.subr.bf16.mxu0 0
        %2070 = vmatpush1.bf16.msra.mxu0 %v2053
        %2071 = vmatprep.subr.bf16.mxu0 0
        %2072 = vmatpush1.bf16.msra.mxu0 %v2054
        %2073 = vmatprep.subr.bf16.mxu0 0
        %2074 = vmatpush1.bf16.msra.mxu0 %v2055
        %2075 = vmatprep.subr.bf16.mxu0 0
        %2076 = vmatpush1.bf16.msra.mxu0 %v2056
        %2077 = vmatprep.subr.bf16.mxu0 0
        %2078 = vmatpush1.bf16.msra.mxu0 %v2057
        %2079 = vmatprep.subr.bf16.mxu0 0
        %2080 = vmatpush1.bf16.msra.mxu0 %v2058
        %2081 = vmatprep.subr.bf16.mxu0 0
        %2082 = vmatpush1.bf16.msra.mxu0 %v2059
        %2083 = vmatprep.subr.bf16.mxu0 0
        %2084 = vmatpush1.bf16.msra.mxu0 %v2060
        %2085 = vmatprep.subr.bf16.mxu0 0
        %2086 = vmatpush1.bf16.msra.mxu0 0
        %2087 = vmatprep.subr.bf16.mxu0 0
        %2088 = vmatpush1.bf16.msra.mxu0 0
        %2089 = vmatprep.subr.bf16.mxu0 0
        %2090 = vmatpush1.bf16.msra.mxu0 0
        %2091 = vmatprep.subr.bf16.mxu0 0
        %2092 = vmatpush1.bf16.msra.mxu0 0
        %2093 = vmatprep.subr.bf16.mxu0 0
        %2094 = vmatpush1.bf16.msra.mxu0 0
        %2095 = vmatprep.subr.bf16.mxu0 0
        %2096 = vmatpush1.bf16.msra.mxu0 0
        %2097 = vmatprep.subr.bf16.mxu0 0
        %2098 = vmatpush1.bf16.msra.mxu0 0
        %2099 = vmatprep.subr.bf16.mxu0 0
        %2100 = vmatpush1.bf16.msra.mxu0 0
        %2101 = vmatprep.mubr.bf16.mxu0 0
        %2102 = vmatmul.mubr.bf16.gmra.mrb[0].mxu0 %v1219
        %v2103 = vpop.f32.mrb[0].mxu0
        %v2104 = vadd.f32 0.0, %v2103
        %v2105 = vpop.f32.mrb[0].mxu0
        %v2106 = vpop.f32.mrb[0].mxu0
        %v2107 = vadd.f32 0.0, %v2106
        %v2108 = vpop.f32.mrb[0].mxu0
        %2109 = vdwg.mxu0
        %v2126 = vunpack.c.l.b16 %v818
        %v2127 = vunpack.c.l.b16 %v819
        %v2128 = vunpack.c.l.b16 %v820
        %v2129 = vunpack.c.l.b16 %v821
        %v2130 = vunpack.c.l.b16 %v822
        %v2131 = vunpack.c.l.b16 %v823
        %v2132 = vunpack.c.l.b16 %v824
        %v2133 = vunpack.c.l.b16 %v825
        %v2134 = vunpack.c.l.b16 %v826
        %v2135 = vunpack.c.l.b16 %v827
        %v2136 = vunpack.c.l.b16 %v828
        %v2137 = vunpack.c.l.b16 %v829
        %v2138 = vunpack.c.l.b16 %v830
        %v2139 = vunpack.c.l.b16 %v831
        %v2140 = vunpack.c.l.b16 %v832
        %v2141 = vunpack.c.l.b16 %v833
        %v2142 = vpack.c.b16 %v2127, %v2126
        %v2143 = vpack.c.b16 %v2129, %v2128
        %v2144 = vpack.c.b16 %v2131, %v2130
        %v2145 = vpack.c.b16 %v2133, %v2132
        %v2146 = vpack.c.b16 %v2135, %v2134
        %v2147 = vpack.c.b16 %v2137, %v2136
        %v2148 = vpack.c.b16 %v2139, %v2138
        %v2149 = vpack.c.b16 %v2141, %v2140
        %2158 = vmatprep.subr.bf16.mxu0 0
        %2159 = vmatpush1.bf16.msra.mxu0 %v2142
        %2160 = vmatprep.subr.bf16.mxu0 0
        %2161 = vmatpush1.bf16.msra.mxu0 %v2143
        %2162 = vmatprep.subr.bf16.mxu0 0
        %2163 = vmatpush1.bf16.msra.mxu0 %v2144
        %2164 = vmatprep.subr.bf16.mxu0 0
        %2165 = vmatpush1.bf16.msra.mxu0 %v2145
        %2166 = vmatprep.subr.bf16.mxu0 0
        %2167 = vmatpush1.bf16.msra.mxu0 %v2146
        %2168 = vmatprep.subr.bf16.mxu0 0
        %2169 = vmatpush1.bf16.msra.mxu0 %v2147
        %2170 = vmatprep.subr.bf16.mxu0 0
        %2171 = vmatpush1.bf16.msra.mxu0 %v2148
        %2172 = vmatprep.subr.bf16.mxu0 0
        %2173 = vmatpush1.bf16.msra.mxu0 %v2149
        %2174 = vmatprep.subr.bf16.mxu0 0
        %2175 = vmatpush1.bf16.msra.mxu0 0
        %2176 = vmatprep.subr.bf16.mxu0 0
        %2177 = vmatpush1.bf16.msra.mxu0 0
        %2178 = vmatprep.subr.bf16.mxu0 0
        %2179 = vmatpush1.bf16.msra.mxu0 0
        %2180 = vmatprep.subr.bf16.mxu0 0
        %2181 = vmatpush1.bf16.msra.mxu0 0
        %2182 = vmatprep.subr.bf16.mxu0 0
        %2183 = vmatpush1.bf16.msra.mxu0 0
        %2184 = vmatprep.subr.bf16.mxu0 0
        %2185 = vmatpush1.bf16.msra.mxu0 0
        %2186 = vmatprep.subr.bf16.mxu0 0
        %2187 = vmatpush1.bf16.msra.mxu0 0
        %2188 = vmatprep.subr.bf16.mxu0 0
        %2189 = vmatpush1.bf16.msra.mxu0 0
        %2190 = vmatprep.mubr.bf16.mxu0 0
        %2191 = vmatmul.mubr.bf16.gmra.mrb[0].mxu0 %v1219
        %v2192 = vpop.f32.mrb[0].mxu0
        %v2193 = vadd.f32 0.0, %v2192
        %v2194 = vpop.f32.mrb[0].mxu0
        %v2195 = vpop.f32.mrb[0].mxu0
        %v2196 = vadd.f32 0.0, %v2195
        %v2197 = vpop.f32.mrb[0].mxu0
        %2198 = vdwg.mxu0
        %v2215 = vunpack.c.l.b16 %v834
        %v2216 = vunpack.c.l.b16 %v835
        %v2217 = vunpack.c.l.b16 %v836
        %v2218 = vunpack.c.l.b16 %v837
        %v2219 = vunpack.c.l.b16 %v838
        %v2220 = vunpack.c.l.b16 %v839
        %v2221 = vunpack.c.l.b16 %v840
        %v2222 = vunpack.c.l.b16 %v841
        %v2223 = vunpack.c.l.b16 %v842
        %v2224 = vunpack.c.l.b16 %v843
        %v2225 = vunpack.c.l.b16 %v844
        %v2226 = vunpack.c.l.b16 %v845
        %v2227 = vunpack.c.l.b16 %v846
        %v2228 = vunpack.c.l.b16 %v847
        %v2229 = vunpack.c.l.b16 %v848
        %v2230 = vunpack.c.l.b16 %v849
        %v2231 = vpack.c.b16 %v2216, %v2215
        %v2232 = vpack.c.b16 %v2218, %v2217
        %v2233 = vpack.c.b16 %v2220, %v2219
        %v2234 = vpack.c.b16 %v2222, %v2221
        %v2235 = vpack.c.b16 %v2224, %v2223
        %v2236 = vpack.c.b16 %v2226, %v2225
        %v2237 = vpack.c.b16 %v2228, %v2227
        %v2238 = vpack.c.b16 %v2230, %v2229
        %2247 = vmatprep.subr.bf16.mxu0 0
        %2248 = vmatpush1.bf16.msra.mxu0 %v2231
        %2249 = vmatprep.subr.bf16.mxu0 0
        %2250 = vmatpush1.bf16.msra.mxu0 %v2232
        %2251 = vmatprep.subr.bf16.mxu0 0
        %2252 = vmatpush1.bf16.msra.mxu0 %v2233
        %2253 = vmatprep.subr.bf16.mxu0 0
        %2254 = vmatpush1.bf16.msra.mxu0 %v2234
        %2255 = vmatprep.subr.bf16.mxu0 0
        %2256 = vmatpush1.bf16.msra.mxu0 %v2235
        %2257 = vmatprep.subr.bf16.mxu0 0
        %2258 = vmatpush1.bf16.msra.mxu0 %v2236
        %2259 = vmatprep.subr.bf16.mxu0 0
        %2260 = vmatpush1.bf16.msra.mxu0 %v2237
        %2261 = vmatprep.subr.bf16.mxu0 0
        %2262 = vmatpush1.bf16.msra.mxu0 %v2238
        %2263 = vmatprep.subr.bf16.mxu0 0
        %2264 = vmatpush1.bf16.msra.mxu0 0
        %2265 = vmatprep.subr.bf16.mxu0 0
        %2266 = vmatpush1.bf16.msra.mxu0 0
        %2267 = vmatprep.subr.bf16.mxu0 0
        %2268 = vmatpush1.bf16.msra.mxu0 0
        %2269 = vmatprep.subr.bf16.mxu0 0
        %2270 = vmatpush1.bf16.msra.mxu0 0
        %2271 = vmatprep.subr.bf16.mxu0 0
        %2272 = vmatpush1.bf16.msra.mxu0 0
        %2273 = vmatprep.subr.bf16.mxu0 0
        %2274 = vmatpush1.bf16.msra.mxu0 0
        %2275 = vmatprep.subr.bf16.mxu0 0
        %2276 = vmatpush1.bf16.msra.mxu0 0
        %2277 = vmatprep.subr.bf16.mxu0 0
        %2278 = vmatpush1.bf16.msra.mxu0 0
        %2279 = vmatprep.mubr.bf16.mxu0 0
        %2280 = vmatmul.mubr.bf16.gmra.mrb[0].mxu0 %v1219
        %v2281 = vpop.f32.mrb[0].mxu0
        %v2282 = vadd.f32 0.0, %v2281
        %v2283 = vpop.f32.mrb[0].mxu0
        %v2284 = vpop.f32.mrb[0].mxu0
        %v2285 = vadd.f32 0.0, %v2284
        %v2286 = vpop.f32.mrb[0].mxu0
        %2287 = vdwg.mxu0
        %v2288 = vpack.c.bf16 %v1306, %v1303
        %v2289 = vpack.c.bf16 %v1395, %v1392
        %v2290 = vpack.c.bf16 %v1484, %v1481
        %v2291 = vpack.c.bf16 %v1573, %v1570
        %v2292 = vpack.c.bf16 %v1662, %v1659
        %v2293 = vpack.c.bf16 %v1751, %v1748
        %v2294 = vpack.c.bf16 %v1840, %v1837
        %v2295 = vpack.c.bf16 %v1929, %v1926
        %vm2296 = vcmask 261120
        %v2298 = vsel %vm2296, %v2288, 0
        %v2301 = vsel %vm2296, %v2292, 0
        %2303 = vmatprep.subr.bf16.mxu0 0
        %2304 = vmatpush1.bf16.xpose.msra.mxu0 %v2301
        %2305 = vmatprep.subr.bf16.mxu0 0
        %2306 = vmatpush1.bf16.xpose.msra.mxu0 0
        %2307 = vmatprep.subr.bf16.mxu0 0
        %2308 = vmatpush1.bf16.xpose.msra.mxu0 0
        %2309 = vmatprep.subr.bf16.mxu0 0
        %2310 = vmatpush1.bf16.xpose.msra.mxu0 0
        %2311 = vmatprep.subr.bf16.mxu0 0
        %2312 = vmatpush1.bf16.xpose.msra.mxu0 0
        %2313 = vmatprep.subr.bf16.mxu0 0
        %2314 = vmatpush1.bf16.xpose.msra.mxu0 0
        %2315 = vmatprep.subr.bf16.mxu0 0
        %2316 = vmatpush1.bf16.xpose.msra.mxu0 0
        %2317 = vmatprep.subr.bf16.mxu0 0
        %2318 = vmatpush1.bf16.xpose.msra.mxu0 0
        %2319 = vmatprep.subr.bf16.mxu0 0
        %2320 = vmatpush1.bf16.xpose.msra.mxu0 0
        %2321 = vmatprep.subr.bf16.mxu0 0
        %2322 = vmatpush1.bf16.xpose.msra.mxu0 0
        %2323 = vmatprep.subr.bf16.mxu0 0
        %2324 = vmatpush1.bf16.xpose.msra.mxu0 0
        %2325 = vmatprep.subr.bf16.mxu0 0
        %2326 = vmatpush1.bf16.xpose.msra.mxu0 0
        %2327 = vmatprep.subr.bf16.mxu0 0
        %2328 = vmatpush1.bf16.xpose.msra.mxu0 0
        %2329 = vmatprep.subr.bf16.mxu0 0
        %2330 = vmatpush1.bf16.xpose.msra.mxu0 0
        %2331 = vmatprep.subr.bf16.mxu0 0
        %2332 = vmatpush1.bf16.xpose.msra.mxu0 0
        %2333 = vmatprep.subr.bf16.mxu0 0
        %2334 = vmatpush1.bf16.xpose.msra.mxu0 0
        %2335 = vmatprep.mubr.bf16.mxu0 0
        %2336 = vmatmul.mubr.bf16.gmra.mrb[0].mxu0 %v2298
        %v2337 = vpop.f32.mrb[0].mxu0
        %v2338 = vadd.f32 0.0, %v2337
        %v2339 = vpop.f32.mrb[0].mxu0
        %v2340 = vpop.f32.mrb[0].mxu0
        %v2341 = vadd.f32 0.0, %v2340
        %v2342 = vpop.f32.mrb[0].mxu0
        %2343 = vdwg.mxu0
        %v2345 = vsel %vm2296, %v2289, 0
        %v2348 = vsel %vm2296, %v2293, 0
        %2350 = vmatprep.subr.bf16.mxu0 0
        %2351 = vmatpush1.bf16.xpose.msra.mxu0 %v2348
        %2352 = vmatprep.subr.bf16.mxu0 0
        %2353 = vmatpush1.bf16.xpose.msra.mxu0 0
        %2354 = vmatprep.subr.bf16.mxu0 0
        %2355 = vmatpush1.bf16.xpose.msra.mxu0 0
        %2356 = vmatprep.subr.bf16.mxu0 0
        %2357 = vmatpush1.bf16.xpose.msra.mxu0 0
        %2358 = vmatprep.subr.bf16.mxu0 0
        %2359 = vmatpush1.bf16.xpose.msra.mxu0 0
        %2360 = vmatprep.subr.bf16.mxu0 0
        %2361 = vmatpush1.bf16.xpose.msra.mxu0 0
        %2362 = vmatprep.subr.bf16.mxu0 0
        %2363 = vmatpush1.bf16.xpose.msra.mxu0 0
        %2364 = vmatprep.subr.bf16.mxu0 0
        %2365 = vmatpush1.bf16.xpose.msra.mxu0 0
        %2366 = vmatprep.subr.bf16.mxu0 0
        %2367 = vmatpush1.bf16.xpose.msra.mxu0 0
        %2368 = vmatprep.subr.bf16.mxu0 0
        %2369 = vmatpush1.bf16.xpose.msra.mxu0 0
        %2370 = vmatprep.subr.bf16.mxu0 0
        %2371 = vmatpush1.bf16.xpose.msra.mxu0 0
        %2372 = vmatprep.subr.bf16.mxu0 0
        %2373 = vmatpush1.bf16.xpose.msra.mxu0 0
        %2374 = vmatprep.subr.bf16.mxu0 0
        %2375 = vmatpush1.bf16.xpose.msra.mxu0 0
        %2376 = vmatprep.subr.bf16.mxu0 0
        %2377 = vmatpush1.bf16.xpose.msra.mxu0 0
        %2378 = vmatprep.subr.bf16.mxu0 0
        %2379 = vmatpush1.bf16.xpose.msra.mxu0 0
        %2380 = vmatprep.subr.bf16.mxu0 0
        %2381 = vmatpush1.bf16.xpose.msra.mxu0 0
        %2382 = vmatprep.mubr.bf16.mxu0 0
        %2383 = vmatmul.mubr.bf16.gmra.mrb[0].mxu0 %v2345
        %v2384 = vpop.f32.mrb[0].mxu0
        %v2385 = vadd.f32 0.0, %v2384
        %v2386 = vpop.f32.mrb[0].mxu0
        %v2387 = vpop.f32.mrb[0].mxu0
        %v2388 = vadd.f32 0.0, %v2387
        %v2389 = vpop.f32.mrb[0].mxu0
        %2390 = vdwg.mxu0
        %v2392 = vsel %vm2296, %v2290, 0
        %v2395 = vsel %vm2296, %v2294, 0
        %2397 = vmatprep.subr.bf16.mxu0 0
        %2398 = vmatpush1.bf16.xpose.msra.mxu0 %v2395
        %2399 = vmatprep.subr.bf16.mxu0 0
        %2400 = vmatpush1.bf16.xpose.msra.mxu0 0
        %2401 = vmatprep.subr.bf16.mxu0 0
        %2402 = vmatpush1.bf16.xpose.msra.mxu0 0
        %2403 = vmatprep.subr.bf16.mxu0 0
        %2404 = vmatpush1.bf16.xpose.msra.mxu0 0
        %2405 = vmatprep.subr.bf16.mxu0 0
        %2406 = vmatpush1.bf16.xpose.msra.mxu0 0
        %2407 = vmatprep.subr.bf16.mxu0 0
        %2408 = vmatpush1.bf16.xpose.msra.mxu0 0
        %2409 = vmatprep.subr.bf16.mxu0 0
        %2410 = vmatpush1.bf16.xpose.msra.mxu0 0
        %2411 = vmatprep.subr.bf16.mxu0 0
        %2412 = vmatpush1.bf16.xpose.msra.mxu0 0
        %2413 = vmatprep.subr.bf16.mxu0 0
        %2414 = vmatpush1.bf16.xpose.msra.mxu0 0
        %2415 = vmatprep.subr.bf16.mxu0 0
        %2416 = vmatpush1.bf16.xpose.msra.mxu0 0
        %2417 = vmatprep.subr.bf16.mxu0 0
        %2418 = vmatpush1.bf16.xpose.msra.mxu0 0
        %2419 = vmatprep.subr.bf16.mxu0 0
        %2420 = vmatpush1.bf16.xpose.msra.mxu0 0
        %2421 = vmatprep.subr.bf16.mxu0 0
        %2422 = vmatpush1.bf16.xpose.msra.mxu0 0
        %2423 = vmatprep.subr.bf16.mxu0 0
        %2424 = vmatpush1.bf16.xpose.msra.mxu0 0
        %2425 = vmatprep.subr.bf16.mxu0 0
        %2426 = vmatpush1.bf16.xpose.msra.mxu0 0
        %2427 = vmatprep.subr.bf16.mxu0 0
        %2428 = vmatpush1.bf16.xpose.msra.mxu0 0
        %2429 = vmatprep.mubr.bf16.mxu0 0
        %2430 = vmatmul.mubr.bf16.gmra.mrb[0].mxu0 %v2392
        %v2431 = vpop.f32.mrb[0].mxu0
        %v2432 = vadd.f32 0.0, %v2431
        %v2433 = vpop.f32.mrb[0].mxu0
        %v2434 = vpop.f32.mrb[0].mxu0
        %v2435 = vadd.f32 0.0, %v2434
        %v2436 = vpop.f32.mrb[0].mxu0
        %2437 = vdwg.mxu0
        %v2439 = vsel %vm2296, %v2291, 0
        %v2442 = vsel %vm2296, %v2295, 0
        %2444 = vmatprep.subr.bf16.mxu0 0
        %2445 = vmatpush1.bf16.xpose.msra.mxu0 %v2442
        %2446 = vmatprep.subr.bf16.mxu0 0
        %2447 = vmatpush1.bf16.xpose.msra.mxu0 0
        %2448 = vmatprep.subr.bf16.mxu0 0
        %2449 = vmatpush1.bf16.xpose.msra.mxu0 0
        %2450 = vmatprep.subr.bf16.mxu0 0
        %2451 = vmatpush1.bf16.xpose.msra.mxu0 0
        %2452 = vmatprep.subr.bf16.mxu0 0
        %2453 = vmatpush1.bf16.xpose.msra.mxu0 0
        %2454 = vmatprep.subr.bf16.mxu0 0
        %2455 = vmatpush1.bf16.xpose.msra.mxu0 0
        %2456 = vmatprep.subr.bf16.mxu0 0
        %2457 = vmatpush1.bf16.xpose.msra.mxu0 0
        %2458 = vmatprep.subr.bf16.mxu0 0
        %2459 = vmatpush1.bf16.xpose.msra.mxu0 0
        %2460 = vmatprep.subr.bf16.mxu0 0
        %2461 = vmatpush1.bf16.xpose.msra.mxu0 0
        %2462 = vmatprep.subr.bf16.mxu0 0
        %2463 = vmatpush1.bf16.xpose.msra.mxu0 0
        %2464 = vmatprep.subr.bf16.mxu0 0
        %2465 = vmatpush1.bf16.xpose.msra.mxu0 0
        %2466 = vmatprep.subr.bf16.mxu0 0
        %2467 = vmatpush1.bf16.xpose.msra.mxu0 0
        %2468 = vmatprep.subr.bf16.mxu0 0
        %2469 = vmatpush1.bf16.xpose.msra.mxu0 0
        %2470 = vmatprep.subr.bf16.mxu0 0
        %2471 = vmatpush1.bf16.xpose.msra.mxu0 0
        %2472 = vmatprep.subr.bf16.mxu0 0
        %2473 = vmatpush1.bf16.xpose.msra.mxu0 0
        %2474 = vmatprep.subr.bf16.mxu0 0
        %2475 = vmatpush1.bf16.xpose.msra.mxu0 0
        %2476 = vmatprep.mubr.bf16.mxu0 0
        %2477 = vmatmul.mubr.bf16.gmra.mrb[0].mxu0 %v2439
        %v2478 = vpop.f32.mrb[0].mxu0
        %v2479 = vadd.f32 0.0, %v2478
        %v2480 = vpop.f32.mrb[0].mxu0
        %v2481 = vpop.f32.mrb[0].mxu0
        %v2482 = vadd.f32 0.0, %v2481
        %v2483 = vpop.f32.mrb[0].mxu0
        %2484 = vdwg.mxu0
        %vm2485 = vcmask 130048
        %v2486 = vsel %vm2485, %v2338, -inf
        %2487 = vmax.xlane.f32.xlu0 %v2486
        %v2488 = vpop.xlane.xlu0 %2487
        %v2489 = vsel %vm2485, %v2341, -inf
        %2490 = vmax.xlane.f32.xlu0 %v2489
        %v2491 = vpop.xlane.xlu0 %2490
        %v2492 = vsel %vm2485, %v2385, -inf
        %2493 = vmax.xlane.f32.xlu0 %v2492
        %v2494 = vpop.xlane.xlu0 %2493
        %v2495 = vsel %vm2485, %v2388, -inf
        %2496 = vmax.xlane.f32.xlu0 %v2495
        %v2497 = vpop.xlane.xlu0 %2496
        %v2498 = vsel %vm2485, %v2432, -inf
        %2499 = vmax.xlane.f32.xlu0 %v2498
        %v2500 = vpop.xlane.xlu0 %2499
        %v2501 = vsel %vm2485, %v2435, -inf
        %2502 = vmax.xlane.f32.xlu0 %v2501
        %v2503 = vpop.xlane.xlu0 %2502
        %v2504 = vsel %vm2485, %v2479, -inf
        %2505 = vmax.xlane.f32.xlu0 %v2504
        %v2506 = vpop.xlane.xlu0 %2505
        %v2507 = vsel %vm2485, %v2482, -inf
        %2508 = vmax.xlane.f32.xlu0 %v2507
        %v2509 = vpop.xlane.xlu0 %2508
        %v2510 = vsub.f32 %v2338, %v2488
        %v2511 = vsub.f32 %v2341, %v2491
        %v2512 = vsub.f32 %v2385, %v2494
        %v2513 = vsub.f32 %v2388, %v2497
        %v2514 = vsub.f32 %v2432, %v2500
        %v2515 = vsub.f32 %v2435, %v2503
        %v2516 = vsub.f32 %v2479, %v2506
        %v2517 = vsub.f32 %v2482, %v2509
        %v2518 = vmul.f32 %v2510, 1.442695
        %v2519 = vpow.pop %v2518
        %v2520 = vmul.f32 %v2511, 1.442695
        %v2521 = vpow.pop %v2520
        %v2522 = vmul.f32 %v2512, 1.442695
        %v2523 = vpow.pop %v2522
        %v2524 = vmul.f32 %v2513, 1.442695
        %v2525 = vpow.pop %v2524
        %v2526 = vmul.f32 %v2514, 1.442695
        %v2527 = vpow.pop %v2526
        %v2528 = vmul.f32 %v2515, 1.442695
        %v2529 = vpow.pop %v2528
        %v2530 = vmul.f32 %v2516, 1.442695
        %v2531 = vpow.pop %v2530
        %v2532 = vmul.f32 %v2517, 1.442695
        %v2533 = vpow.pop %v2532
        %v2534 = vsel %vm2485, %v2519, 0.0
        %2535 = vadd.xlane.f32.xlu0 %v2534
        %v2536 = vpop.xlane.xlu0 %2535
        %v2537 = vsel %vm2485, %v2521, 0.0
        %2538 = vadd.xlane.f32.xlu0 %v2537
        %v2539 = vpop.xlane.xlu0 %2538
        %v2540 = vsel %vm2485, %v2523, 0.0
        %2541 = vadd.xlane.f32.xlu0 %v2540
        %v2542 = vpop.xlane.xlu0 %2541
        %v2543 = vsel %vm2485, %v2525, 0.0
        %2544 = vadd.xlane.f32.xlu0 %v2543
        %v2545 = vpop.xlane.xlu0 %2544
        %v2546 = vsel %vm2485, %v2527, 0.0
        %2547 = vadd.xlane.f32.xlu0 %v2546
        %v2548 = vpop.xlane.xlu0 %2547
        %v2549 = vsel %vm2485, %v2529, 0.0
        %2550 = vadd.xlane.f32.xlu0 %v2549
        %v2551 = vpop.xlane.xlu0 %2550
        %v2552 = vsel %vm2485, %v2531, 0.0
        %2553 = vadd.xlane.f32.xlu0 %v2552
        %v2554 = vpop.xlane.xlu0 %2553
        %v2555 = vsel %vm2485, %v2533, 0.0
        %2556 = vadd.xlane.f32.xlu0 %v2555
        %v2557 = vpop.xlane.xlu0 %2556
        %v2558 = vrcp.pop %v2536
        %v2559 = vrcp.pop %v2539
        %v2560 = vrcp.pop %v2542
        %v2561 = vrcp.pop %v2545
        %v2562 = vrcp.pop %v2548
        %v2563 = vrcp.pop %v2551
        %v2564 = vrcp.pop %v2554
        %v2565 = vrcp.pop %v2557
        %v2566 = vmul.f32 %v2536, %v2558
        %v2567 = vmul.f32 %v2539, %v2559
        %v2568 = vmul.f32 %v2542, %v2560
        %v2569 = vmul.f32 %v2545, %v2561
        %v2570 = vmul.f32 %v2548, %v2562
        %v2571 = vmul.f32 %v2551, %v2563
        %v2572 = vmul.f32 %v2554, %v2564
        %v2573 = vmul.f32 %v2557, %v2565
        %v2574 = vsub.f32 2.0, %v2566
        %v2575 = vsub.f32 2.0, %v2567
        %v2576 = vsub.f32 2.0, %v2568
        %v2577 = vsub.f32 2.0, %v2569
        %v2578 = vsub.f32 2.0, %v2570
        %v2579 = vsub.f32 2.0, %v2571
        %v2580 = vsub.f32 2.0, %v2572
        %v2581 = vsub.f32 2.0, %v2573
        %v2582 = vmul.f32 %v2558, %v2574
        %v2583 = vmul.f32 %v2559, %v2575
        %v2584 = vmul.f32 %v2560, %v2576
        %v2585 = vmul.f32 %v2561, %v2577
        %v2586 = vmul.f32 %v2562, %v2578
        %v2587 = vmul.f32 %v2563, %v2579
        %v2588 = vmul.f32 %v2564, %v2580
        %v2589 = vmul.f32 %v2565, %v2581
        %v2590 = vmul.f32 %v2519, %v2582
        %v2591 = vmul.f32 %v2521, %v2583
        %v2592 = vmul.f32 %v2523, %v2584
        %v2593 = vmul.f32 %v2525, %v2585
        %v2594 = vmul.f32 %v2527, %v2586
        %v2595 = vmul.f32 %v2529, %v2587
        %v2596 = vmul.f32 %v2531, %v2588
        %v2597 = vmul.f32 %v2533, %v2589
        %v2598 = vpack.c.bf16 %v2591, %v2590
        %v2599 = vpack.c.bf16 %v2593, %v2592
        %v2600 = vpack.c.bf16 %v2595, %v2594
        %v2601 = vpack.c.bf16 %v2597, %v2596
        %v2602 = vpack.c.bf16 %v2018, %v2015
        %v2603 = vpack.c.bf16 %v2107, %v2104
        %v2604 = vpack.c.bf16 %v2196, %v2193
        %v2605 = vpack.c.bf16 %v2285, %v2282
        %v2607 = vsel %vm2485, %v2598, 0
        %2609 = vmatprep.subr.bf16.mxu0 0
        %2610 = vmatpush1.bf16.msra.mxu0 %v2602
        %2611 = vmatprep.subr.bf16.mxu0 0
        %2612 = vmatpush1.bf16.msra.mxu0 0
        %2613 = vmatprep.subr.bf16.mxu0 0
        %2614 = vmatpush1.bf16.msra.mxu0 0
        %2615 = vmatprep.subr.bf16.mxu0 0
        %2616 = vmatpush1.bf16.msra.mxu0 0
        %2617 = vmatprep.subr.bf16.mxu0 0
        %2618 = vmatpush1.bf16.msra.mxu0 0
        %2619 = vmatprep.subr.bf16.mxu0 0
        %2620 = vmatpush1.bf16.msra.mxu0 0
        %2621 = vmatprep.subr.bf16.mxu0 0
        %2622 = vmatpush1.bf16.msra.mxu0 0
        %2623 = vmatprep.subr.bf16.mxu0 0
        %2624 = vmatpush1.bf16.msra.mxu0 0
        %2625 = vmatprep.subr.bf16.mxu0 0
        %2626 = vmatpush1.bf16.msra.mxu0 0
        %2627 = vmatprep.subr.bf16.mxu0 0
        %2628 = vmatpush1.bf16.msra.mxu0 0
        %2629 = vmatprep.subr.bf16.mxu0 0
        %2630 = vmatpush1.bf16.msra.mxu0 0
        %2631 = vmatprep.subr.bf16.mxu0 0
        %2632 = vmatpush1.bf16.msra.mxu0 0
        %2633 = vmatprep.subr.bf16.mxu0 0
        %2634 = vmatpush1.bf16.msra.mxu0 0
        %2635 = vmatprep.subr.bf16.mxu0 0
        %2636 = vmatpush1.bf16.msra.mxu0 0
        %2637 = vmatprep.subr.bf16.mxu0 0
        %2638 = vmatpush1.bf16.msra.mxu0 0
        %2639 = vmatprep.subr.bf16.mxu0 0
        %2640 = vmatpush1.bf16.msra.mxu0 0
        %2641 = vmatprep.mubr.bf16.mxu0 0
        %2642 = vmatmul.mubr.bf16.gmra.mrb[0].mxu0 %v2607
        %v2643 = vpop.f32.mrb[0].mxu0
        %v2644 = vadd.f32 0.0, %v2643
        %v2645 = vpop.f32.mrb[0].mxu0
        %v2646 = vpop.f32.mrb[0].mxu0
        %v2647 = vadd.f32 0.0, %v2646
        %v2648 = vpop.f32.mrb[0].mxu0
        %2649 = vdwg.mxu0
        %v2651 = vsel %vm2485, %v2599, 0
        %2653 = vmatprep.subr.bf16.mxu0 0
        %2654 = vmatpush1.bf16.msra.mxu0 %v2603
        %2655 = vmatprep.subr.bf16.mxu0 0
        %2656 = vmatpush1.bf16.msra.mxu0 0
        %2657 = vmatprep.subr.bf16.mxu0 0
        %2658 = vmatpush1.bf16.msra.mxu0 0
        %2659 = vmatprep.subr.bf16.mxu0 0
        %2660 = vmatpush1.bf16.msra.mxu0 0
        %2661 = vmatprep.subr.bf16.mxu0 0
        %2662 = vmatpush1.bf16.msra.mxu0 0
        %2663 = vmatprep.subr.bf16.mxu0 0
        %2664 = vmatpush1.bf16.msra.mxu0 0
        %2665 = vmatprep.subr.bf16.mxu0 0
        %2666 = vmatpush1.bf16.msra.mxu0 0
        %2667 = vmatprep.subr.bf16.mxu0 0
        %2668 = vmatpush1.bf16.msra.mxu0 0
        %2669 = vmatprep.subr.bf16.mxu0 0
        %2670 = vmatpush1.bf16.msra.mxu0 0
        %2671 = vmatprep.subr.bf16.mxu0 0
        %2672 = vmatpush1.bf16.msra.mxu0 0
        %2673 = vmatprep.subr.bf16.mxu0 0
        %2674 = vmatpush1.bf16.msra.mxu0 0
        %2675 = vmatprep.subr.bf16.mxu0 0
        %2676 = vmatpush1.bf16.msra.mxu0 0
        %2677 = vmatprep.subr.bf16.mxu0 0
        %2678 = vmatpush1.bf16.msra.mxu0 0
        %2679 = vmatprep.subr.bf16.mxu0 0
        %2680 = vmatpush1.bf16.msra.mxu0 0
        %2681 = vmatprep.subr.bf16.mxu0 0
        %2682 = vmatpush1.bf16.msra.mxu0 0
        %2683 = vmatprep.subr.bf16.mxu0 0
        %2684 = vmatpush1.bf16.msra.mxu0 0
        %2685 = vmatprep.mubr.bf16.mxu0 0
        %2686 = vmatmul.mubr.bf16.gmra.mrb[0].mxu0 %v2651
        %v2687 = vpop.f32.mrb[0].mxu0
        %v2688 = vadd.f32 0.0, %v2687
        %v2689 = vpop.f32.mrb[0].mxu0
        %v2690 = vpop.f32.mrb[0].mxu0
        %v2691 = vadd.f32 0.0, %v2690
        %v2692 = vpop.f32.mrb[0].mxu0
        %2693 = vdwg.mxu0
        %v2695 = vsel %vm2485, %v2600, 0
        %2697 = vmatprep.subr.bf16.mxu0 0
        %2698 = vmatpush1.bf16.msra.mxu0 %v2604
        %2699 = vmatprep.subr.bf16.mxu0 0
        %2700 = vmatpush1.bf16.msra.mxu0 0
        %2701 = vmatprep.subr.bf16.mxu0 0
        %2702 = vmatpush1.bf16.msra.mxu0 0
        %2703 = vmatprep.subr.bf16.mxu0 0
        %2704 = vmatpush1.bf16.msra.mxu0 0
        %2705 = vmatprep.subr.bf16.mxu0 0
        %2706 = vmatpush1.bf16.msra.mxu0 0
        %2707 = vmatprep.subr.bf16.mxu0 0
        %2708 = vmatpush1.bf16.msra.mxu0 0
        %2709 = vmatprep.subr.bf16.mxu0 0
        %2710 = vmatpush1.bf16.msra.mxu0 0
        %2711 = vmatprep.subr.bf16.mxu0 0
        %2712 = vmatpush1.bf16.msra.mxu0 0
        %2713 = vmatprep.subr.bf16.mxu0 0
        %2714 = vmatpush1.bf16.msra.mxu0 0
        %2715 = vmatprep.subr.bf16.mxu0 0
        %2716 = vmatpush1.bf16.msra.mxu0 0
        %2717 = vmatprep.subr.bf16.mxu0 0
        %2718 = vmatpush1.bf16.msra.mxu0 0
        %2719 = vmatprep.subr.bf16.mxu0 0
        %2720 = vmatpush1.bf16.msra.mxu0 0
        %2721 = vmatprep.subr.bf16.mxu0 0
        %2722 = vmatpush1.bf16.msra.mxu0 0
        %2723 = vmatprep.subr.bf16.mxu0 0
        %2724 = vmatpush1.bf16.msra.mxu0 0
        %2725 = vmatprep.subr.bf16.mxu0 0
        %2726 = vmatpush1.bf16.msra.mxu0 0
        %2727 = vmatprep.subr.bf16.mxu0 0
        %2728 = vmatpush1.bf16.msra.mxu0 0
        %2729 = vmatprep.mubr.bf16.mxu0 0
        %2730 = vmatmul.mubr.bf16.gmra.mrb[0].mxu0 %v2695
        %v2731 = vpop.f32.mrb[0].mxu0
        %v2732 = vadd.f32 0.0, %v2731
        %v2733 = vpop.f32.mrb[0].mxu0
        %v2734 = vpop.f32.mrb[0].mxu0
        %v2735 = vadd.f32 0.0, %v2734
        %v2736 = vpop.f32.mrb[0].mxu0
        %2737 = vdwg.mxu0
        %v2739 = vsel %vm2485, %v2601, 0
        %2741 = vmatprep.subr.bf16.mxu0 0
        %2742 = vmatpush1.bf16.msra.mxu0 %v2605
        %2743 = vmatprep.subr.bf16.mxu0 0
        %2744 = vmatpush1.bf16.msra.mxu0 0
        %2745 = vmatprep.subr.bf16.mxu0 0
        %2746 = vmatpush1.bf16.msra.mxu0 0
        %2747 = vmatprep.subr.bf16.mxu0 0
        %2748 = vmatpush1.bf16.msra.mxu0 0
        %2749 = vmatprep.subr.bf16.mxu0 0
        %2750 = vmatpush1.bf16.msra.mxu0 0
        %2751 = vmatprep.subr.bf16.mxu0 0
        %2752 = vmatpush1.bf16.msra.mxu0 0
        %2753 = vmatprep.subr.bf16.mxu0 0
        %2754 = vmatpush1.bf16.msra.mxu0 0
        %2755 = vmatprep.subr.bf16.mxu0 0
        %2756 = vmatpush1.bf16.msra.mxu0 0
        %2757 = vmatprep.subr.bf16.mxu0 0
        %2758 = vmatpush1.bf16.msra.mxu0 0
        %2759 = vmatprep.subr.bf16.mxu0 0
        %2760 = vmatpush1.bf16.msra.mxu0 0
        %2761 = vmatprep.subr.bf16.mxu0 0
        %2762 = vmatpush1.bf16.msra.mxu0 0
        %2763 = vmatprep.subr.bf16.mxu0 0
        %2764 = vmatpush1.bf16.msra.mxu0 0
        %2765 = vmatprep.subr.bf16.mxu0 0
        %2766 = vmatpush1.bf16.msra.mxu0 0
        %2767 = vmatprep.subr.bf16.mxu0 0
        %2768 = vmatpush1.bf16.msra.mxu0 0
        %2769 = vmatprep.subr.bf16.mxu0 0
        %2770 = vmatpush1.bf16.msra.mxu0 0
        %2771 = vmatprep.subr.bf16.mxu0 0
        %2772 = vmatpush1.bf16.msra.mxu0 0
        %2773 = vmatprep.mubr.bf16.mxu0 0
        %2774 = vmatmul.mubr.bf16.gmra.mrb[0].mxu0 %v2739
        %v2775 = vpop.f32.mrb[0].mxu0
        %v2776 = vadd.f32 0.0, %v2775
        %v2777 = vpop.f32.mrb[0].mxu0
        %v2778 = vpop.f32.mrb[0].mxu0
        %v2779 = vadd.f32 0.0, %v2778
        %v2780 = vpop.f32.mrb[0].mxu0
        %2781 = vdwg.mxu0
        %v2782 = vpack.c.bf16 %v2647, %v2644
        %v2783 = vpack.c.bf16 %v2691, %v2688
        %v2784 = vpack.c.bf16 %v2735, %v2732
        %v2785 = vpack.c.bf16 %v2779, %v2776
        %v2790 = vunpack.c.l.b16 %v850
        %v2791 = vunpack.c.l.b16 %v851
        %v2792 = vunpack.c.l.b16 %v852
        %v2793 = vunpack.c.l.b16 %v853
        %v2794 = vpack.c.b16 %v2791, %v2790
        %v2795 = vpack.c.b16 %v2793, %v2792
        %v2799 = vsel %vm2296, %v2782, 0
        %2801 = vmatprep.subr.bf16.mxu0 0
        %2802 = vmatpush1.bf16.msra.mxu0 %v2794
        %2803 = vmatprep.subr.bf16.mxu0 0
        %2804 = vmatpush1.bf16.msra.mxu0 %v2795
        %2805 = vmatprep.subr.bf16.mxu0 0
        %2806 = vmatpush1.bf16.msra.mxu0 0
        %2807 = vmatprep.subr.bf16.mxu0 0
        %2808 = vmatpush1.bf16.msra.mxu0 0
        %2809 = vmatprep.subr.bf16.mxu0 0
        %2810 = vmatpush1.bf16.msra.mxu0 0
        %2811 = vmatprep.subr.bf16.mxu0 0
        %2812 = vmatpush1.bf16.msra.mxu0 0
        %2813 = vmatprep.subr.bf16.mxu0 0
        %2814 = vmatpush1.bf16.msra.mxu0 0
        %2815 = vmatprep.subr.bf16.mxu0 0
        %2816 = vmatpush1.bf16.msra.mxu0 0
        %2817 = vmatprep.subr.bf16.mxu0 0
        %2818 = vmatpush1.bf16.msra.mxu0 0
        %2819 = vmatprep.subr.bf16.mxu0 0
        %2820 = vmatpush1.bf16.msra.mxu0 0
        %2821 = vmatprep.subr.bf16.mxu0 0
        %2822 = vmatpush1.bf16.msra.mxu0 0
        %2823 = vmatprep.subr.bf16.mxu0 0
        %2824 = vmatpush1.bf16.msra.mxu0 0
        %2825 = vmatprep.subr.bf16.mxu0 0
        %2826 = vmatpush1.bf16.msra.mxu0 0
        %2827 = vmatprep.subr.bf16.mxu0 0
        %2828 = vmatpush1.bf16.msra.mxu0 0
        %2829 = vmatprep.subr.bf16.mxu0 0
        %2830 = vmatpush1.bf16.msra.mxu0 0
        %2831 = vmatprep.subr.bf16.mxu0 0
        %2832 = vmatpush1.bf16.msra.mxu0 0
        %2833 = vmatprep.mubr.bf16.mxu0 0
        %2834 = vmatmul.mubr.bf16.gmra.mrb[0].mxu0 %v2799
        %v2835 = vpop.f32.mrb[0].mxu0
        %v2836 = vadd.f32 0.0, %v2835
        %v2837 = vpop.f32.mrb[0].mxu0
        %v2838 = vpop.f32.mrb[0].mxu0
        %v2839 = vadd.f32 0.0, %v2838
        %v2840 = vpop.f32.mrb[0].mxu0
        %2841 = vdwg.mxu0
        %v2846 = vunpack.c.l.b16 %v854
        %v2847 = vunpack.c.l.b16 %v855
        %v2848 = vunpack.c.l.b16 %v856
        %v2849 = vunpack.c.l.b16 %v857
        %v2850 = vpack.c.b16 %v2847, %v2846
        %v2851 = vpack.c.b16 %v2849, %v2848
        %v2855 = vsel %vm2296, %v2783, 0
        %2857 = vmatprep.subr.bf16.mxu0 0
        %2858 = vmatpush1.bf16.msra.mxu0 %v2850
        %2859 = vmatprep.subr.bf16.mxu0 0
        %2860 = vmatpush1.bf16.msra.mxu0 %v2851
        %2861 = vmatprep.subr.bf16.mxu0 0
        %2862 = vmatpush1.bf16.msra.mxu0 0
        %2863 = vmatprep.subr.bf16.mxu0 0
        %2864 = vmatpush1.bf16.msra.mxu0 0
        %2865 = vmatprep.subr.bf16.mxu0 0
        %2866 = vmatpush1.bf16.msra.mxu0 0
        %2867 = vmatprep.subr.bf16.mxu0 0
        %2868 = vmatpush1.bf16.msra.mxu0 0
        %2869 = vmatprep.subr.bf16.mxu0 0
        %2870 = vmatpush1.bf16.msra.mxu0 0
        %2871 = vmatprep.subr.bf16.mxu0 0
        %2872 = vmatpush1.bf16.msra.mxu0 0
        %2873 = vmatprep.subr.bf16.mxu0 0
        %2874 = vmatpush1.bf16.msra.mxu0 0
        %2875 = vmatprep.subr.bf16.mxu0 0
        %2876 = vmatpush1.bf16.msra.mxu0 0
        %2877 = vmatprep.subr.bf16.mxu0 0
        %2878 = vmatpush1.bf16.msra.mxu0 0
        %2879 = vmatprep.subr.bf16.mxu0 0
        %2880 = vmatpush1.bf16.msra.mxu0 0
        %2881 = vmatprep.subr.bf16.mxu0 0
        %2882 = vmatpush1.bf16.msra.mxu0 0
        %2883 = vmatprep.subr.bf16.mxu0 0
        %2884 = vmatpush1.bf16.msra.mxu0 0
        %2885 = vmatprep.subr.bf16.mxu0 0
        %2886 = vmatpush1.bf16.msra.mxu0 0
        %2887 = vmatprep.subr.bf16.mxu0 0
        %2888 = vmatpush1.bf16.msra.mxu0 0
        %2889 = vmatprep.mubr.bf16.mxu0 0
        %2890 = vmatmul.mubr.bf16.gmra.mrb[0].mxu0 %v2855
        %v2891 = vpop.f32.mrb[0].mxu0
        %v2892 = vadd.f32 0.0, %v2891
        %v2893 = vpop.f32.mrb[0].mxu0
        %v2894 = vpop.f32.mrb[0].mxu0
        %v2895 = vadd.f32 0.0, %v2894
        %v2896 = vpop.f32.mrb[0].mxu0
        %2897 = vdwg.mxu0
        %v2902 = vunpack.c.l.b16 %v858
        %v2903 = vunpack.c.l.b16 %v859
        %v2904 = vunpack.c.l.b16 %v860
        %v2905 = vunpack.c.l.b16 %v861
        %v2906 = vpack.c.b16 %v2903, %v2902
        %v2907 = vpack.c.b16 %v2905, %v2904
        %v2911 = vsel %vm2296, %v2784, 0
        %2913 = vmatprep.subr.bf16.mxu0 0
        %2914 = vmatpush1.bf16.msra.mxu0 %v2906
        %2915 = vmatprep.subr.bf16.mxu0 0
        %2916 = vmatpush1.bf16.msra.mxu0 %v2907
        %2917 = vmatprep.subr.bf16.mxu0 0
        %2918 = vmatpush1.bf16.msra.mxu0 0
        %2919 = vmatprep.subr.bf16.mxu0 0
        %2920 = vmatpush1.bf16.msra.mxu0 0
        %2921 = vmatprep.subr.bf16.mxu0 0
        %2922 = vmatpush1.bf16.msra.mxu0 0
        %2923 = vmatprep.subr.bf16.mxu0 0
        %2924 = vmatpush1.bf16.msra.mxu0 0
        %2925 = vmatprep.subr.bf16.mxu0 0
        %2926 = vmatpush1.bf16.msra.mxu0 0
        %2927 = vmatprep.subr.bf16.mxu0 0
        %2928 = vmatpush1.bf16.msra.mxu0 0
        %2929 = vmatprep.subr.bf16.mxu0 0
        %2930 = vmatpush1.bf16.msra.mxu0 0
        %2931 = vmatprep.subr.bf16.mxu0 0
        %2932 = vmatpush1.bf16.msra.mxu0 0
        %2933 = vmatprep.subr.bf16.mxu0 0
        %2934 = vmatpush1.bf16.msra.mxu0 0
        %2935 = vmatprep.subr.bf16.mxu0 0
        %2936 = vmatpush1.bf16.msra.mxu0 0
        %2937 = vmatprep.subr.bf16.mxu0 0
        %2938 = vmatpush1.bf16.msra.mxu0 0
        %2939 = vmatprep.subr.bf16.mxu0 0
        %2940 = vmatpush1.bf16.msra.mxu0 0
        %2941 = vmatprep.subr.bf16.mxu0 0
        %2942 = vmatpush1.bf16.msra.mxu0 0
        %2943 = vmatprep.subr.bf16.mxu0 0
        %2944 = vmatpush1.bf16.msra.mxu0 0
        %2945 = vmatprep.mubr.bf16.mxu0 0
        %2946 = vmatmul.mubr.bf16.gmra.mrb[0].mxu0 %v2911
        %v2947 = vpop.f32.mrb[0].mxu0
        %v2948 = vadd.f32 0.0, %v2947
        %v2949 = vpop.f32.mrb[0].mxu0
        %v2950 = vpop.f32.mrb[0].mxu0
        %v2951 = vadd.f32 0.0, %v2950
        %v2952 = vpop.f32.mrb[0].mxu0
        %2953 = vdwg.mxu0
        %v2958 = vunpack.c.l.b16 %v862
        %v2959 = vunpack.c.l.b16 %v863
        %v2960 = vunpack.c.l.b16 %v864
        %v2961 = vunpack.c.l.b16 %v865
        %v2962 = vpack.c.b16 %v2959, %v2958
        %v2963 = vpack.c.b16 %v2961, %v2960
        %v2967 = vsel %vm2296, %v2785, 0
        %2969 = vmatprep.subr.bf16.mxu0 0
        %2970 = vmatpush1.bf16.msra.mxu0 %v2962
        %2971 = vmatprep.subr.bf16.mxu0 0
        %2972 = vmatpush1.bf16.msra.mxu0 %v2963
        %2973 = vmatprep.subr.bf16.mxu0 0
        %2974 = vmatpush1.bf16.msra.mxu0 0
        %2975 = vmatprep.subr.bf16.mxu0 0
        %2976 = vmatpush1.bf16.msra.mxu0 0
        %2977 = vmatprep.subr.bf16.mxu0 0
        %2978 = vmatpush1.bf16.msra.mxu0 0
        %2979 = vmatprep.subr.bf16.mxu0 0
        %2980 = vmatpush1.bf16.msra.mxu0 0
        %2981 = vmatprep.subr.bf16.mxu0 0
        %2982 = vmatpush1.bf16.msra.mxu0 0
        %2983 = vmatprep.subr.bf16.mxu0 0
        %2984 = vmatpush1.bf16.msra.mxu0 0
        %2985 = vmatprep.subr.bf16.mxu0 0
        %2986 = vmatpush1.bf16.msra.mxu0 0
        %2987 = vmatprep.subr.bf16.mxu0 0
        %2988 = vmatpush1.bf16.msra.mxu0 0
        %2989 = vmatprep.subr.bf16.mxu0 0
        %2990 = vmatpush1.bf16.msra.mxu0 0
        %2991 = vmatprep.subr.bf16.mxu0 0
        %2992 = vmatpush1.bf16.msra.mxu0 0
        %2993 = vmatprep.subr.bf16.mxu0 0
        %2994 = vmatpush1.bf16.msra.mxu0 0
        %2995 = vmatprep.subr.bf16.mxu0 0
        %2996 = vmatpush1.bf16.msra.mxu0 0
        %2997 = vmatprep.subr.bf16.mxu0 0
        %2998 = vmatpush1.bf16.msra.mxu0 0
        %2999 = vmatprep.subr.bf16.mxu0 0
        %3000 = vmatpush1.bf16.msra.mxu0 0
        %3001 = vmatprep.mubr.bf16.mxu0 0
        %3002 = vmatmul.mubr.bf16.gmra.mrb[0].mxu0 %v2967
        %v3003 = vpop.f32.mrb[0].mxu0
        %v3004 = vadd.f32 0.0, %v3003
        %v3005 = vpop.f32.mrb[0].mxu0
        %v3006 = vpop.f32.mrb[0].mxu0
        %v3007 = vadd.f32 0.0, %v3006
        %v3008 = vpop.f32.mrb[0].mxu0
        %3009 = vdwg.mxu0
        %v3010 = vadd.f32 %v2836, %v2892
        %v3011 = vadd.f32 %v3010, %v2948
        %v3012 = vadd.f32 %v3011, %v3004
        %v3013 = vadd.f32 %v2839, %v2895
        %v3014 = vadd.f32 %v3013, %v2951
        %v3015 = vadd.f32 %v3014, %v3007
        %v3017 = vlaneseq
        %v3018 = vshrl.u32 %v3017, 7
        %v3019 = vsub.s32 0, %v3018
        %v3020 = vrot.slane %v866, %v3019
        %v3022 = vadd.f32 %v3012, %v3020
        %v3023 = vadd.f32 %v3015, %v3020
        %v3024 = vadd.f32 %v1178, %v3022
        %v3025 = vadd.f32 %v1179, %v3023
        %3026 = vadd.xlane.f32.xlu0 %v3024
        %v3027 = vpop.xlane.xlu0 %3026
        %3028 = vadd.xlane.f32.xlu0 %v3025
        %v3029 = vpop.xlane.xlu0 %3028
        %v3030 = vmul.f32 %v3027, %v1184
        %v3031 = vmul.f32 %v3029, %v1184
        %v3032 = vsub.f32 %v3024, %v3030
        %v3033 = vsub.f32 %v3025, %v3031
        %v3034 = vmul.f32 %v3032, %v3032
        %v3035 = vmul.f32 %v3033, %v3033
        %3036 = vadd.xlane.f32.xlu0 %v3034
        %v3037 = vpop.xlane.xlu0 %3036
        %3038 = vadd.xlane.f32.xlu0 %v3035
        %v3039 = vpop.xlane.xlu0 %3038
        %v3040 = vmul.f32 %v3037, %v1184
        %v3041 = vmul.f32 %v3039, %v1184
        %v3042 = vadd.f32 %v3040, 1e-05
        %v3043 = vadd.f32 %v3041, 1e-05
        %v3044 = vrsqrt.pop %v3042
        %v3045 = vrsqrt.pop %v3043
        %v3046 = vmul.f32 %v3032, %v3044
        %v3047 = vmul.f32 %v3033, %v3045
        %v3049 = vlaneseq
        %v3050 = vshrl.u32 %v3049, 7
        %v3051 = vsub.s32 0, %v3050
        %v3052 = vrot.slane %v867, %v3051
        %v3054 = vmul.f32 %v3046, %v3052
        %v3055 = vmul.f32 %v3047, %v3052
        %v3057 = vlaneseq
        %v3058 = vshrl.u32 %v3057, 7
        %v3059 = vsub.s32 0, %v3058
        %v3060 = vrot.slane %v868, %v3059
        %v3062 = vadd.f32 %v3054, %v3060
        %v3063 = vadd.f32 %v3055, %v3060
        %v3064 = vpack.c.bf16 %v3063, %v3062
        %v3081 = vunpack.c.l.b16 %v869
        %v3082 = vunpack.c.l.b16 %v870
        %v3083 = vunpack.c.l.b16 %v871
        %v3084 = vunpack.c.l.b16 %v872
        %v3085 = vunpack.c.l.b16 %v873
        %v3086 = vunpack.c.l.b16 %v874
        %v3087 = vunpack.c.l.b16 %v875
        %v3088 = vunpack.c.l.b16 %v876
        %v3089 = vunpack.c.l.b16 %v877
        %v3090 = vunpack.c.l.b16 %v878
        %v3091 = vunpack.c.l.b16 %v879
        %v3092 = vunpack.c.l.b16 %v880
        %v3093 = vunpack.c.l.b16 %v881
        %v3094 = vunpack.c.l.b16 %v882
        %v3095 = vunpack.c.l.b16 %v883
        %v3096 = vunpack.c.l.b16 %v884
        %v3097 = vpack.c.b16 %v3082, %v3081
        %v3098 = vpack.c.b16 %v3084, %v3083
        %v3099 = vpack.c.b16 %v3086, %v3085
        %v3100 = vpack.c.b16 %v3088, %v3087
        %v3101 = vpack.c.b16 %v3090, %v3089
        %v3102 = vpack.c.b16 %v3092, %v3091
        %v3103 = vpack.c.b16 %v3094, %v3093
        %v3104 = vpack.c.b16 %v3096, %v3095
        %3113 = vmatprep.subr.bf16.mxu0 0
        %3114 = vmatpush1.bf16.msra.mxu0 %v3097
        %3115 = vmatprep.subr.bf16.mxu0 0
        %3116 = vmatpush1.bf16.msra.mxu0 %v3098
        %3117 = vmatprep.subr.bf16.mxu0 0
        %3118 = vmatpush1.bf16.msra.mxu0 %v3099
        %3119 = vmatprep.subr.bf16.mxu0 0
        %3120 = vmatpush1.bf16.msra.mxu0 %v3100
        %3121 = vmatprep.subr.bf16.mxu0 0
        %3122 = vmatpush1.bf16.msra.mxu0 %v3101
        %3123 = vmatprep.subr.bf16.mxu0 0
        %3124 = vmatpush1.bf16.msra.mxu0 %v3102
        %3125 = vmatprep.subr.bf16.mxu0 0
        %3126 = vmatpush1.bf16.msra.mxu0 %v3103
        %3127 = vmatprep.subr.bf16.mxu0 0
        %3128 = vmatpush1.bf16.msra.mxu0 %v3104
        %3129 = vmatprep.subr.bf16.mxu0 0
        %3130 = vmatpush1.bf16.msra.mxu0 0
        %3131 = vmatprep.subr.bf16.mxu0 0
        %3132 = vmatpush1.bf16.msra.mxu0 0
        %3133 = vmatprep.subr.bf16.mxu0 0
        %3134 = vmatpush1.bf16.msra.mxu0 0
        %3135 = vmatprep.subr.bf16.mxu0 0
        %3136 = vmatpush1.bf16.msra.mxu0 0
        %3137 = vmatprep.subr.bf16.mxu0 0
        %3138 = vmatpush1.bf16.msra.mxu0 0
        %3139 = vmatprep.subr.bf16.mxu0 0
        %3140 = vmatpush1.bf16.msra.mxu0 0
        %3141 = vmatprep.subr.bf16.mxu0 0
        %3142 = vmatpush1.bf16.msra.mxu0 0
        %3143 = vmatprep.subr.bf16.mxu0 0
        %3144 = vmatpush1.bf16.msra.mxu0 0
        %3145 = vmatprep.mubr.bf16.mxu0 0
        %3146 = vmatmul.mubr.bf16.gmra.mrb[0].mxu0 %v3064
        %v3147 = vpop.f32.mrb[0].mxu0
        %v3148 = vadd.f32 0.0, %v3147
        %v3149 = vpop.f32.mrb[0].mxu0
        %v3150 = vpop.f32.mrb[0].mxu0
        %v3151 = vadd.f32 0.0, %v3150
        %v3152 = vpop.f32.mrb[0].mxu0
        %3153 = vdwg.mxu0
        %v3170 = vunpack.c.l.b16 %v885
        %v3171 = vunpack.c.l.b16 %v886
        %v3172 = vunpack.c.l.b16 %v887
        %v3173 = vunpack.c.l.b16 %v888
        %v3174 = vunpack.c.l.b16 %v889
        %v3175 = vunpack.c.l.b16 %v890
        %v3176 = vunpack.c.l.b16 %v891
        %v3177 = vunpack.c.l.b16 %v892
        %v3178 = vunpack.c.l.b16 %v893
        %v3179 = vunpack.c.l.b16 %v894
        %v3180 = vunpack.c.l.b16 %v895
        %v3181 = vunpack.c.l.b16 %v896
        %v3182 = vunpack.c.l.b16 %v897
        %v3183 = vunpack.c.l.b16 %v898
        %v3184 = vunpack.c.l.b16 %v899
        %v3185 = vunpack.c.l.b16 %v900
        %v3186 = vpack.c.b16 %v3171, %v3170
        %v3187 = vpack.c.b16 %v3173, %v3172
        %v3188 = vpack.c.b16 %v3175, %v3174
        %v3189 = vpack.c.b16 %v3177, %v3176
        %v3190 = vpack.c.b16 %v3179, %v3178
        %v3191 = vpack.c.b16 %v3181, %v3180
        %v3192 = vpack.c.b16 %v3183, %v3182
        %v3193 = vpack.c.b16 %v3185, %v3184
        %3202 = vmatprep.subr.bf16.mxu0 0
        %3203 = vmatpush1.bf16.msra.mxu0 %v3186
        %3204 = vmatprep.subr.bf16.mxu0 0
        %3205 = vmatpush1.bf16.msra.mxu0 %v3187
        %3206 = vmatprep.subr.bf16.mxu0 0
        %3207 = vmatpush1.bf16.msra.mxu0 %v3188
        %3208 = vmatprep.subr.bf16.mxu0 0
        %3209 = vmatpush1.bf16.msra.mxu0 %v3189
        %3210 = vmatprep.subr.bf16.mxu0 0
        %3211 = vmatpush1.bf16.msra.mxu0 %v3190
        %3212 = vmatprep.subr.bf16.mxu0 0
        %3213 = vmatpush1.bf16.msra.mxu0 %v3191
        %3214 = vmatprep.subr.bf16.mxu0 0
        %3215 = vmatpush1.bf16.msra.mxu0 %v3192
        %3216 = vmatprep.subr.bf16.mxu0 0
        %3217 = vmatpush1.bf16.msra.mxu0 %v3193
        %3218 = vmatprep.subr.bf16.mxu0 0
        %3219 = vmatpush1.bf16.msra.mxu0 0
        %3220 = vmatprep.subr.bf16.mxu0 0
        %3221 = vmatpush1.bf16.msra.mxu0 0
        %3222 = vmatprep.subr.bf16.mxu0 0
        %3223 = vmatpush1.bf16.msra.mxu0 0
        %3224 = vmatprep.subr.bf16.mxu0 0
        %3225 = vmatpush1.bf16.msra.mxu0 0
        %3226 = vmatprep.subr.bf16.mxu0 0
        %3227 = vmatpush1.bf16.msra.mxu0 0
        %3228 = vmatprep.subr.bf16.mxu0 0
        %3229 = vmatpush1.bf16.msra.mxu0 0
        %3230 = vmatprep.subr.bf16.mxu0 0
        %3231 = vmatpush1.bf16.msra.mxu0 0
        %3232 = vmatprep.subr.bf16.mxu0 0
        %3233 = vmatpush1.bf16.msra.mxu0 0
        %3234 = vmatprep.mubr.bf16.mxu0 0
        %3235 = vmatmul.mubr.bf16.gmra.mrb[0].mxu0 %v3064
        %v3236 = vpop.f32.mrb[0].mxu0
        %v3237 = vadd.f32 0.0, %v3236
        %v3238 = vpop.f32.mrb[0].mxu0
        %v3239 = vpop.f32.mrb[0].mxu0
        %v3240 = vadd.f32 0.0, %v3239
        %v3241 = vpop.f32.mrb[0].mxu0
        %3242 = vdwg.mxu0
        %v3259 = vunpack.c.l.b16 %v901
        %v3260 = vunpack.c.l.b16 %v902
        %v3261 = vunpack.c.l.b16 %v903
        %v3262 = vunpack.c.l.b16 %v904
        %v3263 = vunpack.c.l.b16 %v905
        %v3264 = vunpack.c.l.b16 %v906
        %v3265 = vunpack.c.l.b16 %v907
        %v3266 = vunpack.c.l.b16 %v908
        %v3267 = vunpack.c.l.b16 %v909
        %v3268 = vunpack.c.l.b16 %v910
        %v3269 = vunpack.c.l.b16 %v911
        %v3270 = vunpack.c.l.b16 %v912
        %v3271 = vunpack.c.l.b16 %v913
        %v3272 = vunpack.c.l.b16 %v914
        %v3273 = vunpack.c.l.b16 %v915
        %v3274 = vunpack.c.l.b16 %v916
        %v3275 = vpack.c.b16 %v3260, %v3259
        %v3276 = vpack.c.b16 %v3262, %v3261
        %v3277 = vpack.c.b16 %v3264, %v3263
        %v3278 = vpack.c.b16 %v3266, %v3265
        %v3279 = vpack.c.b16 %v3268, %v3267
        %v3280 = vpack.c.b16 %v3270, %v3269
        %v3281 = vpack.c.b16 %v3272, %v3271
        %v3282 = vpack.c.b16 %v3274, %v3273
        %3291 = vmatprep.subr.bf16.mxu0 0
        %3292 = vmatpush1.bf16.msra.mxu0 %v3275
        %3293 = vmatprep.subr.bf16.mxu0 0
        %3294 = vmatpush1.bf16.msra.mxu0 %v3276
        %3295 = vmatprep.subr.bf16.mxu0 0
        %3296 = vmatpush1.bf16.msra.mxu0 %v3277
        %3297 = vmatprep.subr.bf16.mxu0 0
        %3298 = vmatpush1.bf16.msra.mxu0 %v3278
        %3299 = vmatprep.subr.bf16.mxu0 0
        %3300 = vmatpush1.bf16.msra.mxu0 %v3279
        %3301 = vmatprep.subr.bf16.mxu0 0
        %3302 = vmatpush1.bf16.msra.mxu0 %v3280
        %3303 = vmatprep.subr.bf16.mxu0 0
        %3304 = vmatpush1.bf16.msra.mxu0 %v3281
        %3305 = vmatprep.subr.bf16.mxu0 0
        %3306 = vmatpush1.bf16.msra.mxu0 %v3282
        %3307 = vmatprep.subr.bf16.mxu0 0
        %3308 = vmatpush1.bf16.msra.mxu0 0
        %3309 = vmatprep.subr.bf16.mxu0 0
        %3310 = vmatpush1.bf16.msra.mxu0 0
        %3311 = vmatprep.subr.bf16.mxu0 0
        %3312 = vmatpush1.bf16.msra.mxu0 0
        %3313 = vmatprep.subr.bf16.mxu0 0
        %3314 = vmatpush1.bf16.msra.mxu0 0
        %3315 = vmatprep.subr.bf16.mxu0 0
        %3316 = vmatpush1.bf16.msra.mxu0 0
        %3317 = vmatprep.subr.bf16.mxu0 0
        %3318 = vmatpush1.bf16.msra.mxu0 0
        %3319 = vmatprep.subr.bf16.mxu0 0
        %3320 = vmatpush1.bf16.msra.mxu0 0
        %3321 = vmatprep.subr.bf16.mxu0 0
        %3322 = vmatpush1.bf16.msra.mxu0 0
        %3323 = vmatprep.mubr.bf16.mxu0 0
        %3324 = vmatmul.mubr.bf16.gmra.mrb[0].mxu0 %v3064
        %v3325 = vpop.f32.mrb[0].mxu0
        %v3326 = vadd.f32 0.0, %v3325
        %v3327 = vpop.f32.mrb[0].mxu0
        %v3328 = vpop.f32.mrb[0].mxu0
        %v3329 = vadd.f32 0.0, %v3328
        %v3330 = vpop.f32.mrb[0].mxu0
        %3331 = vdwg.mxu0
        %v3348 = vunpack.c.l.b16 %v917
        %v3349 = vunpack.c.l.b16 %v918
        %v3350 = vunpack.c.l.b16 %v919
        %v3351 = vunpack.c.l.b16 %v920
        %v3352 = vunpack.c.l.b16 %v921
        %v3353 = vunpack.c.l.b16 %v922
        %v3354 = vunpack.c.l.b16 %v923
        %v3355 = vunpack.c.l.b16 %v924
        %v3356 = vunpack.c.l.b16 %v925
        %v3357 = vunpack.c.l.b16 %v926
        %v3358 = vunpack.c.l.b16 %v927
        %v3359 = vunpack.c.l.b16 %v928
        %v3360 = vunpack.c.l.b16 %v929
        %v3361 = vunpack.c.l.b16 %v930
        %v3362 = vunpack.c.l.b16 %v931
        %v3363 = vunpack.c.l.b16 %v932
        %v3364 = vpack.c.b16 %v3349, %v3348
        %v3365 = vpack.c.b16 %v3351, %v3350
        %v3366 = vpack.c.b16 %v3353, %v3352
        %v3367 = vpack.c.b16 %v3355, %v3354
        %v3368 = vpack.c.b16 %v3357, %v3356
        %v3369 = vpack.c.b16 %v3359, %v3358
        %v3370 = vpack.c.b16 %v3361, %v3360
        %v3371 = vpack.c.b16 %v3363, %v3362
        %3380 = vmatprep.subr.bf16.mxu0 0
        %3381 = vmatpush1.bf16.msra.mxu0 %v3364
        %3382 = vmatprep.subr.bf16.mxu0 0
        %3383 = vmatpush1.bf16.msra.mxu0 %v3365
        %3384 = vmatprep.subr.bf16.mxu0 0
        %3385 = vmatpush1.bf16.msra.mxu0 %v3366
        %3386 = vmatprep.subr.bf16.mxu0 0
        %3387 = vmatpush1.bf16.msra.mxu0 %v3367
        %3388 = vmatprep.subr.bf16.mxu0 0
        %3389 = vmatpush1.bf16.msra.mxu0 %v3368
        %3390 = vmatprep.subr.bf16.mxu0 0
        %3391 = vmatpush1.bf16.msra.mxu0 %v3369
        %3392 = vmatprep.subr.bf16.mxu0 0
        %3393 = vmatpush1.bf16.msra.mxu0 %v3370
        %3394 = vmatprep.subr.bf16.mxu0 0
        %3395 = vmatpush1.bf16.msra.mxu0 %v3371
        %3396 = vmatprep.subr.bf16.mxu0 0
        %3397 = vmatpush1.bf16.msra.mxu0 0
        %3398 = vmatprep.subr.bf16.mxu0 0
        %3399 = vmatpush1.bf16.msra.mxu0 0
        %3400 = vmatprep.subr.bf16.mxu0 0
        %3401 = vmatpush1.bf16.msra.mxu0 0
        %3402 = vmatprep.subr.bf16.mxu0 0
        %3403 = vmatpush1.bf16.msra.mxu0 0
        %3404 = vmatprep.subr.bf16.mxu0 0
        %3405 = vmatpush1.bf16.msra.mxu0 0
        %3406 = vmatprep.subr.bf16.mxu0 0
        %3407 = vmatpush1.bf16.msra.mxu0 0
        %3408 = vmatprep.subr.bf16.mxu0 0
        %3409 = vmatpush1.bf16.msra.mxu0 0
        %3410 = vmatprep.subr.bf16.mxu0 0
        %3411 = vmatpush1.bf16.msra.mxu0 0
        %3412 = vmatprep.mubr.bf16.mxu0 0
        %3413 = vmatmul.mubr.bf16.gmra.mrb[0].mxu0 %v3064
        %v3414 = vpop.f32.mrb[0].mxu0
        %v3415 = vadd.f32 0.0, %v3414
        %v3416 = vpop.f32.mrb[0].mxu0
        %v3417 = vpop.f32.mrb[0].mxu0
        %v3418 = vadd.f32 0.0, %v3417
        %v3419 = vpop.f32.mrb[0].mxu0
        %3420 = vdwg.mxu0
        %v3437 = vunpack.c.l.b16 %v933
        %v3438 = vunpack.c.l.b16 %v934
        %v3439 = vunpack.c.l.b16 %v935
        %v3440 = vunpack.c.l.b16 %v936
        %v3441 = vunpack.c.l.b16 %v937
        %v3442 = vunpack.c.l.b16 %v938
        %v3443 = vunpack.c.l.b16 %v939
        %v3444 = vunpack.c.l.b16 %v940
        %v3445 = vunpack.c.l.b16 %v941
        %v3446 = vunpack.c.l.b16 %v942
        %v3447 = vunpack.c.l.b16 %v943
        %v3448 = vunpack.c.l.b16 %v944
        %v3449 = vunpack.c.l.b16 %v945
        %v3450 = vunpack.c.l.b16 %v946
        %v3451 = vunpack.c.l.b16 %v947
        %v3452 = vunpack.c.l.b16 %v948
        %v3453 = vpack.c.b16 %v3438, %v3437
        %v3454 = vpack.c.b16 %v3440, %v3439
        %v3455 = vpack.c.b16 %v3442, %v3441
        %v3456 = vpack.c.b16 %v3444, %v3443
        %v3457 = vpack.c.b16 %v3446, %v3445
        %v3458 = vpack.c.b16 %v3448, %v3447
        %v3459 = vpack.c.b16 %v3450, %v3449
        %v3460 = vpack.c.b16 %v3452, %v3451
        %3469 = vmatprep.subr.bf16.mxu0 0
        %3470 = vmatpush1.bf16.msra.mxu0 %v3453
        %3471 = vmatprep.subr.bf16.mxu0 0
        %3472 = vmatpush1.bf16.msra.mxu0 %v3454
        %3473 = vmatprep.subr.bf16.mxu0 0
        %3474 = vmatpush1.bf16.msra.mxu0 %v3455
        %3475 = vmatprep.subr.bf16.mxu0 0
        %3476 = vmatpush1.bf16.msra.mxu0 %v3456
        %3477 = vmatprep.subr.bf16.mxu0 0
        %3478 = vmatpush1.bf16.msra.mxu0 %v3457
        %3479 = vmatprep.subr.bf16.mxu0 0
        %3480 = vmatpush1.bf16.msra.mxu0 %v3458
        %3481 = vmatprep.subr.bf16.mxu0 0
        %3482 = vmatpush1.bf16.msra.mxu0 %v3459
        %3483 = vmatprep.subr.bf16.mxu0 0
        %3484 = vmatpush1.bf16.msra.mxu0 %v3460
        %3485 = vmatprep.subr.bf16.mxu0 0
        %3486 = vmatpush1.bf16.msra.mxu0 0
        %3487 = vmatprep.subr.bf16.mxu0 0
        %3488 = vmatpush1.bf16.msra.mxu0 0
        %3489 = vmatprep.subr.bf16.mxu0 0
        %3490 = vmatpush1.bf16.msra.mxu0 0
        %3491 = vmatprep.subr.bf16.mxu0 0
        %3492 = vmatpush1.bf16.msra.mxu0 0
        %3493 = vmatprep.subr.bf16.mxu0 0
        %3494 = vmatpush1.bf16.msra.mxu0 0
        %3495 = vmatprep.subr.bf16.mxu0 0
        %3496 = vmatpush1.bf16.msra.mxu0 0
        %3497 = vmatprep.subr.bf16.mxu0 0
        %3498 = vmatpush1.bf16.msra.mxu0 0
        %3499 = vmatprep.subr.bf16.mxu0 0
        %3500 = vmatpush1.bf16.msra.mxu0 0
        %3501 = vmatprep.mubr.bf16.mxu0 0
        %3502 = vmatmul.mubr.bf16.gmra.mrb[0].mxu0 %v3064
        %v3503 = vpop.f32.mrb[0].mxu0
        %v3504 = vadd.f32 0.0, %v3503
        %v3505 = vpop.f32.mrb[0].mxu0
        %v3506 = vpop.f32.mrb[0].mxu0
        %v3507 = vadd.f32 0.0, %v3506
        %v3508 = vpop.f32.mrb[0].mxu0
        %3509 = vdwg.mxu0
        %v3526 = vunpack.c.l.b16 %v949
        %v3527 = vunpack.c.l.b16 %v950
        %v3528 = vunpack.c.l.b16 %v951
        %v3529 = vunpack.c.l.b16 %v952
        %v3530 = vunpack.c.l.b16 %v953
        %v3531 = vunpack.c.l.b16 %v954
        %v3532 = vunpack.c.l.b16 %v955
        %v3533 = vunpack.c.l.b16 %v956
        %v3534 = vunpack.c.l.b16 %v957
        %v3535 = vunpack.c.l.b16 %v958
        %v3536 = vunpack.c.l.b16 %v959
        %v3537 = vunpack.c.l.b16 %v960
        %v3538 = vunpack.c.l.b16 %v961
        %v3539 = vunpack.c.l.b16 %v962
        %v3540 = vunpack.c.l.b16 %v963
        %v3541 = vunpack.c.l.b16 %v964
        %v3542 = vpack.c.b16 %v3527, %v3526
        %v3543 = vpack.c.b16 %v3529, %v3528
        %v3544 = vpack.c.b16 %v3531, %v3530
        %v3545 = vpack.c.b16 %v3533, %v3532
        %v3546 = vpack.c.b16 %v3535, %v3534
        %v3547 = vpack.c.b16 %v3537, %v3536
        %v3548 = vpack.c.b16 %v3539, %v3538
        %v3549 = vpack.c.b16 %v3541, %v3540
        %3558 = vmatprep.subr.bf16.mxu0 0
        %3559 = vmatpush1.bf16.msra.mxu0 %v3542
        %3560 = vmatprep.subr.bf16.mxu0 0
        %3561 = vmatpush1.bf16.msra.mxu0 %v3543
        %3562 = vmatprep.subr.bf16.mxu0 0
        %3563 = vmatpush1.bf16.msra.mxu0 %v3544
        %3564 = vmatprep.subr.bf16.mxu0 0
        %3565 = vmatpush1.bf16.msra.mxu0 %v3545
        %3566 = vmatprep.subr.bf16.mxu0 0
        %3567 = vmatpush1.bf16.msra.mxu0 %v3546
        %3568 = vmatprep.subr.bf16.mxu0 0
        %3569 = vmatpush1.bf16.msra.mxu0 %v3547
        %3570 = vmatprep.subr.bf16.mxu0 0
        %3571 = vmatpush1.bf16.msra.mxu0 %v3548
        %3572 = vmatprep.subr.bf16.mxu0 0
        %3573 = vmatpush1.bf16.msra.mxu0 %v3549
        %3574 = vmatprep.subr.bf16.mxu0 0
        %3575 = vmatpush1.bf16.msra.mxu0 0
        %3576 = vmatprep.subr.bf16.mxu0 0
        %3577 = vmatpush1.bf16.msra.mxu0 0
        %3578 = vmatprep.subr.bf16.mxu0 0
        %3579 = vmatpush1.bf16.msra.mxu0 0
        %3580 = vmatprep.subr.bf16.mxu0 0
        %3581 = vmatpush1.bf16.msra.mxu0 0
        %3582 = vmatprep.subr.bf16.mxu0 0
        %3583 = vmatpush1.bf16.msra.mxu0 0
        %3584 = vmatprep.subr.bf16.mxu0 0
        %3585 = vmatpush1.bf16.msra.mxu0 0
        %3586 = vmatprep.subr.bf16.mxu0 0
        %3587 = vmatpush1.bf16.msra.mxu0 0
        %3588 = vmatprep.subr.bf16.mxu0 0
        %3589 = vmatpush1.bf16.msra.mxu0 0
        %3590 = vmatprep.mubr.bf16.mxu0 0
        %3591 = vmatmul.mubr.bf16.gmra.mrb[0].mxu0 %v3064
        %v3592 = vpop.f32.mrb[0].mxu0
        %v3593 = vadd.f32 0.0, %v3592
        %v3594 = vpop.f32.mrb[0].mxu0
        %v3595 = vpop.f32.mrb[0].mxu0
        %v3596 = vadd.f32 0.0, %v3595
        %v3597 = vpop.f32.mrb[0].mxu0
        %3598 = vdwg.mxu0
        %v3615 = vunpack.c.l.b16 %v965
        %v3616 = vunpack.c.l.b16 %v966
        %v3617 = vunpack.c.l.b16 %v967
        %v3618 = vunpack.c.l.b16 %v968
        %v3619 = vunpack.c.l.b16 %v969
        %v3620 = vunpack.c.l.b16 %v970
        %v3621 = vunpack.c.l.b16 %v971
        %v3622 = vunpack.c.l.b16 %v972
        %v3623 = vunpack.c.l.b16 %v973
        %v3624 = vunpack.c.l.b16 %v974
        %v3625 = vunpack.c.l.b16 %v975
        %v3626 = vunpack.c.l.b16 %v976
        %v3627 = vunpack.c.l.b16 %v977
        %v3628 = vunpack.c.l.b16 %v978
        %v3629 = vunpack.c.l.b16 %v979
        %v3630 = vunpack.c.l.b16 %v980
        %v3631 = vpack.c.b16 %v3616, %v3615
        %v3632 = vpack.c.b16 %v3618, %v3617
        %v3633 = vpack.c.b16 %v3620, %v3619
        %v3634 = vpack.c.b16 %v3622, %v3621
        %v3635 = vpack.c.b16 %v3624, %v3623
        %v3636 = vpack.c.b16 %v3626, %v3625
        %v3637 = vpack.c.b16 %v3628, %v3627
        %v3638 = vpack.c.b16 %v3630, %v3629
        %3647 = vmatprep.subr.bf16.mxu0 0
        %3648 = vmatpush1.bf16.msra.mxu0 %v3631
        %3649 = vmatprep.subr.bf16.mxu0 0
        %3650 = vmatpush1.bf16.msra.mxu0 %v3632
        %3651 = vmatprep.subr.bf16.mxu0 0
        %3652 = vmatpush1.bf16.msra.mxu0 %v3633
        %3653 = vmatprep.subr.bf16.mxu0 0
        %3654 = vmatpush1.bf16.msra.mxu0 %v3634
        %3655 = vmatprep.subr.bf16.mxu0 0
        %3656 = vmatpush1.bf16.msra.mxu0 %v3635
        %3657 = vmatprep.subr.bf16.mxu0 0
        %3658 = vmatpush1.bf16.msra.mxu0 %v3636
        %3659 = vmatprep.subr.bf16.mxu0 0
        %3660 = vmatpush1.bf16.msra.mxu0 %v3637
        %3661 = vmatprep.subr.bf16.mxu0 0
        %3662 = vmatpush1.bf16.msra.mxu0 %v3638
        %3663 = vmatprep.subr.bf16.mxu0 0
        %3664 = vmatpush1.bf16.msra.mxu0 0
        %3665 = vmatprep.subr.bf16.mxu0 0
        %3666 = vmatpush1.bf16.msra.mxu0 0
        %3667 = vmatprep.subr.bf16.mxu0 0
        %3668 = vmatpush1.bf16.msra.mxu0 0
        %3669 = vmatprep.subr.bf16.mxu0 0
        %3670 = vmatpush1.bf16.msra.mxu0 0
        %3671 = vmatprep.subr.bf16.mxu0 0
        %3672 = vmatpush1.bf16.msra.mxu0 0
        %3673 = vmatprep.subr.bf16.mxu0 0
        %3674 = vmatpush1.bf16.msra.mxu0 0
        %3675 = vmatprep.subr.bf16.mxu0 0
        %3676 = vmatpush1.bf16.msra.mxu0 0
        %3677 = vmatprep.subr.bf16.mxu0 0
        %3678 = vmatpush1.bf16.msra.mxu0 0
        %3679 = vmatprep.mubr.bf16.mxu0 0
        %3680 = vmatmul.mubr.bf16.gmra.mrb[0].mxu0 %v3064
        %v3681 = vpop.f32.mrb[0].mxu0
        %v3682 = vadd.f32 0.0, %v3681
        %v3683 = vpop.f32.mrb[0].mxu0
        %v3684 = vpop.f32.mrb[0].mxu0
        %v3685 = vadd.f32 0.0, %v3684
        %v3686 = vpop.f32.mrb[0].mxu0
        %3687 = vdwg.mxu0
        %v3704 = vunpack.c.l.b16 %v981
        %v3705 = vunpack.c.l.b16 %v982
        %v3706 = vunpack.c.l.b16 %v983
        %v3707 = vunpack.c.l.b16 %v984
        %v3708 = vunpack.c.l.b16 %v985
        %v3709 = vunpack.c.l.b16 %v986
        %v3710 = vunpack.c.l.b16 %v987
        %v3711 = vunpack.c.l.b16 %v988
        %v3712 = vunpack.c.l.b16 %v989
        %v3713 = vunpack.c.l.b16 %v990
        %v3714 = vunpack.c.l.b16 %v991
        %v3715 = vunpack.c.l.b16 %v992
        %v3716 = vunpack.c.l.b16 %v993
        %v3717 = vunpack.c.l.b16 %v994
        %v3718 = vunpack.c.l.b16 %v995
        %v3719 = vunpack.c.l.b16 %v996
        %v3720 = vpack.c.b16 %v3705, %v3704
        %v3721 = vpack.c.b16 %v3707, %v3706
        %v3722 = vpack.c.b16 %v3709, %v3708
        %v3723 = vpack.c.b16 %v3711, %v3710
        %v3724 = vpack.c.b16 %v3713, %v3712
        %v3725 = vpack.c.b16 %v3715, %v3714
        %v3726 = vpack.c.b16 %v3717, %v3716
        %v3727 = vpack.c.b16 %v3719, %v3718
        %3736 = vmatprep.subr.bf16.mxu0 0
        %3737 = vmatpush1.bf16.msra.mxu0 %v3720
        %3738 = vmatprep.subr.bf16.mxu0 0
        %3739 = vmatpush1.bf16.msra.mxu0 %v3721
        %3740 = vmatprep.subr.bf16.mxu0 0
        %3741 = vmatpush1.bf16.msra.mxu0 %v3722
        %3742 = vmatprep.subr.bf16.mxu0 0
        %3743 = vmatpush1.bf16.msra.mxu0 %v3723
        %3744 = vmatprep.subr.bf16.mxu0 0
        %3745 = vmatpush1.bf16.msra.mxu0 %v3724
        %3746 = vmatprep.subr.bf16.mxu0 0
        %3747 = vmatpush1.bf16.msra.mxu0 %v3725
        %3748 = vmatprep.subr.bf16.mxu0 0
        %3749 = vmatpush1.bf16.msra.mxu0 %v3726
        %3750 = vmatprep.subr.bf16.mxu0 0
        %3751 = vmatpush1.bf16.msra.mxu0 %v3727
        %3752 = vmatprep.subr.bf16.mxu0 0
        %3753 = vmatpush1.bf16.msra.mxu0 0
        %3754 = vmatprep.subr.bf16.mxu0 0
        %3755 = vmatpush1.bf16.msra.mxu0 0
        %3756 = vmatprep.subr.bf16.mxu0 0
        %3757 = vmatpush1.bf16.msra.mxu0 0
        %3758 = vmatprep.subr.bf16.mxu0 0
        %3759 = vmatpush1.bf16.msra.mxu0 0
        %3760 = vmatprep.subr.bf16.mxu0 0
        %3761 = vmatpush1.bf16.msra.mxu0 0
        %3762 = vmatprep.subr.bf16.mxu0 0
        %3763 = vmatpush1.bf16.msra.mxu0 0
        %3764 = vmatprep.subr.bf16.mxu0 0
        %3765 = vmatpush1.bf16.msra.mxu0 0
        %3766 = vmatprep.subr.bf16.mxu0 0
        %3767 = vmatpush1.bf16.msra.mxu0 0
        %3768 = vmatprep.mubr.bf16.mxu0 0
        %3769 = vmatmul.mubr.bf16.gmra.mrb[0].mxu0 %v3064
        %v3770 = vpop.f32.mrb[0].mxu0
        %v3771 = vadd.f32 0.0, %v3770
        %v3772 = vpop.f32.mrb[0].mxu0
        %v3773 = vpop.f32.mrb[0].mxu0
        %v3774 = vadd.f32 0.0, %v3773
        %v3775 = vpop.f32.mrb[0].mxu0
        %3776 = vdwg.mxu0
        %v3793 = vunpack.c.l.b16 %v997
        %v3794 = vunpack.c.l.b16 %v998
        %v3795 = vunpack.c.l.b16 %v999
        %v3796 = vunpack.c.l.b16 %v1000
        %v3797 = vunpack.c.l.b16 %v1001
        %v3798 = vunpack.c.l.b16 %v1002
        %v3799 = vunpack.c.l.b16 %v1003
        %v3800 = vunpack.c.l.b16 %v1004
        %v3801 = vunpack.c.l.b16 %v1005
        %v3802 = vunpack.c.l.b16 %v1006
        %v3803 = vunpack.c.l.b16 %v1007
        %v3804 = vunpack.c.l.b16 %v1008
        %v3805 = vunpack.c.l.b16 %v1009
        %v3806 = vunpack.c.l.b16 %v1010
        %v3807 = vunpack.c.l.b16 %v1011
        %v3808 = vunpack.c.l.b16 %v1012
        %v3809 = vpack.c.b16 %v3794, %v3793
        %v3810 = vpack.c.b16 %v3796, %v3795
        %v3811 = vpack.c.b16 %v3798, %v3797
        %v3812 = vpack.c.b16 %v3800, %v3799
        %v3813 = vpack.c.b16 %v3802, %v3801
        %v3814 = vpack.c.b16 %v3804, %v3803
        %v3815 = vpack.c.b16 %v3806, %v3805
        %v3816 = vpack.c.b16 %v3808, %v3807
        %3825 = vmatprep.subr.bf16.mxu0 0
        %3826 = vmatpush1.bf16.msra.mxu0 %v3809
        %3827 = vmatprep.subr.bf16.mxu0 0
        %3828 = vmatpush1.bf16.msra.mxu0 %v3810
        %3829 = vmatprep.subr.bf16.mxu0 0
        %3830 = vmatpush1.bf16.msra.mxu0 %v3811
        %3831 = vmatprep.subr.bf16.mxu0 0
        %3832 = vmatpush1.bf16.msra.mxu0 %v3812
        %3833 = vmatprep.subr.bf16.mxu0 0
        %3834 = vmatpush1.bf16.msra.mxu0 %v3813
        %3835 = vmatprep.subr.bf16.mxu0 0
        %3836 = vmatpush1.bf16.msra.mxu0 %v3814
        %3837 = vmatprep.subr.bf16.mxu0 0
        %3838 = vmatpush1.bf16.msra.mxu0 %v3815
        %3839 = vmatprep.subr.bf16.mxu0 0
        %3840 = vmatpush1.bf16.msra.mxu0 %v3816
        %3841 = vmatprep.subr.bf16.mxu0 0
        %3842 = vmatpush1.bf16.msra.mxu0 0
        %3843 = vmatprep.subr.bf16.mxu0 0
        %3844 = vmatpush1.bf16.msra.mxu0 0
        %3845 = vmatprep.subr.bf16.mxu0 0
        %3846 = vmatpush1.bf16.msra.mxu0 0
        %3847 = vmatprep.subr.bf16.mxu0 0
        %3848 = vmatpush1.bf16.msra.mxu0 0
        %3849 = vmatprep.subr.bf16.mxu0 0
        %3850 = vmatpush1.bf16.msra.mxu0 0
        %3851 = vmatprep.subr.bf16.mxu0 0
        %3852 = vmatpush1.bf16.msra.mxu0 0
        %3853 = vmatprep.subr.bf16.mxu0 0
        %3854 = vmatpush1.bf16.msra.mxu0 0
        %3855 = vmatprep.subr.bf16.mxu0 0
        %3856 = vmatpush1.bf16.msra.mxu0 0
        %3857 = vmatprep.mubr.bf16.mxu0 0
        %3858 = vmatmul.mubr.bf16.gmra.mrb[0].mxu0 %v3064
        %v3859 = vpop.f32.mrb[0].mxu0
        %v3860 = vadd.f32 0.0, %v3859
        %v3861 = vpop.f32.mrb[0].mxu0
        %v3862 = vpop.f32.mrb[0].mxu0
        %v3863 = vadd.f32 0.0, %v3862
        %v3864 = vpop.f32.mrb[0].mxu0
        %3865 = vdwg.mxu0
        %v3882 = vunpack.c.l.b16 %v1013
        %v3883 = vunpack.c.l.b16 %v1014
        %v3884 = vunpack.c.l.b16 %v1015
        %v3885 = vunpack.c.l.b16 %v1016
        %v3886 = vunpack.c.l.b16 %v1017
        %v3887 = vunpack.c.l.b16 %v1018
        %v3888 = vunpack.c.l.b16 %v1019
        %v3889 = vunpack.c.l.b16 %v1020
        %v3890 = vunpack.c.l.b16 %v1021
        %v3891 = vunpack.c.l.b16 %v1022
        %v3892 = vunpack.c.l.b16 %v1023
        %v3893 = vunpack.c.l.b16 %v1024
        %v3894 = vunpack.c.l.b16 %v1025
        %v3895 = vunpack.c.l.b16 %v1026
        %v3896 = vunpack.c.l.b16 %v1027
        %v3897 = vunpack.c.l.b16 %v1028
        %v3898 = vpack.c.b16 %v3883, %v3882
        %v3899 = vpack.c.b16 %v3885, %v3884
        %v3900 = vpack.c.b16 %v3887, %v3886
        %v3901 = vpack.c.b16 %v3889, %v3888
        %v3902 = vpack.c.b16 %v3891, %v3890
        %v3903 = vpack.c.b16 %v3893, %v3892
        %v3904 = vpack.c.b16 %v3895, %v3894
        %v3905 = vpack.c.b16 %v3897, %v3896
        %3914 = vmatprep.subr.bf16.mxu0 0
        %3915 = vmatpush1.bf16.msra.mxu0 %v3898
        %3916 = vmatprep.subr.bf16.mxu0 0
        %3917 = vmatpush1.bf16.msra.mxu0 %v3899
        %3918 = vmatprep.subr.bf16.mxu0 0
        %3919 = vmatpush1.bf16.msra.mxu0 %v3900
        %3920 = vmatprep.subr.bf16.mxu0 0
        %3921 = vmatpush1.bf16.msra.mxu0 %v3901
        %3922 = vmatprep.subr.bf16.mxu0 0
        %3923 = vmatpush1.bf16.msra.mxu0 %v3902
        %3924 = vmatprep.subr.bf16.mxu0 0
        %3925 = vmatpush1.bf16.msra.mxu0 %v3903
        %3926 = vmatprep.subr.bf16.mxu0 0
        %3927 = vmatpush1.bf16.msra.mxu0 %v3904
        %3928 = vmatprep.subr.bf16.mxu0 0
        %3929 = vmatpush1.bf16.msra.mxu0 %v3905
        %3930 = vmatprep.subr.bf16.mxu0 0
        %3931 = vmatpush1.bf16.msra.mxu0 0
        %3932 = vmatprep.subr.bf16.mxu0 0
        %3933 = vmatpush1.bf16.msra.mxu0 0
        %3934 = vmatprep.subr.bf16.mxu0 0
        %3935 = vmatpush1.bf16.msra.mxu0 0
        %3936 = vmatprep.subr.bf16.mxu0 0
        %3937 = vmatpush1.bf16.msra.mxu0 0
        %3938 = vmatprep.subr.bf16.mxu0 0
        %3939 = vmatpush1.bf16.msra.mxu0 0
        %3940 = vmatprep.subr.bf16.mxu0 0
        %3941 = vmatpush1.bf16.msra.mxu0 0
        %3942 = vmatprep.subr.bf16.mxu0 0
        %3943 = vmatpush1.bf16.msra.mxu0 0
        %3944 = vmatprep.subr.bf16.mxu0 0
        %3945 = vmatpush1.bf16.msra.mxu0 0
        %3946 = vmatprep.mubr.bf16.mxu0 0
        %3947 = vmatmul.mubr.bf16.gmra.mrb[0].mxu0 %v3064
        %v3948 = vpop.f32.mrb[0].mxu0
        %v3949 = vadd.f32 0.0, %v3948
        %v3950 = vpop.f32.mrb[0].mxu0
        %v3951 = vpop.f32.mrb[0].mxu0
        %v3952 = vadd.f32 0.0, %v3951
        %v3953 = vpop.f32.mrb[0].mxu0
        %3954 = vdwg.mxu0
        %v3971 = vunpack.c.l.b16 %v1029
        %v3972 = vunpack.c.l.b16 %v1030
        %v3973 = vunpack.c.l.b16 %v1031
        %v3974 = vunpack.c.l.b16 %v1032
        %v3975 = vunpack.c.l.b16 %v1033
        %v3976 = vunpack.c.l.b16 %v1034
        %v3977 = vunpack.c.l.b16 %v1035
        %v3978 = vunpack.c.l.b16 %v1036
        %v3979 = vunpack.c.l.b16 %v1037
        %v3980 = vunpack.c.l.b16 %v1038
        %v3981 = vunpack.c.l.b16 %v1039
        %v3982 = vunpack.c.l.b16 %v1040
        %v3983 = vunpack.c.l.b16 %v1041
        %v3984 = vunpack.c.l.b16 %v1042
        %v3985 = vunpack.c.l.b16 %v1043
        %v3986 = vunpack.c.l.b16 %v1044
        %v3987 = vpack.c.b16 %v3972, %v3971
        %v3988 = vpack.c.b16 %v3974, %v3973
        %v3989 = vpack.c.b16 %v3976, %v3975
        %v3990 = vpack.c.b16 %v3978, %v3977
        %v3991 = vpack.c.b16 %v3980, %v3979
        %v3992 = vpack.c.b16 %v3982, %v3981
        %v3993 = vpack.c.b16 %v3984, %v3983
        %v3994 = vpack.c.b16 %v3986, %v3985
        %4003 = vmatprep.subr.bf16.mxu0 0
        %4004 = vmatpush1.bf16.msra.mxu0 %v3987
        %4005 = vmatprep.subr.bf16.mxu0 0
        %4006 = vmatpush1.bf16.msra.mxu0 %v3988
        %4007 = vmatprep.subr.bf16.mxu0 0
        %4008 = vmatpush1.bf16.msra.mxu0 %v3989
        %4009 = vmatprep.subr.bf16.mxu0 0
        %4010 = vmatpush1.bf16.msra.mxu0 %v3990
        %4011 = vmatprep.subr.bf16.mxu0 0
        %4012 = vmatpush1.bf16.msra.mxu0 %v3991
        %4013 = vmatprep.subr.bf16.mxu0 0
        %4014 = vmatpush1.bf16.msra.mxu0 %v3992
        %4015 = vmatprep.subr.bf16.mxu0 0
        %4016 = vmatpush1.bf16.msra.mxu0 %v3993
        %4017 = vmatprep.subr.bf16.mxu0 0
        %4018 = vmatpush1.bf16.msra.mxu0 %v3994
        %4019 = vmatprep.subr.bf16.mxu0 0
        %4020 = vmatpush1.bf16.msra.mxu0 0
        %4021 = vmatprep.subr.bf16.mxu0 0
        %4022 = vmatpush1.bf16.msra.mxu0 0
        %4023 = vmatprep.subr.bf16.mxu0 0
        %4024 = vmatpush1.bf16.msra.mxu0 0
        %4025 = vmatprep.subr.bf16.mxu0 0
        %4026 = vmatpush1.bf16.msra.mxu0 0
        %4027 = vmatprep.subr.bf16.mxu0 0
        %4028 = vmatpush1.bf16.msra.mxu0 0
        %4029 = vmatprep.subr.bf16.mxu0 0
        %4030 = vmatpush1.bf16.msra.mxu0 0
        %4031 = vmatprep.subr.bf16.mxu0 0
        %4032 = vmatpush1.bf16.msra.mxu0 0
        %4033 = vmatprep.subr.bf16.mxu0 0
        %4034 = vmatpush1.bf16.msra.mxu0 0
        %4035 = vmatprep.mubr.bf16.mxu0 0
        %4036 = vmatmul.mubr.bf16.gmra.mrb[0].mxu0 %v3064
        %v4037 = vpop.f32.mrb[0].mxu0
        %v4038 = vadd.f32 0.0, %v4037
        %v4039 = vpop.f32.mrb[0].mxu0
        %v4040 = vpop.f32.mrb[0].mxu0
        %v4041 = vadd.f32 0.0, %v4040
        %v4042 = vpop.f32.mrb[0].mxu0
        %4043 = vdwg.mxu0
        %v4060 = vunpack.c.l.b16 %v1045
        %v4061 = vunpack.c.l.b16 %v1046
        %v4062 = vunpack.c.l.b16 %v1047
        %v4063 = vunpack.c.l.b16 %v1048
        %v4064 = vunpack.c.l.b16 %v1049
        %v4065 = vunpack.c.l.b16 %v1050
        %v4066 = vunpack.c.l.b16 %v1051
        %v4067 = vunpack.c.l.b16 %v1052
        %v4068 = vunpack.c.l.b16 %v1053
        %v4069 = vunpack.c.l.b16 %v1054
        %v4070 = vunpack.c.l.b16 %v1055
        %v4071 = vunpack.c.l.b16 %v1056
        %v4072 = vunpack.c.l.b16 %v1057
        %v4073 = vunpack.c.l.b16 %v1058
        %v4074 = vunpack.c.l.b16 %v1059
        %v4075 = vunpack.c.l.b16 %v1060
        %v4076 = vpack.c.b16 %v4061, %v4060
        %v4077 = vpack.c.b16 %v4063, %v4062
        %v4078 = vpack.c.b16 %v4065, %v4064
        %v4079 = vpack.c.b16 %v4067, %v4066
        %v4080 = vpack.c.b16 %v4069, %v4068
        %v4081 = vpack.c.b16 %v4071, %v4070
        %v4082 = vpack.c.b16 %v4073, %v4072
        %v4083 = vpack.c.b16 %v4075, %v4074
        %4092 = vmatprep.subr.bf16.mxu0 0
        %4093 = vmatpush1.bf16.msra.mxu0 %v4076
        %4094 = vmatprep.subr.bf16.mxu0 0
        %4095 = vmatpush1.bf16.msra.mxu0 %v4077
        %4096 = vmatprep.subr.bf16.mxu0 0
        %4097 = vmatpush1.bf16.msra.mxu0 %v4078
        %4098 = vmatprep.subr.bf16.mxu0 0
        %4099 = vmatpush1.bf16.msra.mxu0 %v4079
        %4100 = vmatprep.subr.bf16.mxu0 0
        %4101 = vmatpush1.bf16.msra.mxu0 %v4080
        %4102 = vmatprep.subr.bf16.mxu0 0
        %4103 = vmatpush1.bf16.msra.mxu0 %v4081
        %4104 = vmatprep.subr.bf16.mxu0 0
        %4105 = vmatpush1.bf16.msra.mxu0 %v4082
        %4106 = vmatprep.subr.bf16.mxu0 0
        %4107 = vmatpush1.bf16.msra.mxu0 %v4083
        %4108 = vmatprep.subr.bf16.mxu0 0
        %4109 = vmatpush1.bf16.msra.mxu0 0
        %4110 = vmatprep.subr.bf16.mxu0 0
        %4111 = vmatpush1.bf16.msra.mxu0 0
        %4112 = vmatprep.subr.bf16.mxu0 0
        %4113 = vmatpush1.bf16.msra.mxu0 0
        %4114 = vmatprep.subr.bf16.mxu0 0
        %4115 = vmatpush1.bf16.msra.mxu0 0
        %4116 = vmatprep.subr.bf16.mxu0 0
        %4117 = vmatpush1.bf16.msra.mxu0 0
        %4118 = vmatprep.subr.bf16.mxu0 0
        %4119 = vmatpush1.bf16.msra.mxu0 0
        %4120 = vmatprep.subr.bf16.mxu0 0
        %4121 = vmatpush1.bf16.msra.mxu0 0
        %4122 = vmatprep.subr.bf16.mxu0 0
        %4123 = vmatpush1.bf16.msra.mxu0 0
        %4124 = vmatprep.mubr.bf16.mxu0 0
        %4125 = vmatmul.mubr.bf16.gmra.mrb[0].mxu0 %v3064
        %v4126 = vpop.f32.mrb[0].mxu0
        %v4127 = vadd.f32 0.0, %v4126
        %v4128 = vpop.f32.mrb[0].mxu0
        %v4129 = vpop.f32.mrb[0].mxu0
        %v4130 = vadd.f32 0.0, %v4129
        %v4131 = vpop.f32.mrb[0].mxu0
        %4132 = vdwg.mxu0
        %v4133 = vpack.c.bf16 %v3151, %v3148
        %v4134 = vpack.c.bf16 %v3240, %v3237
        %v4135 = vpack.c.bf16 %v3329, %v3326
        %v4136 = vpack.c.bf16 %v3418, %v3415
        %v4137 = vpack.c.bf16 %v3507, %v3504
        %v4138 = vpack.c.bf16 %v3596, %v3593
        %v4139 = vpack.c.bf16 %v3685, %v3682
        %v4140 = vpack.c.bf16 %v3774, %v3771
        %v4142 = vsel %vm2296, %v4133, 0
        %v4145 = vsel %vm2296, %v4137, 0
        %4147 = vmatprep.subr.bf16.mxu0 0
        %4148 = vmatpush1.bf16.xpose.msra.mxu0 %v4145
        %4149 = vmatprep.subr.bf16.mxu0 0
        %4150 = vmatpush1.bf16.xpose.msra.mxu0 0
        %4151 = vmatprep.subr.bf16.mxu0 0
        %4152 = vmatpush1.bf16.xpose.msra.mxu0 0
        %4153 = vmatprep.subr.bf16.mxu0 0
        %4154 = vmatpush1.bf16.xpose.msra.mxu0 0
        %4155 = vmatprep.subr.bf16.mxu0 0
        %4156 = vmatpush1.bf16.xpose.msra.mxu0 0
        %4157 = vmatprep.subr.bf16.mxu0 0
        %4158 = vmatpush1.bf16.xpose.msra.mxu0 0
        %4159 = vmatprep.subr.bf16.mxu0 0
        %4160 = vmatpush1.bf16.xpose.msra.mxu0 0
        %4161 = vmatprep.subr.bf16.mxu0 0
        %4162 = vmatpush1.bf16.xpose.msra.mxu0 0
        %4163 = vmatprep.subr.bf16.mxu0 0
        %4164 = vmatpush1.bf16.xpose.msra.mxu0 0
        %4165 = vmatprep.subr.bf16.mxu0 0
        %4166 = vmatpush1.bf16.xpose.msra.mxu0 0
        %4167 = vmatprep.subr.bf16.mxu0 0
        %4168 = vmatpush1.bf16.xpose.msra.mxu0 0
        %4169 = vmatprep.subr.bf16.mxu0 0
        %4170 = vmatpush1.bf16.xpose.msra.mxu0 0
        %4171 = vmatprep.subr.bf16.mxu0 0
        %4172 = vmatpush1.bf16.xpose.msra.mxu0 0
        %4173 = vmatprep.subr.bf16.mxu0 0
        %4174 = vmatpush1.bf16.xpose.msra.mxu0 0
        %4175 = vmatprep.subr.bf16.mxu0 0
        %4176 = vmatpush1.bf16.xpose.msra.mxu0 0
        %4177 = vmatprep.subr.bf16.mxu0 0
        %4178 = vmatpush1.bf16.xpose.msra.mxu0 0
        %4179 = vmatprep.mubr.bf16.mxu0 0
        %4180 = vmatmul.mubr.bf16.gmra.mrb[0].mxu0 %v4142
        %v4181 = vpop.f32.mrb[0].mxu0
        %v4182 = vadd.f32 0.0, %v4181
        %v4183 = vpop.f32.mrb[0].mxu0
        %v4184 = vpop.f32.mrb[0].mxu0
        %v4185 = vadd.f32 0.0, %v4184
        %v4186 = vpop.f32.mrb[0].mxu0
        %4187 = vdwg.mxu0
        %v4189 = vsel %vm2296, %v4134, 0
        %v4192 = vsel %vm2296, %v4138, 0
        %4194 = vmatprep.subr.bf16.mxu0 0
        %4195 = vmatpush1.bf16.xpose.msra.mxu0 %v4192
        %4196 = vmatprep.subr.bf16.mxu0 0
        %4197 = vmatpush1.bf16.xpose.msra.mxu0 0
        %4198 = vmatprep.subr.bf16.mxu0 0
        %4199 = vmatpush1.bf16.xpose.msra.mxu0 0
        %4200 = vmatprep.subr.bf16.mxu0 0
        %4201 = vmatpush1.bf16.xpose.msra.mxu0 0
        %4202 = vmatprep.subr.bf16.mxu0 0
        %4203 = vmatpush1.bf16.xpose.msra.mxu0 0
        %4204 = vmatprep.subr.bf16.mxu0 0
        %4205 = vmatpush1.bf16.xpose.msra.mxu0 0
        %4206 = vmatprep.subr.bf16.mxu0 0
        %4207 = vmatpush1.bf16.xpose.msra.mxu0 0
        %4208 = vmatprep.subr.bf16.mxu0 0
        %4209 = vmatpush1.bf16.xpose.msra.mxu0 0
        %4210 = vmatprep.subr.bf16.mxu0 0
        %4211 = vmatpush1.bf16.xpose.msra.mxu0 0
        %4212 = vmatprep.subr.bf16.mxu0 0
        %4213 = vmatpush1.bf16.xpose.msra.mxu0 0
        %4214 = vmatprep.subr.bf16.mxu0 0
        %4215 = vmatpush1.bf16.xpose.msra.mxu0 0
        %4216 = vmatprep.subr.bf16.mxu0 0
        %4217 = vmatpush1.bf16.xpose.msra.mxu0 0
        %4218 = vmatprep.subr.bf16.mxu0 0
        %4219 = vmatpush1.bf16.xpose.msra.mxu0 0
        %4220 = vmatprep.subr.bf16.mxu0 0
        %4221 = vmatpush1.bf16.xpose.msra.mxu0 0
        %4222 = vmatprep.subr.bf16.mxu0 0
        %4223 = vmatpush1.bf16.xpose.msra.mxu0 0
        %4224 = vmatprep.subr.bf16.mxu0 0
        %4225 = vmatpush1.bf16.xpose.msra.mxu0 0
        %4226 = vmatprep.mubr.bf16.mxu0 0
        %4227 = vmatmul.mubr.bf16.gmra.mrb[0].mxu0 %v4189
        %v4228 = vpop.f32.mrb[0].mxu0
        %v4229 = vadd.f32 0.0, %v4228
        %v4230 = vpop.f32.mrb[0].mxu0
        %v4231 = vpop.f32.mrb[0].mxu0
        %v4232 = vadd.f32 0.0, %v4231
        %v4233 = vpop.f32.mrb[0].mxu0
        %4234 = vdwg.mxu0
        %v4236 = vsel %vm2296, %v4135, 0
        %v4239 = vsel %vm2296, %v4139, 0
        %4241 = vmatprep.subr.bf16.mxu0 0
        %4242 = vmatpush1.bf16.xpose.msra.mxu0 %v4239
        %4243 = vmatprep.subr.bf16.mxu0 0
        %4244 = vmatpush1.bf16.xpose.msra.mxu0 0
        %4245 = vmatprep.subr.bf16.mxu0 0
        %4246 = vmatpush1.bf16.xpose.msra.mxu0 0
        %4247 = vmatprep.subr.bf16.mxu0 0
        %4248 = vmatpush1.bf16.xpose.msra.mxu0 0
        %4249 = vmatprep.subr.bf16.mxu0 0
        %4250 = vmatpush1.bf16.xpose.msra.mxu0 0
        %4251 = vmatprep.subr.bf16.mxu0 0
        %4252 = vmatpush1.bf16.xpose.msra.mxu0 0
        %4253 = vmatprep.subr.bf16.mxu0 0
        %4254 = vmatpush1.bf16.xpose.msra.mxu0 0
        %4255 = vmatprep.subr.bf16.mxu0 0
        %4256 = vmatpush1.bf16.xpose.msra.mxu0 0
        %4257 = vmatprep.subr.bf16.mxu0 0
        %4258 = vmatpush1.bf16.xpose.msra.mxu0 0
        %4259 = vmatprep.subr.bf16.mxu0 0
        %4260 = vmatpush1.bf16.xpose.msra.mxu0 0
        %4261 = vmatprep.subr.bf16.mxu0 0
        %4262 = vmatpush1.bf16.xpose.msra.mxu0 0
        %4263 = vmatprep.subr.bf16.mxu0 0
        %4264 = vmatpush1.bf16.xpose.msra.mxu0 0
        %4265 = vmatprep.subr.bf16.mxu0 0
        %4266 = vmatpush1.bf16.xpose.msra.mxu0 0
        %4267 = vmatprep.subr.bf16.mxu0 0
        %4268 = vmatpush1.bf16.xpose.msra.mxu0 0
        %4269 = vmatprep.subr.bf16.mxu0 0
        %4270 = vmatpush1.bf16.xpose.msra.mxu0 0
        %4271 = vmatprep.subr.bf16.mxu0 0
        %4272 = vmatpush1.bf16.xpose.msra.mxu0 0
        %4273 = vmatprep.mubr.bf16.mxu0 0
        %4274 = vmatmul.mubr.bf16.gmra.mrb[0].mxu0 %v4236
        %v4275 = vpop.f32.mrb[0].mxu0
        %v4276 = vadd.f32 0.0, %v4275
        %v4277 = vpop.f32.mrb[0].mxu0
        %v4278 = vpop.f32.mrb[0].mxu0
        %v4279 = vadd.f32 0.0, %v4278
        %v4280 = vpop.f32.mrb[0].mxu0
        %4281 = vdwg.mxu0
        %v4283 = vsel %vm2296, %v4136, 0
        %v4286 = vsel %vm2296, %v4140, 0
        %4288 = vmatprep.subr.bf16.mxu0 0
        %4289 = vmatpush1.bf16.xpose.msra.mxu0 %v4286
        %4290 = vmatprep.subr.bf16.mxu0 0
        %4291 = vmatpush1.bf16.xpose.msra.mxu0 0
        %4292 = vmatprep.subr.bf16.mxu0 0
        %4293 = vmatpush1.bf16.xpose.msra.mxu0 0
        %4294 = vmatprep.subr.bf16.mxu0 0
        %4295 = vmatpush1.bf16.xpose.msra.mxu0 0
        %4296 = vmatprep.subr.bf16.mxu0 0
        %4297 = vmatpush1.bf16.xpose.msra.mxu0 0
        %4298 = vmatprep.subr.bf16.mxu0 0
        %4299 = vmatpush1.bf16.xpose.msra.mxu0 0
        %4300 = vmatprep.subr.bf16.mxu0 0
        %4301 = vmatpush1.bf16.xpose.msra.mxu0 0
        %4302 = vmatprep.subr.bf16.mxu0 0
        %4303 = vmatpush1.bf16.xpose.msra.mxu0 0
        %4304 = vmatprep.subr.bf16.mxu0 0
        %4305 = vmatpush1.bf16.xpose.msra.mxu0 0
        %4306 = vmatprep.subr.bf16.mxu0 0
        %4307 = vmatpush1.bf16.xpose.msra.mxu0 0
        %4308 = vmatprep.subr.bf16.mxu0 0
        %4309 = vmatpush1.bf16.xpose.msra.mxu0 0
        %4310 = vmatprep.subr.bf16.mxu0 0
        %4311 = vmatpush1.bf16.xpose.msra.mxu0 0
        %4312 = vmatprep.subr.bf16.mxu0 0
        %4313 = vmatpush1.bf16.xpose.msra.mxu0 0
        %4314 = vmatprep.subr.bf16.mxu0 0
        %4315 = vmatpush1.bf16.xpose.msra.mxu0 0
        %4316 = vmatprep.subr.bf16.mxu0 0
        %4317 = vmatpush1.bf16.xpose.msra.mxu0 0
        %4318 = vmatprep.subr.bf16.mxu0 0
        %4319 = vmatpush1.bf16.xpose.msra.mxu0 0
        %4320 = vmatprep.mubr.bf16.mxu0 0
        %4321 = vmatmul.mubr.bf16.gmra.mrb[0].mxu0 %v4283
        %v4322 = vpop.f32.mrb[0].mxu0
        %v4323 = vadd.f32 0.0, %v4322
        %v4324 = vpop.f32.mrb[0].mxu0
        %v4325 = vpop.f32.mrb[0].mxu0
        %v4326 = vadd.f32 0.0, %v4325
        %v4327 = vpop.f32.mrb[0].mxu0
        %4328 = vdwg.mxu0
        %v4329 = vsel %vm2485, %v4182, -inf
        %4330 = vmax.xlane.f32.xlu0 %v4329
        %v4331 = vpop.xlane.xlu0 %4330
        %v4332 = vsel %vm2485, %v4185, -inf
        %4333 = vmax.xlane.f32.xlu0 %v4332
        %v4334 = vpop.xlane.xlu0 %4333
        %v4335 = vsel %vm2485, %v4229, -inf
        %4336 = vmax.xlane.f32.xlu0 %v4335
        %v4337 = vpop.xlane.xlu0 %4336
        %v4338 = vsel %vm2485, %v4232, -inf
        %4339 = vmax.xlane.f32.xlu0 %v4338
        %v4340 = vpop.xlane.xlu0 %4339
        %v4341 = vsel %vm2485, %v4276, -inf
        %4342 = vmax.xlane.f32.xlu0 %v4341
        %v4343 = vpop.xlane.xlu0 %4342
        %v4344 = vsel %vm2485, %v4279, -inf
        %4345 = vmax.xlane.f32.xlu0 %v4344
        %v4346 = vpop.xlane.xlu0 %4345
        %v4347 = vsel %vm2485, %v4323, -inf
        %4348 = vmax.xlane.f32.xlu0 %v4347
        %v4349 = vpop.xlane.xlu0 %4348
        %v4350 = vsel %vm2485, %v4326, -inf
        %4351 = vmax.xlane.f32.xlu0 %v4350
        %v4352 = vpop.xlane.xlu0 %4351
        %v4353 = vsub.f32 %v4182, %v4331
        %v4354 = vsub.f32 %v4185, %v4334
        %v4355 = vsub.f32 %v4229, %v4337
        %v4356 = vsub.f32 %v4232, %v4340
        %v4357 = vsub.f32 %v4276, %v4343
        %v4358 = vsub.f32 %v4279, %v4346
        %v4359 = vsub.f32 %v4323, %v4349
        %v4360 = vsub.f32 %v4326, %v4352
        %v4361 = vmul.f32 %v4353, 1.442695
        %v4362 = vpow.pop %v4361
        %v4363 = vmul.f32 %v4354, 1.442695
        %v4364 = vpow.pop %v4363
        %v4365 = vmul.f32 %v4355, 1.442695
        %v4366 = vpow.pop %v4365
        %v4367 = vmul.f32 %v4356, 1.442695
        %v4368 = vpow.pop %v4367
        %v4369 = vmul.f32 %v4357, 1.442695
        %v4370 = vpow.pop %v4369
        %v4371 = vmul.f32 %v4358, 1.442695
        %v4372 = vpow.pop %v4371
        %v4373 = vmul.f32 %v4359, 1.442695
        %v4374 = vpow.pop %v4373
        %v4375 = vmul.f32 %v4360, 1.442695
        %v4376 = vpow.pop %v4375
        %v4377 = vsel %vm2485, %v4362, 0.0
        %4378 = vadd.xlane.f32.xlu0 %v4377
        %v4379 = vpop.xlane.xlu0 %4378
        %v4380 = vsel %vm2485, %v4364, 0.0
        %4381 = vadd.xlane.f32.xlu0 %v4380
        %v4382 = vpop.xlane.xlu0 %4381
        %v4383 = vsel %vm2485, %v4366, 0.0
        %4384 = vadd.xlane.f32.xlu0 %v4383
        %v4385 = vpop.xlane.xlu0 %4384
        %v4386 = vsel %vm2485, %v4368, 0.0
        %4387 = vadd.xlane.f32.xlu0 %v4386
        %v4388 = vpop.xlane.xlu0 %4387
        %v4389 = vsel %vm2485, %v4370, 0.0
        %4390 = vadd.xlane.f32.xlu0 %v4389
        %v4391 = vpop.xlane.xlu0 %4390
        %v4392 = vsel %vm2485, %v4372, 0.0
        %4393 = vadd.xlane.f32.xlu0 %v4392
        %v4394 = vpop.xlane.xlu0 %4393
        %v4395 = vsel %vm2485, %v4374, 0.0
        %4396 = vadd.xlane.f32.xlu0 %v4395
        %v4397 = vpop.xlane.xlu0 %4396
        %v4398 = vsel %vm2485, %v4376, 0.0
        %4399 = vadd.xlane.f32.xlu0 %v4398
        %v4400 = vpop.xlane.xlu0 %4399
        %v4401 = vrcp.pop %v4379
        %v4402 = vrcp.pop %v4382
        %v4403 = vrcp.pop %v4385
        %v4404 = vrcp.pop %v4388
        %v4405 = vrcp.pop %v4391
        %v4406 = vrcp.pop %v4394
        %v4407 = vrcp.pop %v4397
        %v4408 = vrcp.pop %v4400
        %v4409 = vmul.f32 %v4379, %v4401
        %v4410 = vmul.f32 %v4382, %v4402
        %v4411 = vmul.f32 %v4385, %v4403
        %v4412 = vmul.f32 %v4388, %v4404
        %v4413 = vmul.f32 %v4391, %v4405
        %v4414 = vmul.f32 %v4394, %v4406
        %v4415 = vmul.f32 %v4397, %v4407
        %v4416 = vmul.f32 %v4400, %v4408
        %v4417 = vsub.f32 2.0, %v4409
        %v4418 = vsub.f32 2.0, %v4410
        %v4419 = vsub.f32 2.0, %v4411
        %v4420 = vsub.f32 2.0, %v4412
        %v4421 = vsub.f32 2.0, %v4413
        %v4422 = vsub.f32 2.0, %v4414
        %v4423 = vsub.f32 2.0, %v4415
        %v4424 = vsub.f32 2.0, %v4416
        %v4425 = vmul.f32 %v4401, %v4417
        %v4426 = vmul.f32 %v4402, %v4418
        %v4427 = vmul.f32 %v4403, %v4419
        %v4428 = vmul.f32 %v4404, %v4420
        %v4429 = vmul.f32 %v4405, %v4421
        %v4430 = vmul.f32 %v4406, %v4422
        %v4431 = vmul.f32 %v4407, %v4423
        %v4432 = vmul.f32 %v4408, %v4424
        %v4433 = vmul.f32 %v4362, %v4425
        %v4434 = vmul.f32 %v4364, %v4426
        %v4435 = vmul.f32 %v4366, %v4427
        %v4436 = vmul.f32 %v4368, %v4428
        %v4437 = vmul.f32 %v4370, %v4429
        %v4438 = vmul.f32 %v4372, %v4430
        %v4439 = vmul.f32 %v4374, %v4431
        %v4440 = vmul.f32 %v4376, %v4432
        %v4441 = vpack.c.bf16 %v4434, %v4433
        %v4442 = vpack.c.bf16 %v4436, %v4435
        %v4443 = vpack.c.bf16 %v4438, %v4437
        %v4444 = vpack.c.bf16 %v4440, %v4439
        %v4445 = vpack.c.bf16 %v3863, %v3860
        %v4446 = vpack.c.bf16 %v3952, %v3949
        %v4447 = vpack.c.bf16 %v4041, %v4038
        %v4448 = vpack.c.bf16 %v4130, %v4127
        %v4450 = vsel %vm2485, %v4441, 0
        %4452 = vmatprep.subr.bf16.mxu0 0
        %4453 = vmatpush1.bf16.msra.mxu0 %v4445
        %4454 = vmatprep.subr.bf16.mxu0 0
        %4455 = vmatpush1.bf16.msra.mxu0 0
        %4456 = vmatprep.subr.bf16.mxu0 0
        %4457 = vmatpush1.bf16.msra.mxu0 0
        %4458 = vmatprep.subr.bf16.mxu0 0
        %4459 = vmatpush1.bf16.msra.mxu0 0
        %4460 = vmatprep.subr.bf16.mxu0 0
        %4461 = vmatpush1.bf16.msra.mxu0 0
        %4462 = vmatprep.subr.bf16.mxu0 0
        %4463 = vmatpush1.bf16.msra.mxu0 0
        %4464 = vmatprep.subr.bf16.mxu0 0
        %4465 = vmatpush1.bf16.msra.mxu0 0
        %4466 = vmatprep.subr.bf16.mxu0 0
        %4467 = vmatpush1.bf16.msra.mxu0 0
        %4468 = vmatprep.subr.bf16.mxu0 0
        %4469 = vmatpush1.bf16.msra.mxu0 0
        %4470 = vmatprep.subr.bf16.mxu0 0
        %4471 = vmatpush1.bf16.msra.mxu0 0
        %4472 = vmatprep.subr.bf16.mxu0 0
        %4473 = vmatpush1.bf16.msra.mxu0 0
        %4474 = vmatprep.subr.bf16.mxu0 0
        %4475 = vmatpush1.bf16.msra.mxu0 0
        %4476 = vmatprep.subr.bf16.mxu0 0
        %4477 = vmatpush1.bf16.msra.mxu0 0
        %4478 = vmatprep.subr.bf16.mxu0 0
        %4479 = vmatpush1.bf16.msra.mxu0 0
        %4480 = vmatprep.subr.bf16.mxu0 0
        %4481 = vmatpush1.bf16.msra.mxu0 0
        %4482 = vmatprep.subr.bf16.mxu0 0
        %4483 = vmatpush1.bf16.msra.mxu0 0
        %4484 = vmatprep.mubr.bf16.mxu0 0
        %4485 = vmatmul.mubr.bf16.gmra.mrb[0].mxu0 %v4450
        %v4486 = vpop.f32.mrb[0].mxu0
        %v4487 = vadd.f32 0.0, %v4486
        %v4488 = vpop.f32.mrb[0].mxu0
        %v4489 = vpop.f32.mrb[0].mxu0
        %v4490 = vadd.f32 0.0, %v4489
        %v4491 = vpop.f32.mrb[0].mxu0
        %4492 = vdwg.mxu0
        %v4494 = vsel %vm2485, %v4442, 0
        %4496 = vmatprep.subr.bf16.mxu0 0
        %4497 = vmatpush1.bf16.msra.mxu0 %v4446
        %4498 = vmatprep.subr.bf16.mxu0 0
        %4499 = vmatpush1.bf16.msra.mxu0 0
        %4500 = vmatprep.subr.bf16.mxu0 0
        %4501 = vmatpush1.bf16.msra.mxu0 0
        %4502 = vmatprep.subr.bf16.mxu0 0
        %4503 = vmatpush1.bf16.msra.mxu0 0
        %4504 = vmatprep.subr.bf16.mxu0 0
        %4505 = vmatpush1.bf16.msra.mxu0 0
        %4506 = vmatprep.subr.bf16.mxu0 0
        %4507 = vmatpush1.bf16.msra.mxu0 0
        %4508 = vmatprep.subr.bf16.mxu0 0
        %4509 = vmatpush1.bf16.msra.mxu0 0
        %4510 = vmatprep.subr.bf16.mxu0 0
        %4511 = vmatpush1.bf16.msra.mxu0 0
        %4512 = vmatprep.subr.bf16.mxu0 0
        %4513 = vmatpush1.bf16.msra.mxu0 0
        %4514 = vmatprep.subr.bf16.mxu0 0
        %4515 = vmatpush1.bf16.msra.mxu0 0
        %4516 = vmatprep.subr.bf16.mxu0 0
        %4517 = vmatpush1.bf16.msra.mxu0 0
        %4518 = vmatprep.subr.bf16.mxu0 0
        %4519 = vmatpush1.bf16.msra.mxu0 0
        %4520 = vmatprep.subr.bf16.mxu0 0
        %4521 = vmatpush1.bf16.msra.mxu0 0
        %4522 = vmatprep.subr.bf16.mxu0 0
        %4523 = vmatpush1.bf16.msra.mxu0 0
        %4524 = vmatprep.subr.bf16.mxu0 0
        %4525 = vmatpush1.bf16.msra.mxu0 0
        %4526 = vmatprep.subr.bf16.mxu0 0
        %4527 = vmatpush1.bf16.msra.mxu0 0
        %4528 = vmatprep.mubr.bf16.mxu0 0
        %4529 = vmatmul.mubr.bf16.gmra.mrb[0].mxu0 %v4494
        %v4530 = vpop.f32.mrb[0].mxu0
        %v4531 = vadd.f32 0.0, %v4530
        %v4532 = vpop.f32.mrb[0].mxu0
        %v4533 = vpop.f32.mrb[0].mxu0
        %v4534 = vadd.f32 0.0, %v4533
        %v4535 = vpop.f32.mrb[0].mxu0
        %4536 = vdwg.mxu0
        %v4538 = vsel %vm2485, %v4443, 0
        %4540 = vmatprep.subr.bf16.mxu0 0
        %4541 = vmatpush1.bf16.msra.mxu0 %v4447
        %4542 = vmatprep.subr.bf16.mxu0 0
        %4543 = vmatpush1.bf16.msra.mxu0 0
        %4544 = vmatprep.subr.bf16.mxu0 0
        %4545 = vmatpush1.bf16.msra.mxu0 0
        %4546 = vmatprep.subr.bf16.mxu0 0
        %4547 = vmatpush1.bf16.msra.mxu0 0
        %4548 = vmatprep.subr.bf16.mxu0 0
        %4549 = vmatpush1.bf16.msra.mxu0 0
        %4550 = vmatprep.subr.bf16.mxu0 0
        %4551 = vmatpush1.bf16.msra.mxu0 0
        %4552 = vmatprep.subr.bf16.mxu0 0
        %4553 = vmatpush1.bf16.msra.mxu0 0
        %4554 = vmatprep.subr.bf16.mxu0 0
        %4555 = vmatpush1.bf16.msra.mxu0 0
        %4556 = vmatprep.subr.bf16.mxu0 0
        %4557 = vmatpush1.bf16.msra.mxu0 0
        %4558 = vmatprep.subr.bf16.mxu0 0
        %4559 = vmatpush1.bf16.msra.mxu0 0
        %4560 = vmatprep.subr.bf16.mxu0 0
        %4561 = vmatpush1.bf16.msra.mxu0 0
        %4562 = vmatprep.subr.bf16.mxu0 0
        %4563 = vmatpush1.bf16.msra.mxu0 0
        %4564 = vmatprep.subr.bf16.mxu0 0
        %4565 = vmatpush1.bf16.msra.mxu0 0
        %4566 = vmatprep.subr.bf16.mxu0 0
        %4567 = vmatpush1.bf16.msra.mxu0 0
        %4568 = vmatprep.subr.bf16.mxu0 0
        %4569 = vmatpush1.bf16.msra.mxu0 0
        %4570 = vmatprep.subr.bf16.mxu0 0
        %4571 = vmatpush1.bf16.msra.mxu0 0
        %4572 = vmatprep.mubr.bf16.mxu0 0
        %4573 = vmatmul.mubr.bf16.gmra.mrb[0].mxu0 %v4538
        %v4574 = vpop.f32.mrb[0].mxu0
        %v4575 = vadd.f32 0.0, %v4574
        %v4576 = vpop.f32.mrb[0].mxu0
        %v4577 = vpop.f32.mrb[0].mxu0
        %v4578 = vadd.f32 0.0, %v4577
        %v4579 = vpop.f32.mrb[0].mxu0
        %4580 = vdwg.mxu0
        %v4582 = vsel %vm2485, %v4444, 0
        %4584 = vmatprep.subr.bf16.mxu0 0
        %4585 = vmatpush1.bf16.msra.mxu0 %v4448
        %4586 = vmatprep.subr.bf16.mxu0 0
        %4587 = vmatpush1.bf16.msra.mxu0 0
        %4588 = vmatprep.subr.bf16.mxu0 0
        %4589 = vmatpush1.bf16.msra.mxu0 0
        %4590 = vmatprep.subr.bf16.mxu0 0
        %4591 = vmatpush1.bf16.msra.mxu0 0
        %4592 = vmatprep.subr.bf16.mxu0 0
        %4593 = vmatpush1.bf16.msra.mxu0 0
        %4594 = vmatprep.subr.bf16.mxu0 0
        %4595 = vmatpush1.bf16.msra.mxu0 0
        %4596 = vmatprep.subr.bf16.mxu0 0
        %4597 = vmatpush1.bf16.msra.mxu0 0
        %4598 = vmatprep.subr.bf16.mxu0 0
        %4599 = vmatpush1.bf16.msra.mxu0 0
        %4600 = vmatprep.subr.bf16.mxu0 0
        %4601 = vmatpush1.bf16.msra.mxu0 0
        %4602 = vmatprep.subr.bf16.mxu0 0
        %4603 = vmatpush1.bf16.msra.mxu0 0
        %4604 = vmatprep.subr.bf16.mxu0 0
        %4605 = vmatpush1.bf16.msra.mxu0 0
        %4606 = vmatprep.subr.bf16.mxu0 0
        %4607 = vmatpush1.bf16.msra.mxu0 0
        %4608 = vmatprep.subr.bf16.mxu0 0
        %4609 = vmatpush1.bf16.msra.mxu0 0
        %4610 = vmatprep.subr.bf16.mxu0 0
        %4611 = vmatpush1.bf16.msra.mxu0 0
        %4612 = vmatprep.subr.bf16.mxu0 0
        %4613 = vmatpush1.bf16.msra.mxu0 0
        %4614 = vmatprep.subr.bf16.mxu0 0
        %4615 = vmatpush1.bf16.msra.mxu0 0
        %4616 = vmatprep.mubr.bf16.mxu0 0
        %4617 = vmatmul.mubr.bf16.gmra.mrb[0].mxu0 %v4582
        %v4618 = vpop.f32.mrb[0].mxu0
        %v4619 = vadd.f32 0.0, %v4618
        %v4620 = vpop.f32.mrb[0].mxu0
        %v4621 = vpop.f32.mrb[0].mxu0
        %v4622 = vadd.f32 0.0, %v4621
        %v4623 = vpop.f32.mrb[0].mxu0
        %4624 = vdwg.mxu0
        %v4625 = vpack.c.bf16 %v4490, %v4487
        %v4626 = vpack.c.bf16 %v4534, %v4531
        %v4627 = vpack.c.bf16 %v4578, %v4575
        %v4628 = vpack.c.bf16 %v4622, %v4619
        %v4633 = vunpack.c.l.b16 %v1061
        %v4634 = vunpack.c.l.b16 %v1062
        %v4635 = vunpack.c.l.b16 %v1063
        %v4636 = vunpack.c.l.b16 %v1064
        %v4637 = vpack.c.b16 %v4634, %v4633
        %v4638 = vpack.c.b16 %v4636, %v4635
        %v4642 = vsel %vm2296, %v4625, 0
        %4644 = vmatprep.subr.bf16.mxu0 0
        %4645 = vmatpush1.bf16.msra.mxu0 %v4637
        %4646 = vmatprep.subr.bf16.mxu0 0
        %4647 = vmatpush1.bf16.msra.mxu0 %v4638
        %4648 = vmatprep.subr.bf16.mxu0 0
        %4649 = vmatpush1.bf16.msra.mxu0 0
        %4650 = vmatprep.subr.bf16.mxu0 0
        %4651 = vmatpush1.bf16.msra.mxu0 0
        %4652 = vmatprep.subr.bf16.mxu0 0
        %4653 = vmatpush1.bf16.msra.mxu0 0
        %4654 = vmatprep.subr.bf16.mxu0 0
        %4655 = vmatpush1.bf16.msra.mxu0 0
        %4656 = vmatprep.subr.bf16.mxu0 0
        %4657 = vmatpush1.bf16.msra.mxu0 0
        %4658 = vmatprep.subr.bf16.mxu0 0
        %4659 = vmatpush1.bf16.msra.mxu0 0
        %4660 = vmatprep.subr.bf16.mxu0 0
        %4661 = vmatpush1.bf16.msra.mxu0 0
        %4662 = vmatprep.subr.bf16.mxu0 0
        %4663 = vmatpush1.bf16.msra.mxu0 0
        %4664 = vmatprep.subr.bf16.mxu0 0
        %4665 = vmatpush1.bf16.msra.mxu0 0
        %4666 = vmatprep.subr.bf16.mxu0 0
        %4667 = vmatpush1.bf16.msra.mxu0 0
        %4668 = vmatprep.subr.bf16.mxu0 0
        %4669 = vmatpush1.bf16.msra.mxu0 0
        %4670 = vmatprep.subr.bf16.mxu0 0
        %4671 = vmatpush1.bf16.msra.mxu0 0
        %4672 = vmatprep.subr.bf16.mxu0 0
        %4673 = vmatpush1.bf16.msra.mxu0 0
        %4674 = vmatprep.subr.bf16.mxu0 0
        %4675 = vmatpush1.bf16.msra.mxu0 0
        %4676 = vmatprep.mubr.bf16.mxu0 0
        %4677 = vmatmul.mubr.bf16.gmra.mrb[0].mxu0 %v4642
        %v4678 = vpop.f32.mrb[0].mxu0
        %v4679 = vadd.f32 0.0, %v4678
        %v4680 = vpop.f32.mrb[0].mxu0
        %v4681 = vpop.f32.mrb[0].mxu0
        %v4682 = vadd.f32 0.0, %v4681
        %v4683 = vpop.f32.mrb[0].mxu0
        %4684 = vdwg.mxu0
        %v4689 = vunpack.c.l.b16 %v1065
        %v4690 = vunpack.c.l.b16 %v1066
        %v4691 = vunpack.c.l.b16 %v1067
        %v4692 = vunpack.c.l.b16 %v1068
        %v4693 = vpack.c.b16 %v4690, %v4689
        %v4694 = vpack.c.b16 %v4692, %v4691
        %v4698 = vsel %vm2296, %v4626, 0
        %4700 = vmatprep.subr.bf16.mxu0 0
        %4701 = vmatpush1.bf16.msra.mxu0 %v4693
        %4702 = vmatprep.subr.bf16.mxu0 0
        %4703 = vmatpush1.bf16.msra.mxu0 %v4694
        %4704 = vmatprep.subr.bf16.mxu0 0
        %4705 = vmatpush1.bf16.msra.mxu0 0
        %4706 = vmatprep.subr.bf16.mxu0 0
        %4707 = vmatpush1.bf16.msra.mxu0 0
        %4708 = vmatprep.subr.bf16.mxu0 0
        %4709 = vmatpush1.bf16.msra.mxu0 0
        %4710 = vmatprep.subr.bf16.mxu0 0
        %4711 = vmatpush1.bf16.msra.mxu0 0
        %4712 = vmatprep.subr.bf16.mxu0 0
        %4713 = vmatpush1.bf16.msra.mxu0 0
        %4714 = vmatprep.subr.bf16.mxu0 0
        %4715 = vmatpush1.bf16.msra.mxu0 0
        %4716 = vmatprep.subr.bf16.mxu0 0
        %4717 = vmatpush1.bf16.msra.mxu0 0
        %4718 = vmatprep.subr.bf16.mxu0 0
        %4719 = vmatpush1.bf16.msra.mxu0 0
        %4720 = vmatprep.subr.bf16.mxu0 0
        %4721 = vmatpush1.bf16.msra.mxu0 0
        %4722 = vmatprep.subr.bf16.mxu0 0
        %4723 = vmatpush1.bf16.msra.mxu0 0
        %4724 = vmatprep.subr.bf16.mxu0 0
        %4725 = vmatpush1.bf16.msra.mxu0 0
        %4726 = vmatprep.subr.bf16.mxu0 0
        %4727 = vmatpush1.bf16.msra.mxu0 0
        %4728 = vmatprep.subr.bf16.mxu0 0
        %4729 = vmatpush1.bf16.msra.mxu0 0
        %4730 = vmatprep.subr.bf16.mxu0 0
        %4731 = vmatpush1.bf16.msra.mxu0 0
        %4732 = vmatprep.mubr.bf16.mxu0 0
        %4733 = vmatmul.mubr.bf16.gmra.mrb[0].mxu0 %v4698
        %v4734 = vpop.f32.mrb[0].mxu0
        %v4735 = vadd.f32 0.0, %v4734
        %v4736 = vpop.f32.mrb[0].mxu0
        %v4737 = vpop.f32.mrb[0].mxu0
        %v4738 = vadd.f32 0.0, %v4737
        %v4739 = vpop.f32.mrb[0].mxu0
        %4740 = vdwg.mxu0
        %v4745 = vunpack.c.l.b16 %v1069
        %v4746 = vunpack.c.l.b16 %v1070
        %v4747 = vunpack.c.l.b16 %v1071
        %v4748 = vunpack.c.l.b16 %v1072
        %v4749 = vpack.c.b16 %v4746, %v4745
        %v4750 = vpack.c.b16 %v4748, %v4747
        %v4754 = vsel %vm2296, %v4627, 0
        %4756 = vmatprep.subr.bf16.mxu0 0
        %4757 = vmatpush1.bf16.msra.mxu0 %v4749
        %4758 = vmatprep.subr.bf16.mxu0 0
        %4759 = vmatpush1.bf16.msra.mxu0 %v4750
        %4760 = vmatprep.subr.bf16.mxu0 0
        %4761 = vmatpush1.bf16.msra.mxu0 0
        %4762 = vmatprep.subr.bf16.mxu0 0
        %4763 = vmatpush1.bf16.msra.mxu0 0
        %4764 = vmatprep.subr.bf16.mxu0 0
        %4765 = vmatpush1.bf16.msra.mxu0 0
        %4766 = vmatprep.subr.bf16.mxu0 0
        %4767 = vmatpush1.bf16.msra.mxu0 0
        %4768 = vmatprep.subr.bf16.mxu0 0
        %4769 = vmatpush1.bf16.msra.mxu0 0
        %4770 = vmatprep.subr.bf16.mxu0 0
        %4771 = vmatpush1.bf16.msra.mxu0 0
        %4772 = vmatprep.subr.bf16.mxu0 0
        %4773 = vmatpush1.bf16.msra.mxu0 0
        %4774 = vmatprep.subr.bf16.mxu0 0
        %4775 = vmatpush1.bf16.msra.mxu0 0
        %4776 = vmatprep.subr.bf16.mxu0 0
        %4777 = vmatpush1.bf16.msra.mxu0 0
        %4778 = vmatprep.subr.bf16.mxu0 0
        %4779 = vmatpush1.bf16.msra.mxu0 0
        %4780 = vmatprep.subr.bf16.mxu0 0
        %4781 = vmatpush1.bf16.msra.mxu0 0
        %4782 = vmatprep.subr.bf16.mxu0 0
        %4783 = vmatpush1.bf16.msra.mxu0 0
        %4784 = vmatprep.subr.bf16.mxu0 0
        %4785 = vmatpush1.bf16.msra.mxu0 0
        %4786 = vmatprep.subr.bf16.mxu0 0
        %4787 = vmatpush1.bf16.msra.mxu0 0
        %4788 = vmatprep.mubr.bf16.mxu0 0
        %4789 = vmatmul.mubr.bf16.gmra.mrb[0].mxu0 %v4754
        %v4790 = vpop.f32.mrb[0].mxu0
        %v4791 = vadd.f32 0.0, %v4790
        %v4792 = vpop.f32.mrb[0].mxu0
        %v4793 = vpop.f32.mrb[0].mxu0
        %v4794 = vadd.f32 0.0, %v4793
        %v4795 = vpop.f32.mrb[0].mxu0
        %4796 = vdwg.mxu0
        %v4801 = vunpack.c.l.b16 %v1073
        %v4802 = vunpack.c.l.b16 %v1074
        %v4803 = vunpack.c.l.b16 %v1075
        %v4804 = vunpack.c.l.b16 %v1076
        %v4805 = vpack.c.b16 %v4802, %v4801
        %v4806 = vpack.c.b16 %v4804, %v4803
        %v4810 = vsel %vm2296, %v4628, 0
        %4812 = vmatprep.subr.bf16.mxu0 0
        %4813 = vmatpush1.bf16.msra.mxu0 %v4805
        %4814 = vmatprep.subr.bf16.mxu0 0
        %4815 = vmatpush1.bf16.msra.mxu0 %v4806
        %4816 = vmatprep.subr.bf16.mxu0 0
        %4817 = vmatpush1.bf16.msra.mxu0 0
        %4818 = vmatprep.subr.bf16.mxu0 0
        %4819 = vmatpush1.bf16.msra.mxu0 0
        %4820 = vmatprep.subr.bf16.mxu0 0
        %4821 = vmatpush1.bf16.msra.mxu0 0
        %4822 = vmatprep.subr.bf16.mxu0 0
        %4823 = vmatpush1.bf16.msra.mxu0 0
        %4824 = vmatprep.subr.bf16.mxu0 0
        %4825 = vmatpush1.bf16.msra.mxu0 0
        %4826 = vmatprep.subr.bf16.mxu0 0
        %4827 = vmatpush1.bf16.msra.mxu0 0
        %4828 = vmatprep.subr.bf16.mxu0 0
        %4829 = vmatpush1.bf16.msra.mxu0 0
        %4830 = vmatprep.subr.bf16.mxu0 0
        %4831 = vmatpush1.bf16.msra.mxu0 0
        %4832 = vmatprep.subr.bf16.mxu0 0
        %4833 = vmatpush1.bf16.msra.mxu0 0
        %4834 = vmatprep.subr.bf16.mxu0 0
        %4835 = vmatpush1.bf16.msra.mxu0 0
        %4836 = vmatprep.subr.bf16.mxu0 0
        %4837 = vmatpush1.bf16.msra.mxu0 0
        %4838 = vmatprep.subr.bf16.mxu0 0
        %4839 = vmatpush1.bf16.msra.mxu0 0
        %4840 = vmatprep.subr.bf16.mxu0 0
        %4841 = vmatpush1.bf16.msra.mxu0 0
        %4842 = vmatprep.subr.bf16.mxu0 0
        %4843 = vmatpush1.bf16.msra.mxu0 0
        %4844 = vmatprep.mubr.bf16.mxu0 0
        %4845 = vmatmul.mubr.bf16.gmra.mrb[0].mxu0 %v4810
        %v4846 = vpop.f32.mrb[0].mxu0
        %v4847 = vadd.f32 0.0, %v4846
        %v4848 = vpop.f32.mrb[0].mxu0
        %v4849 = vpop.f32.mrb[0].mxu0
        %v4850 = vadd.f32 0.0, %v4849
        %v4851 = vpop.f32.mrb[0].mxu0
        %4852 = vdwg.mxu0
        %v4853 = vadd.f32 %v4679, %v4735
        %v4854 = vadd.f32 %v4853, %v4791
        %v4855 = vadd.f32 %v4854, %v4847
        %v4856 = vadd.f32 %v4682, %v4738
        %v4857 = vadd.f32 %v4856, %v4794
        %v4858 = vadd.f32 %v4857, %v4850
        %v4860 = vlaneseq
        %v4861 = vshrl.u32 %v4860, 7
        %v4862 = vsub.s32 0, %v4861
        %v4863 = vrot.slane %v1077, %v4862
        %v4865 = vadd.f32 %v4855, %v4863
        %v4866 = vadd.f32 %v4858, %v4863
        %v4867 = vadd.f32 %v3024, %v4865
        %v4868 = vadd.f32 %v3025, %v4866
        %4869 = vadd.xlane.f32.xlu0 %v4867
        %v4870 = vpop.xlane.xlu0 %4869
        %4871 = vadd.xlane.f32.xlu0 %v4868
        %v4872 = vpop.xlane.xlu0 %4871
        %v4873 = vmul.f32 %v4870, %v1184
        %v4874 = vmul.f32 %v4872, %v1184
        %v4875 = vsub.f32 %v4867, %v4873
        %v4876 = vsub.f32 %v4868, %v4874
        %v4877 = vmul.f32 %v4875, %v4875
        %v4878 = vmul.f32 %v4876, %v4876
        %4879 = vadd.xlane.f32.xlu0 %v4877
        %v4880 = vpop.xlane.xlu0 %4879
        %4881 = vadd.xlane.f32.xlu0 %v4878
        %v4882 = vpop.xlane.xlu0 %4881
        %v4883 = vmul.f32 %v4880, %v1184
        %v4884 = vmul.f32 %v4882, %v1184
        %v4885 = vadd.f32 %v4883, 1e-05
        %v4886 = vadd.f32 %v4884, 1e-05
        %v4887 = vrsqrt.pop %v4885
        %v4888 = vrsqrt.pop %v4886
        %v4889 = vmul.f32 %v4875, %v4887
        %v4890 = vmul.f32 %v4876, %v4888
        %v4892 = vlaneseq
        %v4893 = vshrl.u32 %v4892, 7
        %v4894 = vsub.s32 0, %v4893
        %v4895 = vrot.slane %v1078, %v4894
        %v4897 = vmul.f32 %v4889, %v4895
        %v4898 = vmul.f32 %v4890, %v4895
        %v4900 = vlaneseq
        %v4901 = vshrl.u32 %v4900, 7
        %v4902 = vsub.s32 0, %v4901
        %v4903 = vrot.slane %v1079, %v4902
        %v4905 = vadd.f32 %v4897, %v4903
        %v4906 = vadd.f32 %v4898, %v4903
        %v4907 = vpack.c.bf16 %v4906, %v4905
        %v4909 = vlaneseq
        %v4910 = vshrl.u32 %v4909, 7
        %v4911 = vsub.s32 0, %v4910
        %v4912 = vrot.slane %v1112, %v4911
        %v4913 = vlaneseq
        %v4914 = vshrl.u32 %v4913, 7
        %v4915 = vsub.s32 1, %v4914
        %v4916 = vrot.slane %v1112, %v4915
        %v4917 = vlaneseq
        %v4918 = vshrl.u32 %v4917, 7
        %v4919 = vsub.s32 2, %v4918
        %v4920 = vrot.slane %v1112, %v4919
        %v4921 = vlaneseq
        %v4922 = vshrl.u32 %v4921, 7
        %v4923 = vsub.s32 3, %v4922
        %v4924 = vrot.slane %v1112, %v4923
        %v4961 = vunpack.c.l.b16 %v1080
        %v4962 = vunpack.c.h.b16 %v1080
        %v4963 = vunpack.c.l.b16 %v1081
        %v4964 = vunpack.c.h.b16 %v1081
        %v4965 = vunpack.c.l.b16 %v1082
        %v4966 = vunpack.c.h.b16 %v1082
        %v4967 = vunpack.c.l.b16 %v1083
        %v4968 = vunpack.c.h.b16 %v1083
        %v4969 = vunpack.c.l.b16 %v1084
        %v4970 = vunpack.c.h.b16 %v1084
        %v4971 = vunpack.c.l.b16 %v1085
        %v4972 = vunpack.c.h.b16 %v1085
        %v4973 = vunpack.c.l.b16 %v1086
        %v4974 = vunpack.c.h.b16 %v1086
        %v4975 = vunpack.c.l.b16 %v1087
        %v4976 = vunpack.c.h.b16 %v1087
        %v4977 = vunpack.c.l.b16 %v1088
        %v4978 = vunpack.c.h.b16 %v1088
        %v4979 = vunpack.c.l.b16 %v1089
        %v4980 = vunpack.c.h.b16 %v1089
        %v4981 = vunpack.c.l.b16 %v1090
        %v4982 = vunpack.c.h.b16 %v1090
        %v4983 = vunpack.c.l.b16 %v1091
        %v4984 = vunpack.c.h.b16 %v1091
        %v4985 = vunpack.c.l.b16 %v1092
        %v4986 = vunpack.c.h.b16 %v1092
        %v4987 = vunpack.c.l.b16 %v1093
        %v4988 = vunpack.c.h.b16 %v1093
        %v4989 = vunpack.c.l.b16 %v1094
        %v4990 = vunpack.c.h.b16 %v1094
        %v4991 = vunpack.c.l.b16 %v1095
        %v4992 = vunpack.c.h.b16 %v1095
        %v4993 = vunpack.c.l.b16 %v1096
        %v4994 = vunpack.c.h.b16 %v1096
        %v4995 = vunpack.c.l.b16 %v1097
        %v4996 = vunpack.c.h.b16 %v1097
        %v4997 = vunpack.c.l.b16 %v1098
        %v4998 = vunpack.c.h.b16 %v1098
        %v4999 = vunpack.c.l.b16 %v1099
        %v5000 = vunpack.c.h.b16 %v1099
        %v5001 = vunpack.c.l.b16 %v1100
        %v5002 = vunpack.c.h.b16 %v1100
        %v5003 = vunpack.c.l.b16 %v1101
        %v5004 = vunpack.c.h.b16 %v1101
        %v5005 = vunpack.c.l.b16 %v1102
        %v5006 = vunpack.c.h.b16 %v1102
        %v5007 = vunpack.c.l.b16 %v1103
        %v5008 = vunpack.c.h.b16 %v1103
        %v5009 = vunpack.c.l.b16 %v1104
        %v5010 = vunpack.c.h.b16 %v1104
        %v5011 = vunpack.c.l.b16 %v1105
        %v5012 = vunpack.c.h.b16 %v1105
        %v5013 = vunpack.c.l.b16 %v1106
        %v5014 = vunpack.c.h.b16 %v1106
        %v5015 = vunpack.c.l.b16 %v1107
        %v5016 = vunpack.c.h.b16 %v1107
        %v5017 = vunpack.c.l.b16 %v1108
        %v5018 = vunpack.c.h.b16 %v1108
        %v5019 = vunpack.c.l.b16 %v1109
        %v5020 = vunpack.c.h.b16 %v1109
        %v5021 = vunpack.c.l.b16 %v1110
        %v5022 = vunpack.c.h.b16 %v1110
        %v5023 = vunpack.c.l.b16 %v1111
        %v5024 = vunpack.c.h.b16 %v1111
        %v5025 = vpack.c.b16 %v4965, %v4961
        %v5026 = vpack.c.b16 %v4966, %v4962
        %v5027 = vpack.c.b16 %v4967, %v4963
        %v5028 = vpack.c.b16 %v4968, %v4964
        %v5029 = vpack.c.b16 %v4973, %v4969
        %v5030 = vpack.c.b16 %v4974, %v4970
        %v5031 = vpack.c.b16 %v4975, %v4971
        %v5032 = vpack.c.b16 %v4976, %v4972
        %v5033 = vpack.c.b16 %v4981, %v4977
        %v5034 = vpack.c.b16 %v4982, %v4978
        %v5035 = vpack.c.b16 %v4983, %v4979
        %v5036 = vpack.c.b16 %v4984, %v4980
        %v5037 = vpack.c.b16 %v4989, %v4985
        %v5038 = vpack.c.b16 %v4990, %v4986
        %v5039 = vpack.c.b16 %v4991, %v4987
        %v5040 = vpack.c.b16 %v4992, %v4988
        %v5041 = vpack.c.b16 %v4997, %v4993
        %v5042 = vpack.c.b16 %v4998, %v4994
        %v5043 = vpack.c.b16 %v4999, %v4995
        %v5044 = vpack.c.b16 %v5000, %v4996
        %v5045 = vpack.c.b16 %v5005, %v5001
        %v5046 = vpack.c.b16 %v5006, %v5002
        %v5047 = vpack.c.b16 %v5007, %v5003
        %v5048 = vpack.c.b16 %v5008, %v5004
        %v5049 = vpack.c.b16 %v5013, %v5009
        %v5050 = vpack.c.b16 %v5014, %v5010
        %v5051 = vpack.c.b16 %v5015, %v5011
        %v5052 = vpack.c.b16 %v5016, %v5012
        %v5053 = vpack.c.b16 %v5021, %v5017
        %v5054 = vpack.c.b16 %v5022, %v5018
        %v5055 = vpack.c.b16 %v5023, %v5019
        %v5056 = vpack.c.b16 %v5024, %v5020
        %5089 = vmatprep.subr.bf16.mxu0 %v5026
        %5090 = vmatpush1.bf16.msra.mxu0 %v5025
        %5091 = vmatprep.subr.bf16.mxu0 %v5030
        %5092 = vmatpush1.bf16.msra.mxu0 %v5029
        %5093 = vmatprep.subr.bf16.mxu0 %v5034
        %5094 = vmatpush1.bf16.msra.mxu0 %v5033
        %5095 = vmatprep.subr.bf16.mxu0 %v5038
        %5096 = vmatpush1.bf16.msra.mxu0 %v5037
        %5097 = vmatprep.subr.bf16.mxu0 %v5042
        %5098 = vmatpush1.bf16.msra.mxu0 %v5041
        %5099 = vmatprep.subr.bf16.mxu0 %v5046
        %5100 = vmatpush1.bf16.msra.mxu0 %v5045
        %5101 = vmatprep.subr.bf16.mxu0 %v5050
        %5102 = vmatpush1.bf16.msra.mxu0 %v5049
        %5103 = vmatprep.subr.bf16.mxu0 %v5054
        %5104 = vmatpush1.bf16.msra.mxu0 %v5053
        %5105 = vmatprep.subr.bf16.mxu0 0
        %5106 = vmatpush1.bf16.msra.mxu0 0
        %5107 = vmatprep.subr.bf16.mxu0 0
        %5108 = vmatpush1.bf16.msra.mxu0 0
        %5109 = vmatprep.subr.bf16.mxu0 0
        %5110 = vmatpush1.bf16.msra.mxu0 0
        %5111 = vmatprep.subr.bf16.mxu0 0
        %5112 = vmatpush1.bf16.msra.mxu0 0
        %5113 = vmatprep.subr.bf16.mxu0 0
        %5114 = vmatpush1.bf16.msra.mxu0 0
        %5115 = vmatprep.subr.bf16.mxu0 0
        %5116 = vmatpush1.bf16.msra.mxu0 0
        %5117 = vmatprep.subr.bf16.mxu0 0
        %5118 = vmatpush1.bf16.msra.mxu0 0
        %5119 = vmatprep.subr.bf16.mxu0 0
        %5120 = vmatpush1.bf16.msra.mxu0 0
        %5121 = vmatprep.mubr.bf16.mxu0 0
        %5122 = vmatmul.mubr.bf16.gmra.mrb[0].mxu0 %v4907
        %v5123 = vpop.f32.mrb[0].mxu0
        %v5124 = vadd.f32 %v4912, %v5123
        %v5125 = vpop.f32.mrb[0].mxu0
        %v5126 = vadd.f32 %v4916, %v5125
        %v5127 = vpop.f32.mrb[0].mxu0
        %v5128 = vadd.f32 %v4912, %v5127
        %v5129 = vpop.f32.mrb[0].mxu0
        %v5130 = vadd.f32 %v4916, %v5129
        %5131 = vdwg.mxu0
        %5132 = vmatprep.subr.bf16.mxu0 %v5028
        %5133 = vmatpush1.bf16.msra.mxu0 %v5027
        %5134 = vmatprep.subr.bf16.mxu0 %v5032
        %5135 = vmatpush1.bf16.msra.mxu0 %v5031
        %5136 = vmatprep.subr.bf16.mxu0 %v5036
        %5137 = vmatpush1.bf16.msra.mxu0 %v5035
        %5138 = vmatprep.subr.bf16.mxu0 %v5040
        %5139 = vmatpush1.bf16.msra.mxu0 %v5039
        %5140 = vmatprep.subr.bf16.mxu0 %v5044
        %5141 = vmatpush1.bf16.msra.mxu0 %v5043
        %5142 = vmatprep.subr.bf16.mxu0 %v5048
        %5143 = vmatpush1.bf16.msra.mxu0 %v5047
        %5144 = vmatprep.subr.bf16.mxu0 %v5052
        %5145 = vmatpush1.bf16.msra.mxu0 %v5051
        %5146 = vmatprep.subr.bf16.mxu0 %v5056
        %5147 = vmatpush1.bf16.msra.mxu0 %v5055
        %5148 = vmatprep.subr.bf16.mxu0 0
        %5149 = vmatpush1.bf16.msra.mxu0 0
        %5150 = vmatprep.subr.bf16.mxu0 0
        %5151 = vmatpush1.bf16.msra.mxu0 0
        %5152 = vmatprep.subr.bf16.mxu0 0
        %5153 = vmatpush1.bf16.msra.mxu0 0
        %5154 = vmatprep.subr.bf16.mxu0 0
        %5155 = vmatpush1.bf16.msra.mxu0 0
        %5156 = vmatprep.subr.bf16.mxu0 0
        %5157 = vmatpush1.bf16.msra.mxu0 0
        %5158 = vmatprep.subr.bf16.mxu0 0
        %5159 = vmatpush1.bf16.msra.mxu0 0
        %5160 = vmatprep.subr.bf16.mxu0 0
        %5161 = vmatpush1.bf16.msra.mxu0 0
        %5162 = vmatprep.subr.bf16.mxu0 0
        %5163 = vmatpush1.bf16.msra.mxu0 0
        %5164 = vmatprep.mubr.bf16.mxu0 0
        %5165 = vmatmul.mubr.bf16.gmra.mrb[0].mxu0 %v4907
        %v5166 = vpop.f32.mrb[0].mxu0
        %v5167 = vadd.f32 %v4920, %v5166
        %v5168 = vpop.f32.mrb[0].mxu0
        %v5169 = vadd.f32 %v4924, %v5168
        %v5170 = vpop.f32.mrb[0].mxu0
        %v5171 = vadd.f32 %v4920, %v5170
        %v5172 = vpop.f32.mrb[0].mxu0
        %v5173 = vadd.f32 %v4924, %v5172
        %5174 = vdwg.mxu0
        %v5175 = vmul.f32 %v5124, 0.5
        %v5176 = vmul.f32 %v5126, 0.5
        %v5177 = vmul.f32 %v5167, 0.5
        %v5178 = vmul.f32 %v5169, 0.5
        %v5179 = vmul.f32 %v5128, 0.5
        %v5180 = vmul.f32 %v5130, 0.5
        %v5181 = vmul.f32 %v5171, 0.5
        %v5182 = vmul.f32 %v5173, 0.5
        %v5183 = vmul.f32 %v5124, 0.70710677
        %v5184 = vmul.f32 %v5126, 0.70710677
        %v5185 = vmul.f32 %v5167, 0.70710677
        %v5186 = vmul.f32 %v5169, 0.70710677
        %v5187 = vmul.f32 %v5128, 0.70710677
        %v5188 = vmul.f32 %v5130, 0.70710677
        %v5189 = vmul.f32 %v5171, 0.70710677
        %v5190 = vmul.f32 %v5173, 0.70710677
        %v5191 = verf.f32.pop %v5183
        %v5192 = verf.f32.pop %v5184
        %v5193 = verf.f32.pop %v5185
        %v5194 = verf.f32.pop %v5186
        %v5195 = verf.f32.pop %v5187
        %v5196 = verf.f32.pop %v5188
        %v5197 = verf.f32.pop %v5189
        %v5198 = verf.f32.pop %v5190
        %v5199 = vadd.f32 %v5191, 1.0
        %v5200 = vadd.f32 %v5192, 1.0
        %v5201 = vadd.f32 %v5193, 1.0
        %v5202 = vadd.f32 %v5194, 1.0
        %v5203 = vadd.f32 %v5195, 1.0
        %v5204 = vadd.f32 %v5196, 1.0
        %v5205 = vadd.f32 %v5197, 1.0
        %v5206 = vadd.f32 %v5198, 1.0
        %v5207 = vmul.f32 %v5175, %v5199
        %v5208 = vmul.f32 %v5176, %v5200
        %v5209 = vmul.f32 %v5177, %v5201
        %v5210 = vmul.f32 %v5178, %v5202
        %v5211 = vmul.f32 %v5179, %v5203
        %v5212 = vmul.f32 %v5180, %v5204
        %v5213 = vmul.f32 %v5181, %v5205
        %v5214 = vmul.f32 %v5182, %v5206
        %v5215 = vpack.c.bf16 %v5211, %v5207
        %v5216 = vpack.c.bf16 %v5212, %v5208
        %v5217 = vpack.c.bf16 %v5213, %v5209
        %v5218 = vpack.c.bf16 %v5214, %v5210
        %v5220 = vlaneseq
        %v5221 = vshrl.u32 %v5220, 7
        %v5222 = vsub.s32 0, %v5221
        %v5223 = vrot.slane %v1177, %v5222
        %v5289 = vunpack.c.l.b16 %v1113
        %v5290 = vunpack.c.l.b16 %v1114
        %v5291 = vunpack.c.l.b16 %v1115
        %v5292 = vunpack.c.l.b16 %v1116
        %v5293 = vunpack.c.l.b16 %v1117
        %v5294 = vunpack.c.l.b16 %v1118
        %v5295 = vunpack.c.l.b16 %v1119
        %v5296 = vunpack.c.l.b16 %v1120
        %v5297 = vunpack.c.l.b16 %v1121
        %v5298 = vunpack.c.l.b16 %v1122
        %v5299 = vunpack.c.l.b16 %v1123
        %v5300 = vunpack.c.l.b16 %v1124
        %v5301 = vunpack.c.l.b16 %v1125
        %v5302 = vunpack.c.l.b16 %v1126
        %v5303 = vunpack.c.l.b16 %v1127
        %v5304 = vunpack.c.l.b16 %v1128
        %v5305 = vunpack.c.l.b16 %v1129
        %v5306 = vunpack.c.l.b16 %v1130
        %v5307 = vunpack.c.l.b16 %v1131
        %v5308 = vunpack.c.l.b16 %v1132
        %v5309 = vunpack.c.l.b16 %v1133
        %v5310 = vunpack.c.l.b16 %v1134
        %v5311 = vunpack.c.l.b16 %v1135
        %v5312 = vunpack.c.l.b16 %v1136
        %v5313 = vunpack.c.l.b16 %v1137
        %v5314 = vunpack.c.l.b16 %v1138
        %v5315 = vunpack.c.l.b16 %v1139
        %v5316 = vunpack.c.l.b16 %v1140
        %v5317 = vunpack.c.l.b16 %v1141
        %v5318 = vunpack.c.l.b16 %v1142
        %v5319 = vunpack.c.l.b16 %v1143
        %v5320 = vunpack.c.l.b16 %v1144
        %v5321 = vunpack.c.l.b16 %v1145
        %v5322 = vunpack.c.l.b16 %v1146
        %v5323 = vunpack.c.l.b16 %v1147
        %v5324 = vunpack.c.l.b16 %v1148
        %v5325 = vunpack.c.l.b16 %v1149
        %v5326 = vunpack.c.l.b16 %v1150
        %v5327 = vunpack.c.l.b16 %v1151
        %v5328 = vunpack.c.l.b16 %v1152
        %v5329 = vunpack.c.l.b16 %v1153
        %v5330 = vunpack.c.l.b16 %v1154
        %v5331 = vunpack.c.l.b16 %v1155
        %v5332 = vunpack.c.l.b16 %v1156
        %v5333 = vunpack.c.l.b16 %v1157
        %v5334 = vunpack.c.l.b16 %v1158
        %v5335 = vunpack.c.l.b16 %v1159
        %v5336 = vunpack.c.l.b16 %v1160
        %v5337 = vunpack.c.l.b16 %v1161
        %v5338 = vunpack.c.l.b16 %v1162
        %v5339 = vunpack.c.l.b16 %v1163
        %v5340 = vunpack.c.l.b16 %v1164
        %v5341 = vunpack.c.l.b16 %v1165
        %v5342 = vunpack.c.l.b16 %v1166
        %v5343 = vunpack.c.l.b16 %v1167
        %v5344 = vunpack.c.l.b16 %v1168
        %v5345 = vunpack.c.l.b16 %v1169
        %v5346 = vunpack.c.l.b16 %v1170
        %v5347 = vunpack.c.l.b16 %v1171
        %v5348 = vunpack.c.l.b16 %v1172
        %v5349 = vunpack.c.l.b16 %v1173
        %v5350 = vunpack.c.l.b16 %v1174
        %v5351 = vunpack.c.l.b16 %v1175
        %v5352 = vunpack.c.l.b16 %v1176
        %v5353 = vpack.c.b16 %v5290, %v5289
        %v5354 = vpack.c.b16 %v5292, %v5291
        %v5355 = vpack.c.b16 %v5294, %v5293
        %v5356 = vpack.c.b16 %v5296, %v5295
        %v5357 = vpack.c.b16 %v5298, %v5297
        %v5358 = vpack.c.b16 %v5300, %v5299
        %v5359 = vpack.c.b16 %v5302, %v5301
        %v5360 = vpack.c.b16 %v5304, %v5303
        %v5361 = vpack.c.b16 %v5306, %v5305
        %v5362 = vpack.c.b16 %v5308, %v5307
        %v5363 = vpack.c.b16 %v5310, %v5309
        %v5364 = vpack.c.b16 %v5312, %v5311
        %v5365 = vpack.c.b16 %v5314, %v5313
        %v5366 = vpack.c.b16 %v5316, %v5315
        %v5367 = vpack.c.b16 %v5318, %v5317
        %v5368 = vpack.c.b16 %v5320, %v5319
        %v5369 = vpack.c.b16 %v5322, %v5321
        %v5370 = vpack.c.b16 %v5324, %v5323
        %v5371 = vpack.c.b16 %v5326, %v5325
        %v5372 = vpack.c.b16 %v5328, %v5327
        %v5373 = vpack.c.b16 %v5330, %v5329
        %v5374 = vpack.c.b16 %v5332, %v5331
        %v5375 = vpack.c.b16 %v5334, %v5333
        %v5376 = vpack.c.b16 %v5336, %v5335
        %v5377 = vpack.c.b16 %v5338, %v5337
        %v5378 = vpack.c.b16 %v5340, %v5339
        %v5379 = vpack.c.b16 %v5342, %v5341
        %v5380 = vpack.c.b16 %v5344, %v5343
        %v5381 = vpack.c.b16 %v5346, %v5345
        %v5382 = vpack.c.b16 %v5348, %v5347
        %v5383 = vpack.c.b16 %v5350, %v5349
        %v5384 = vpack.c.b16 %v5352, %v5351
        %5417 = vmatprep.subr.bf16.mxu0 0
        %5418 = vmatpush1.bf16.msra.mxu0 %v5353
        %5419 = vmatprep.subr.bf16.mxu0 0
        %5420 = vmatpush1.bf16.msra.mxu0 %v5354
        %5421 = vmatprep.subr.bf16.mxu0 0
        %5422 = vmatpush1.bf16.msra.mxu0 %v5355
        %5423 = vmatprep.subr.bf16.mxu0 0
        %5424 = vmatpush1.bf16.msra.mxu0 %v5356
        %5425 = vmatprep.subr.bf16.mxu0 0
        %5426 = vmatpush1.bf16.msra.mxu0 %v5357
        %5427 = vmatprep.subr.bf16.mxu0 0
        %5428 = vmatpush1.bf16.msra.mxu0 %v5358
        %5429 = vmatprep.subr.bf16.mxu0 0
        %5430 = vmatpush1.bf16.msra.mxu0 %v5359
        %5431 = vmatprep.subr.bf16.mxu0 0
        %5432 = vmatpush1.bf16.msra.mxu0 %v5360
        %5433 = vmatprep.subr.bf16.mxu0 0
        %5434 = vmatpush1.bf16.msra.mxu0 %v5361
        %5435 = vmatprep.subr.bf16.mxu0 0
        %5436 = vmatpush1.bf16.msra.mxu0 %v5362
        %5437 = vmatprep.subr.bf16.mxu0 0
        %5438 = vmatpush1.bf16.msra.mxu0 %v5363
        %5439 = vmatprep.subr.bf16.mxu0 0
        %5440 = vmatpush1.bf16.msra.mxu0 %v5364
        %5441 = vmatprep.subr.bf16.mxu0 0
        %5442 = vmatpush1.bf16.msra.mxu0 %v5365
        %5443 = vmatprep.subr.bf16.mxu0 0
        %5444 = vmatpush1.bf16.msra.mxu0 %v5366
        %5445 = vmatprep.subr.bf16.mxu0 0
        %5446 = vmatpush1.bf16.msra.mxu0 %v5367
        %5447 = vmatprep.subr.bf16.mxu0 0
        %5448 = vmatpush1.bf16.msra.mxu0 %v5368
        %5449 = vmatprep.mubr.bf16.mxu0 %v5216
        %5450 = vmatmul.mubr.bf16.gmra.mrb[0].mxu0 %v5215
        %v5451 = vpop.f32.mrb[0].mxu0
        %v5452 = vadd.f32 %v5223, %v5451
        %v5453 = vpop.f32.mrb[0].mxu0
        %v5454 = vpop.f32.mrb[0].mxu0
        %v5455 = vadd.f32 %v5223, %v5454
        %v5456 = vpop.f32.mrb[0].mxu0
        %5457 = vdwg.mxu0
        %5458 = vmatprep.subr.bf16.mxu0 0
        %5459 = vmatpush1.bf16.msra.mxu0 %v5369
        %5460 = vmatprep.subr.bf16.mxu0 0
        %5461 = vmatpush1.bf16.msra.mxu0 %v5370
        %5462 = vmatprep.subr.bf16.mxu0 0
        %5463 = vmatpush1.bf16.msra.mxu0 %v5371
        %5464 = vmatprep.subr.bf16.mxu0 0
        %5465 = vmatpush1.bf16.msra.mxu0 %v5372
        %5466 = vmatprep.subr.bf16.mxu0 0
        %5467 = vmatpush1.bf16.msra.mxu0 %v5373
        %5468 = vmatprep.subr.bf16.mxu0 0
        %5469 = vmatpush1.bf16.msra.mxu0 %v5374
        %5470 = vmatprep.subr.bf16.mxu0 0
        %5471 = vmatpush1.bf16.msra.mxu0 %v5375
        %5472 = vmatprep.subr.bf16.mxu0 0
        %5473 = vmatpush1.bf16.msra.mxu0 %v5376
        %5474 = vmatprep.subr.bf16.mxu0 0
        %5475 = vmatpush1.bf16.msra.mxu0 %v5377
        %5476 = vmatprep.subr.bf16.mxu0 0
        %5477 = vmatpush1.bf16.msra.mxu0 %v5378
        %5478 = vmatprep.subr.bf16.mxu0 0
        %5479 = vmatpush1.bf16.msra.mxu0 %v5379
        %5480 = vmatprep.subr.bf16.mxu0 0
        %5481 = vmatpush1.bf16.msra.mxu0 %v5380
        %5482 = vmatprep.subr.bf16.mxu0 0
        %5483 = vmatpush1.bf16.msra.mxu0 %v5381
        %5484 = vmatprep.subr.bf16.mxu0 0
        %5485 = vmatpush1.bf16.msra.mxu0 %v5382
        %5486 = vmatprep.subr.bf16.mxu0 0
        %5487 = vmatpush1.bf16.msra.mxu0 %v5383
        %5488 = vmatprep.subr.bf16.mxu0 0
        %5489 = vmatpush1.bf16.msra.mxu0 %v5384
        %5490 = vmatprep.mubr.bf16.mxu0 %v5218
        %5491 = vmatmul.mubr.bf16.gmra.mrb[0].mxu0 %v5217
        %v5492 = vpop.f32.mrb[0].mxu0
        %v5493 = vadd.f32 %v5452, %v5492
        %v5494 = vpop.f32.mrb[0].mxu0
        %v5495 = vpop.f32.mrb[0].mxu0
        %v5496 = vadd.f32 %v5455, %v5495
        %v5497 = vpop.f32.mrb[0].mxu0
        %5498 = vdwg.mxu0
        %v5499 = vadd.f32 %v4867, %v5493
        %v5500 = vadd.f32 %v4868, %v5496
        %5501 = vst [vmem:[%s649] sm:$0xff] %v5499
        %5502 = vst [vmem:[%s649 + $0x8] sm:$0xff] %v5500
        %s5503 = sand.u32 %s489, 1
        %s5504 = scalar_lea.sflag [#allocation3], %s5503
        %s5505 = sand.u32 %s489, 1
        %s5506 = smul.addr %s5505, 16
        %s5507 = scalar_lea.vmem [#allocation2], %s5506
        // Predicated region
        $region105: #{tpu_custom_call.1} parent=103 // pred_check
          %p5508 = pneg %p499
        $region106: #{tpu_custom_call.1} parent=103 // pred_check_branch
          %5510 = sbr.rel (%p5508) target = $region108
        $region107: #{tpu_custom_call.1} parent=103 // pred_region
          %s5512 = ssub.s32 256, 256
          %5513 = vsyncadd %s5504, %s5512
          %s5514 = smul.addr %s35, 2
          %s5515 = smul.addr %s5514, 128
          %s5516 = scalar_lea.hbm %s21, %s5515
          %s5517 = sshll.u32 %s5507, 4
          %s5518 = int_to_ptr.vmem [resolvable:$true] %s5517
          %5523 = dma.vmem_to_hbm [thread:$0]  %s5518, 256, %s5516, %s5504, 128, 128, 8
        $region108: #{tpu_custom_call.1} parent=103 // pred_fallthru
          _
      $region104: #{tpu_custom_call.1} parent=5 // pred_fallthru
        _
      %p5524 = scmp.le.s32.totalorder 2, %s30
      // Predicated region
      $region109: #{tpu_custom_call.1} parent=5 // pred_check
        %p5525 = pneg %p5524
      $region110: #{tpu_custom_call.1} parent=5 // pred_check_branch
        %5527 = sbr.rel (%p5525) target = $region112
      $region111: #{tpu_custom_call.1} parent=5 // pred_region
        %s5528 = ssub.s32 %s30, 2
        // Predicated region
        $region113: #{tpu_custom_call.1} parent=111 // pred_check
          %p5529 = pneg %p505
        $region114: #{tpu_custom_call.1} parent=111 // pred_check_branch
          %5531 = sbr.rel (%p5529) target = $region116
        $region115: #{tpu_custom_call.1} parent=111 // pred_region
          %s5532 = sand.u32 %s490, 1
          %s5533 = scalar_lea.sflag [#allocation3], %s5532
          %s5534 = sand.u32 %s490, 1
          %s5535 = smul.addr %s5534, 16
          %s5536 = scalar_lea.vmem [#allocation2], %s5535
          %5537 = dma.done %s5533, 256
        $region116: #{tpu_custom_call.1} parent=111 // pred_fallthru
          _
      $region112: #{tpu_custom_call.1} parent=5 // pred_fallthru
        _
    $region6: #{tpu_custom_call.1} parent=1 // loop_footer
      %s34 = sadd.s32 1, %s30
    $region7: #{tpu_custom_call.1} parent=1 // loop_footer_branch
      %29 = sbr.rel target = $region3
    $region8: #{tpu_custom_call.1} parent=1 // loop_exit
      _
    %5538 = vsyncpa [#allocation3], 1
    %s5539 = scalar_lea.sflag [#allocation3], 1
    %5540 = vsyncpa %s5539, 1

</llo_original>
